<compile_context>
chip_gen: v5e
topology: v5e:2x2
jax: 0.10.0
libtpu: 0.0.40
codegen_flags: <defaults>
</compile_context>

<pallas_src>
import jax
import jax.numpy as jnp
from jax import lax
from jax.experimental import pallas as pl
from jax.experimental.pallas import tpu as pltpu

_NT = (((1,), (1,)), ((), ()))   # 2-D dot_general, rhs transposed (contract last dims)
_HAS_BUFFERED = hasattr(pl, "Buffered")


def iem_kernel(q_ref, s_ref,
               pq_w_ref, pq_b_ref, ps_w_ref, ps_b_ref,
               W_w_ref, W_b_ref, Q_w_ref, Q_b_ref,
               m1_w_ref, m1_b_ref, m2_w_ref, m2_b_ref,
               act_q_ref, act_s_ref,
               th_scr, qs_scr, macc_scr, scale_scr):
    f32 = jnp.float32
    cdt = pq_w_ref.dtype                      # MXU operand dtype (bf16)
    I = macc_scr.shape[0]                     # inter channels
    qi = pl.program_id(1)
    last_qi = pl.num_programs(1) - 1

    # ---- once per batch image: s-side projections, folded Q@S, channel gate ----
    @pl.when(qi == 0)
    def _():
        s = s_ref[0].astype(f32)              # (C, Ns)
        # fused [g ; theta] 1x1 conv: (2I, C) @ (C, Ns)
        ps = jnp.dot(ps_w_ref[...], s.astype(cdt),
                     preferred_element_type=f32) + ps_b_ref[...]
        s_g = ps[:I].astype(cdt)              # slice before the bf16 cast
        theta = ps[I:].astype(cdt)            # (I, Ns)
        th_scr[...] = theta

        # whole s-side of the linear attention, kept in f32:
        #   S = g(s) @ theta(s)^T                                  (I, I)
        smat = lax.dot_general(s_g, theta, _NT, preferred_element_type=f32)
        # reassociated output projection: QS = Q_eff @ S           (C, I)
        qs_scr[...] = jnp.dot(Q_w_ref[...], smat.astype(cdt),
                              preferred_element_type=f32).astype(cdt)

        # ChannelGate(s): avg+max pools packed into one (C, 2) rhs -> shared
        # MLP runs as 2 matmuls (not 4 lane-width-1 matvecs). All f32.
        avg_p = jnp.mean(s, axis=1, keepdims=True)          # (C, 1)
        max_p = jnp.max(s, axis=1, keepdims=True)           # (C, 1)
        col = lax.broadcasted_iota(jnp.int32, (avg_p.shape[0], 2), 1)
        pool = jnp.where(col == 0, avg_p, max_p)             # (C, 2)
        h = jnp.dot(m1_w_ref[...], pool, preferred_element_type=f32) + m1_b_ref[...]
        h = jnp.maximum(h, 0.0)
        att = jnp.dot(m2_w_ref[...], h, preferred_element_type=f32) + m2_b_ref[...]
        # mlp(avg) + mlp(max) == sum of the two columns
        scale_scr[...] = jax.nn.sigmoid(jnp.sum(att, axis=1, keepdims=True))

        macc_scr[...] = jnp.zeros_like(macc_scr)

    # ---- per q tile ----
    q = q_ref[0].astype(f32)                  # (C, tNq)
    # fused [g ; phi] 1x1 conv of the q tile: (2I, C) @ (C, tNq)
    pq = jnp.dot(pq_w_ref[...], q.astype(cdt),
                 preferred_element_type=f32) + pq_b_ref[...]
    q_g = pq[:I].astype(cdt)                  # slice in f32, cast after
    phi = pq[I:].astype(cdt)

    # non_q = QS @ phi + b + q   (single MXU matmul per tile; 1/Ns + BN folded)
    non_q = jnp.dot(qs_scr[...], phi, preferred_element_type=f32) + Q_b_ref[...]
    non_q = non_q + q
    act_q_ref[0] = (non_q * scale_scr[...]).astype(act_q_ref.dtype)

    # non_s branch, q-side accumulation: M += g(q) @ phi(q)^T   (I, I), f32
    macc_scr[...] += lax.dot_general(q_g, phi, _NT, preferred_element_type=f32)

    @pl.when(qi == last_qi)
    def _():
        # reassociated finalize: (W_eff @ M) @ theta — no (I, Ns) intermediate
        wm = jnp.dot(W_w_ref[...], macc_scr[...].astype(cdt),
                     preferred_element_type=f32)                     # (C, I)
        non_s = jnp.dot(wm.astype(cdt), th_scr[...],
                        preferred_element_type=f32) + W_b_ref[...]   # (C, Ns)
        non_s = non_s + s_ref[0].astype(f32)
        act_s_ref[0] = (non_s * scale_scr[...]).astype(act_s_ref.dtype)


def iem_forward(q_nchw, s_nchw, p, *, tile_nq=512, mxu_dtype=jnp.bfloat16,
                io_dtype=None):
    """q_nchw: (B,C,Hq,Wq), s_nchw: (B,C,Hs,Ws) -> (act_q, act_s) in NCHW.

    io_dtype: optional activation I/O dtype at the pallas_call boundary
    (e.g. jnp.bfloat16 on HBM-bound v5e); internal residual/gate math stays f32.
    """
    B, C, Hq, Wq = q_nchw.shape
    _, _, Hs, Ws = s_nchw.shape
    Nq, Ns = Hq * Wq, Hs * Ws
    I = p["g_w"].shape[1]
    H = p["m1_w"].shape[1]
    f32 = jnp.float32

    out_dtype = io_dtype if io_dtype is not None else q_nchw.dtype
    # spatial-last (B, C, N): pure reshape of NCHW (matches torch .view)
    q = q_nchw.reshape(B, C, Nq)
    s = s_nchw.reshape(B, C, Ns)
    if io_dtype is not None:
        q = q.astype(io_dtype)
        s = s.astype(io_dtype)

    tile_nq = min(tile_nq, Nq)
    assert Nq % tile_nq == 0, "Nq must be divisible by the q tile size"
    assert tile_nq == Nq or tile_nq % 128 == 0, "q tile must be lane aligned"
    n_q_tiles = Nq // tile_nq

    # ---- fold & pack weights at trace time (f32; cast MXU operands last) ----
    pq_w = jnp.concatenate([p["g_w"].T, p["phi_w"].T], axis=0)               # (2I, C)
    pq_b = jnp.concatenate([p["g_b"].reshape(I, 1), p["phi_b"].reshape(I, 1)], axis=0)
    ps_w = jnp.concatenate([p["g_w"].T, p["theta_w"].T], axis=0)             # (2I, C)
    ps_b = jnp.concatenate([p["g_b"].reshape(I, 1), p["theta_b"].reshape(I, 1)], axis=0)
    # W/Q 1x1 convs with folded BN (inference) and folded 1/N score normalisation
    W_w = (p["W_scale"].reshape(C, 1) * p["W_w"].T) / float(Nq)              # (C, I)
    W_b = (p["W_scale"] * p["W_b"] + p["W_bias"]).reshape(C, 1)
    Q_w = (p["Q_scale"].reshape(C, 1) * p["Q_w"].T) / float(Ns)              # (C, I)
    Q_b = (p["Q_scale"] * p["Q_b"] + p["Q_bias"]).reshape(C, 1)
    # channel-gate MLP in column-vector layout
    m1_w, m1_b = p["m1_w"].T, p["m1_b"].reshape(H, 1)                        # (H,C),(H,1)
    m2_w, m2_b = p["m2_w"].T, p["m2_b"].reshape(C, 1)                        # (C,H),(C,1)

    weight_inputs = [
        pq_w.astype(mxu_dtype), pq_b.astype(f32),
        ps_w.astype(mxu_dtype), ps_b.astype(f32),
        W_w.astype(mxu_dtype), W_b.astype(f32),
        Q_w.astype(mxu_dtype), Q_b.astype(f32),
        m1_w.astype(f32), m1_b.astype(f32),
        m2_w.astype(f32), m2_b.astype(f32),
    ]

    def _call(single_buffer):
        def make_spec(shape, index_map, resident):
            # resident blocks (index constant along the tile axis) and constant
            # weights don't need double buffering — saves VMEM (v7x: 64 MiB).
            if resident and single_buffer:
                return pl.BlockSpec(shape, index_map, pipeline_mode=pl.Buffered(1))
            return pl.BlockSpec(shape, index_map)

        def wspec(shape):
            nd = len(shape)
            return make_spec(shape, lambda b, t, _n=nd: (0,) * _n, resident=True)

        in_specs = (
            [make_spec((1, C, tile_nq), lambda b, t: (b, 0, t), resident=False),
             make_spec((1, C, Ns), lambda b, t: (b, 0, 0), resident=True)]
            + [wspec(w.shape) for w in weight_inputs]
        )
        out_specs = (
            make_spec((1, C, tile_nq), lambda b, t: (b, 0, t), resident=False),
            make_spec((1, C, Ns), lambda b, t: (b, 0, 0), resident=True),
        )
        scratch_shapes = [
            pltpu.VMEM((I, Ns), mxu_dtype),    # theta(s)
            pltpu.VMEM((C, I), mxu_dtype),     # QS = Q_eff @ (g(s) theta(s)^T)
            pltpu.VMEM((I, I), jnp.float32),   # accumulator M = g(q) @ phi(q)^T
            pltpu.VMEM((C, 1), jnp.float32),   # channel-gate scale
        ]

        # Explicit VMEM budget (2x headroom, floor 8 MiB, cap at v7x's 64 MiB).
        io_b = jnp.dtype(q.dtype).itemsize
        cd_b = jnp.dtype(mxu_dtype).itemsize
        n_res_bufs = 1 if single_buffer else 2
        vmem_need = (
            2 * 2 * C * tile_nq * io_b                          # q in + act_q out
            + 2 * n_res_bufs * C * Ns * io_b                    # s in + act_s out
            + n_res_bufs * sum(int(w.size) * w.dtype.itemsize for w in weight_inputs)
            + I * Ns * cd_b + C * I * cd_b + I * I * 4 + C * 4  # scratch
        )
        vmem_limit = int(min(64 << 20, max(2 * vmem_need + (1 << 20), 8 << 20)))

        flops = 2 * B * ((2 * I) * C * (Nq + Ns) + I * I * (Nq + Ns)
                         + C * I * (Nq + Ns) + 2 * C * I * I + 4 * C * H)
        bytes_accessed = 2 * B * C * (Nq + Ns) * io_b + sum(
            int(w.size) * w.dtype.itemsize for w in weight_inputs)
        cost = pl.CostEstimate(flops=flops, transcendentals=B * C,
                               bytes_accessed=bytes_accessed)

        return pl.pallas_call(
            iem_kernel,
            grid=(B, n_q_tiles),
            in_specs=in_specs,
            out_specs=out_specs,
            out_shape=(
                jax.ShapeDtypeStruct((B, C, Nq), out_dtype),
                jax.ShapeDtypeStruct((B, C, Ns), out_dtype),
            ),
            scratch_shapes=scratch_shapes,
            compiler_params=pltpu.CompilerParams(
                dimension_semantics=("parallel", "arbitrary"),
                vmem_limit_bytes=vmem_limit),
            cost_estimate=cost,
        )(q, s, *weight_inputs)

    if _HAS_BUFFERED:
        try:
            act_q, act_s = _call(True)
        except Exception:  # older Pallas without pipeline_mode support
            act_q, act_s = _call(False)
    else:
        act_q, act_s = _call(False)

    return act_q.reshape(B, C, Hq, Wq), act_s.reshape(B, C, Hs, Ws)


def iem_reference(q, s, p):
    """Pure-JAX reference mirroring the PyTorch forward (NCHW, literal op order)."""
    B, C, Hq, Wq = q.shape
    _, _, Hs, Ws = s.shape
    inter = p["g_w"].shape[1]

    def conv1x1(x, w, b):  # w: (Cin, Cout), b: (1, Cout)
        return jnp.einsum("bchw,co->bohw", x, w) + b.reshape(1, -1, 1, 1)

    q_x = conv1x1(q, p["g_w"], p["g_b"]).reshape(B, inter, -1).transpose(0, 2, 1)
    s_x = conv1x1(s, p["g_w"], p["g_b"]).reshape(B, inter, -1).transpose(0, 2, 1)
    theta_x = conv1x1(s, p["theta_w"], p["theta_b"]).reshape(B, inter, -1).transpose(0, 2, 1)
    phi_x = conv1x1(q, p["phi_w"], p["phi_b"]).reshape(B, inter, -1)

    f = jnp.matmul(theta_x, phi_x)            # (B, Ns, Nq)
    f_div_C = f / f.shape[-1]
    fT = jnp.swapaxes(f, 1, 2)                # (B, Nq, Ns)
    fi_div_C = fT / fT.shape[-1]

    non_s = jnp.matmul(f_div_C, q_x)          # (B, Ns, inter)
    non_s = jnp.swapaxes(non_s, 1, 2).reshape(B, inter, Hs, Ws)
    non_s = conv1x1(non_s, p["W_w"], p["W_b"])
    non_s = non_s * p["W_scale"].reshape(1, -1, 1, 1) + p["W_bias"].reshape(1, -1, 1, 1)
    non_s = non_s + s

    non_q = jnp.matmul(fi_div_C, s_x)         # (B, Nq, inter)
    non_q = jnp.swapaxes(non_q, 1, 2).reshape(B, inter, Hq, Wq)
    non_q = conv1x1(non_q, p["Q_w"], p["Q_b"])
    non_q = non_q * p["Q_scale"].reshape(1, -1, 1, 1) + p["Q_bias"].reshape(1, -1, 1, 1)
    non_q = non_q + q

    avg_p = jnp.mean(s, axis=(2, 3))
    max_p = jnp.max(s, axis=(2, 3))

    def mlp(v):
        h = jax.nn.relu(v @ p["m1_w"] + p["m1_b"].reshape(1, -1))
        return h @ p["m2_w"] + p["m2_b"].reshape(1, -1)

    scale = jax.nn.sigmoid(mlp(avg_p) + mlp(max_p)).reshape(B, C, 1, 1)
    return non_q * scale, non_s * scale


def init_params(key, C, reduction_ratio=16):
    inter = max(C // 2, 1)
    hidden = C // reduction_ratio
    ks = jax.random.split(key, 16)
    n = lambda k, shape, s=0.1: (jax.random.normal(k, shape, jnp.float32) * s)
    return {
        # 1x1 conv weights stored as (Cin, Cout) (i.e. torch weight[:,:,0,0].T)
        "g_w": n(ks[0], (C, inter)),      "g_b": n(ks[1], (1, inter)),
        "theta_w": n(ks[2], (C, inter)),  "theta_b": n(ks[3], (1, inter)),
        "phi_w": n(ks[4], (C, inter)),    "phi_b": n(ks[5], (1, inter)),
        "W_w": n(ks[6], (inter, C)),      "W_b": n(ks[7], (1, C)),
        "W_scale": n(ks[8], (1, C), 1.0), "W_bias": n(ks[9], (1, C)),
        "Q_w": n(ks[10], (inter, C)),     "Q_b": n(ks[11], (1, C)),
        "Q_scale": n(ks[12], (1, C), 1.0), "Q_bias": n(ks[13], (1, C)),
        "m1_w": n(ks[14], (C, hidden)),   "m1_b": jnp.zeros((1, hidden), jnp.float32),
        "m2_w": n(ks[15], (hidden, C)),   "m2_b": jnp.zeros((1, C), jnp.float32),
    }


if __name__ == "__main__":
    key = jax.random.PRNGKey(0)
    kq, ks_, kp = jax.random.split(key, 3)

    B, C = 2, 32                     # inplanes=32 -> inter=16, gate hidden=2
    Hq, Wq = 32, 32                  # Nq = 1024 -> two 512-lane q tiles
    Hs, Ws = 16, 16                  # Ns = 256
    q = jax.random.normal(kq, (B, C, Hq, Wq), jnp.float32)
    s = jax.random.normal(ks_, (B, C, Hs, Ws), jnp.float32)
    params = init_params(kp, C)

    act_q, act_s = iem_forward(q, s, params)
    act_q, act_s = jax.block_until_ready((act_q, act_s))

    ref_q, ref_s = iem_reference(q, s, params)
    ref_q, ref_s = jax.block_until_ready((ref_q, ref_s))

    assert act_q.shape == (B, C, Hq, Wq) and act_s.shape == (B, C, Hs, Ws)
    assert jnp.allclose(act_q, ref_q, rtol=2e-2, atol=2e-2), "act_q mismatch"
    assert jnp.allclose(act_s, ref_s, rtol=2e-2, atol=2e-2), "act_s mismatch"

    print("KERNEL_OK")
</pallas_src>

<mosaic_0001>
module attributes {stable_mosaic.version = 11 : i64} {
  func.func @iem_kernel(%arg0: i32, %arg1: i32, %arg2: memref<1x32x512xf32, #tpu.memory_space<vmem>>, %arg3: memref<1x32x256xf32, #tpu.memory_space<vmem>>, %arg4: memref<32x32xbf16, #tpu.memory_space<vmem>>, %arg5: memref<32x1xf32, #tpu.memory_space<vmem>>, %arg6: memref<32x32xbf16, #tpu.memory_space<vmem>>, %arg7: memref<32x1xf32, #tpu.memory_space<vmem>>, %arg8: memref<32x16xbf16, #tpu.memory_space<vmem>>, %arg9: memref<32x1xf32, #tpu.memory_space<vmem>>, %arg10: memref<32x16xbf16, #tpu.memory_space<vmem>>, %arg11: memref<32x1xf32, #tpu.memory_space<vmem>>, %arg12: memref<2x32xf32, #tpu.memory_space<vmem>>, %arg13: memref<2x1xf32, #tpu.memory_space<vmem>>, %arg14: memref<32x2xf32, #tpu.memory_space<vmem>>, %arg15: memref<32x1xf32, #tpu.memory_space<vmem>>, %arg16: memref<1x32x512xf32, #tpu.memory_space<vmem>>, %arg17: memref<1x32x256xf32, #tpu.memory_space<vmem>>, %arg18: memref<16x256xbf16, #tpu.memory_space<vmem>>, %arg19: memref<32x16xbf16, #tpu.memory_space<vmem>>, %arg20: memref<16x16xf32, #tpu.memory_space<vmem>>, %arg21: memref<32x1xf32, #tpu.memory_space<vmem>>) attributes {dimension_semantics = [#tpu.dimension_semantics<parallel>, #tpu.dimension_semantics<arbitrary>], iteration_bounds = array<i64: 2, 2>, scalar_prefetch = 0 : i64, scratch_operands = 4 : i64, tpu.core_type = #tpu.core_type<tc>, window_params = [{transform_indices = @transform_0, window_bounds = array<i64: 1, 32, 512>}, {pipeline_mode = #tpu.pipeline_mode<synchronous>, transform_indices = @transform_1, window_bounds = array<i64: 1, 32, 256>}, {pipeline_mode = #tpu.pipeline_mode<synchronous>, transform_indices = @transform_2, window_bounds = array<i64: 32, 32>}, {pipeline_mode = #tpu.pipeline_mode<synchronous>, transform_indices = @transform_3, window_bounds = array<i64: 32, 1>}, {pipeline_mode = #tpu.pipeline_mode<synchronous>, transform_indices = @transform_4, window_bounds = array<i64: 32, 32>}, {pipeline_mode = #tpu.pipeline_mode<synchronous>, transform_indices = @transform_5, window_bounds = array<i64: 32, 1>}, {pipeline_mode = #tpu.pipeline_mode<synchronous>, transform_indices = @transform_6, window_bounds = array<i64: 32, 16>}, {pipeline_mode = #tpu.pipeline_mode<synchronous>, transform_indices = @transform_7, window_bounds = array<i64: 32, 1>}, {pipeline_mode = #tpu.pipeline_mode<synchronous>, transform_indices = @transform_8, window_bounds = array<i64: 32, 16>}, {pipeline_mode = #tpu.pipeline_mode<synchronous>, transform_indices = @transform_9, window_bounds = array<i64: 32, 1>}, {pipeline_mode = #tpu.pipeline_mode<synchronous>, transform_indices = @transform_10, window_bounds = array<i64: 2, 32>}, {pipeline_mode = #tpu.pipeline_mode<synchronous>, transform_indices = @transform_11, window_bounds = array<i64: 2, 1>}, {pipeline_mode = #tpu.pipeline_mode<synchronous>, transform_indices = @transform_12, window_bounds = array<i64: 32, 2>}, {pipeline_mode = #tpu.pipeline_mode<synchronous>, transform_indices = @transform_13, window_bounds = array<i64: 32, 1>}, {transform_indices = @transform_14, window_bounds = array<i64: 1, 32, 512>}, {pipeline_mode = #tpu.pipeline_mode<synchronous>, transform_indices = @transform_15, window_bounds = array<i64: 1, 32, 256>}]} {
    %c0_i32 = arith.constant 0 : i32
    %0 = arith.cmpi eq, %arg1, %c0_i32 : i32
    %1 = arith.extui %0 : i1 to i32
    %c0_i32_0 = arith.constant 0 : i32
    %2 = arith.cmpi ne, %1, %c0_i32_0 : i32
    scf.if %2 {
      %c0_23 = arith.constant 0 : index
      %c0_24 = arith.constant 0 : index
      %c0_25 = arith.constant 0 : index
      %34 = vector.load %arg3[%c0_23, %c0_24, %c0_25] : memref<1x32x256xf32, #tpu.memory_space<vmem>>, vector<1x32x256xf32>
      %35 = vector.shape_cast %34 : vector<1x32x256xf32> to vector<32x256xf32>
      %c0_26 = arith.constant 0 : index
      %c0_27 = arith.constant 0 : index
      %36 = vector.load %arg6[%c0_26, %c0_27] : memref<32x32xbf16, #tpu.memory_space<vmem>>, vector<32x32xbf16>
      %37 = arith.truncf %35 : vector<32x256xf32> to vector<32x256xbf16>
      %cst_28 = arith.constant dense<0.000000e+00> : vector<32x256xf32>
      %38 = tpu.matmul %36, %37, %cst_28 {dimension_numbers = #tpu.dot_dimension_numbers<[1], [0], [0], [1], [0, 0, 1, 1], [], []>} : vector<32x32xbf16>, vector<32x256xbf16>, vector<32x256xf32> -> vector<32x256xf32>
      %c0_29 = arith.constant 0 : index
      %c0_30 = arith.constant 0 : index
      %39 = vector.load %arg7[%c0_29, %c0_30] : memref<32x1xf32, #tpu.memory_space<vmem>>, vector<32x1xf32>
      %40 = vector.broadcast %39 : vector<32x1xf32> to vector<32x256xf32>
      %41 = arith.addf %38, %40 : vector<32x256xf32>
      %42 = vector.extract_strided_slice %41 {offsets = [0, 0], sizes = [16, 256], strides = [1, 1]} : vector<32x256xf32> to vector<16x256xf32>
      %43 = arith.truncf %42 : vector<16x256xf32> to vector<16x256xbf16>
      %44 = vector.extract_strided_slice %41 {offsets = [16, 0], sizes = [16, 256], strides = [1, 1]} : vector<32x256xf32> to vector<16x256xf32>
      %45 = arith.truncf %44 : vector<16x256xf32> to vector<16x256xbf16>
      %c0_31 = arith.constant 0 : index
      %c0_32 = arith.constant 0 : index
      %46 = vector.load %arg18[%c0_31, %c0_32] : memref<16x256xbf16, #tpu.memory_space<vmem>>, vector<16x256xbf16>
      tpu.vector_store %arg18[%c0_31, %c0_32], %45 {strides = array<i32>} : memref<16x256xbf16, #tpu.memory_space<vmem>>, vector<16x256xbf16>,
      %cst_33 = arith.constant dense<0.000000e+00> : vector<16x16xf32>
      %47 = tpu.matmul %43, %45, %cst_33 {dimension_numbers = #tpu.dot_dimension_numbers<[1], [1], [0], [0], [0, 0, 1, 0], [], []>} : vector<16x256xbf16>, vector<16x256xbf16>, vector<16x16xf32> -> vector<16x16xf32>
      %c0_34 = arith.constant 0 : index
      %c0_35 = arith.constant 0 : index
      %48 = vector.load %arg10[%c0_34, %c0_35] : memref<32x16xbf16, #tpu.memory_space<vmem>>, vector<32x16xbf16>
      %49 = arith.truncf %47 : vector<16x16xf32> to vector<16x16xbf16>
      %cst_36 = arith.constant dense<0.000000e+00> : vector<32x16xf32>
      %50 = tpu.matmul %48, %49, %cst_36 {dimension_numbers = #tpu.dot_dimension_numbers<[1], [0], [0], [1], [0, 0, 1, 1], [], []>} : vector<32x16xbf16>, vector<16x16xbf16>, vector<32x16xf32> -> vector<32x16xf32>
      %51 = arith.truncf %50 : vector<32x16xf32> to vector<32x16xbf16>
      %c0_37 = arith.constant 0 : index
      %c0_38 = arith.constant 0 : index
      %52 = vector.load %arg19[%c0_37, %c0_38] : memref<32x16xbf16, #tpu.memory_space<vmem>>, vector<32x16xbf16>
      tpu.vector_store %arg19[%c0_37, %c0_38], %51 {strides = array<i32>} : memref<32x16xbf16, #tpu.memory_space<vmem>>, vector<32x16xbf16>,
      %cst_39 = arith.constant dense<0.000000e+00> : vector<32xf32>
      %53 = vector.multi_reduction <add>, %35, %cst_39 [1] : vector<32x256xf32> to vector<32xf32>
      %54 = vector.shape_cast %53 : vector<32xf32> to vector<32x1xf32>
      %cst_40 = arith.constant 2.560000e+02 : f32
      %55 = vector.broadcast %cst_40 : f32 to vector<32x1xf32>
      %56 = arith.divf %54, %55 : vector<32x1xf32>
      %cst_41 = arith.constant dense<0xFF800000> : vector<32xf32>
      %57 = vector.multi_reduction <maximumf>, %35, %cst_41 [1] : vector<32x256xf32> to vector<32xf32>
      %58 = vector.shape_cast %57 : vector<32xf32> to vector<32x1xf32>
      %59 = tpu.iota {dimensions = array<i32: 1>} : vector<32x2xi32>
      %c0_i32_42 = arith.constant 0 : i32
      %60 = vector.broadcast %c0_i32_42 : i32 to vector<32x2xi32>
      %61 = arith.cmpi eq, %59, %60 : vector<32x2xi32>
      %62 = vector.shape_cast %56 : vector<32x1xf32> to vector<32x1xf32>
      %63 = vector.broadcast %62 : vector<32x1xf32> to vector<32x2xf32>
      %64 = vector.shape_cast %58 : vector<32x1xf32> to vector<32x1xf32>
      %65 = vector.broadcast %64 : vector<32x1xf32> to vector<32x2xf32>
      %66 = arith.select %61, %63, %65 : vector<32x2xi1>, vector<32x2xf32>
      %c0_43 = arith.constant 0 : index
      %c0_44 = arith.constant 0 : index
      %67 = vector.load %arg12[%c0_43, %c0_44] : memref<2x32xf32, #tpu.memory_space<vmem>>, vector<2x32xf32>
      %cst_45 = arith.constant dense<0.000000e+00> : vector<2x2xf32>
      %68 = tpu.matmul %67, %66, %cst_45 {dimension_numbers = #tpu.dot_dimension_numbers<[1], [0], [0], [1], [0, 0, 1, 1], [], []>} : vector<2x32xf32>, vector<32x2xf32>, vector<2x2xf32> -> vector<2x2xf32>
      %c0_46 = arith.constant 0 : index
      %c0_47 = arith.constant 0 : index
      %69 = vector.load %arg13[%c0_46, %c0_47] : memref<2x1xf32, #tpu.memory_space<vmem>>, vector<2x1xf32>
      %70 = vector.broadcast %69 : vector<2x1xf32> to vector<2x2xf32>
      %71 = arith.addf %68, %70 : vector<2x2xf32>
      %cst_48 = arith.constant 0.000000e+00 : f32
      %72 = vector.broadcast %cst_48 : f32 to vector<2x2xf32>
      %73 = arith.maximumf %71, %72 : vector<2x2xf32>
      %c0_49 = arith.constant 0 : index
      %c0_50 = arith.constant 0 : index
      %74 = vector.load %arg14[%c0_49, %c0_50] : memref<32x2xf32, #tpu.memory_space<vmem>>, vector<32x2xf32>
      %cst_51 = arith.constant dense<0.000000e+00> : vector<32x2xf32>
      %75 = tpu.matmul %74, %73, %cst_51 {dimension_numbers = #tpu.dot_dimension_numbers<[1], [0], [0], [1], [0, 0, 1, 1], [], []>} : vector<32x2xf32>, vector<2x2xf32>, vector<32x2xf32> -> vector<32x2xf32>
      %c0_52 = arith.constant 0 : index
      %c0_53 = arith.constant 0 : index
      %76 = vector.load %arg15[%c0_52, %c0_53] : memref<32x1xf32, #tpu.memory_space<vmem>>, vector<32x1xf32>
      %77 = vector.broadcast %76 : vector<32x1xf32> to vector<32x2xf32>
      %78 = arith.addf %75, %77 : vector<32x2xf32>
      %cst_54 = arith.constant dense<0.000000e+00> : vector<32xf32>
      %79 = vector.multi_reduction <add>, %78, %cst_54 [1] : vector<32x2xf32> to vector<32xf32>
      %80 = vector.shape_cast %79 : vector<32xf32> to vector<32x1xf32>
      %81 = arith.negf %80 : vector<32x1xf32>
      %82 = math.exp %81 : vector<32x1xf32>
      %cst_55 = arith.constant 1.000000e+00 : f32
      %83 = vector.broadcast %cst_55 : f32 to vector<32x1xf32>
      %84 = arith.addf %83, %82 : vector<32x1xf32>
      %85 = arith.divf %83, %84 : vector<32x1xf32>
      %c0_56 = arith.constant 0 : index
      %c0_57 = arith.constant 0 : index
      %86 = vector.load %arg21[%c0_56, %c0_57] : memref<32x1xf32, #tpu.memory_space<vmem>>, vector<32x1xf32>
      tpu.vector_store %arg21[%c0_56, %c0_57], %85 {strides = array<i32>} : memref<32x1xf32, #tpu.memory_space<vmem>>, vector<32x1xf32>,
      %cst_58 = arith.constant 0.000000e+00 : f32
      %87 = vector.broadcast %cst_58 : f32 to vector<16x16xf32>
      %c0_59 = arith.constant 0 : index
      %c0_60 = arith.constant 0 : index
      %88 = vector.load %arg20[%c0_59, %c0_60] : memref<16x16xf32, #tpu.memory_space<vmem>>, vector<16x16xf32>
      tpu.vector_store %arg20[%c0_59, %c0_60], %87 {strides = array<i32>} : memref<16x16xf32, #tpu.memory_space<vmem>>, vector<16x16xf32>,
    } else {
    }
    %c0 = arith.constant 0 : index
    %c0_1 = arith.constant 0 : index
    %c0_2 = arith.constant 0 : index
    %3 = vector.load %arg2[%c0, %c0_1, %c0_2] : memref<1x32x512xf32, #tpu.memory_space<vmem>>, vector<1x32x512xf32>
    %4 = vector.shape_cast %3 : vector<1x32x512xf32> to vector<32x512xf32>
    %c0_3 = arith.constant 0 : index
    %c0_4 = arith.constant 0 : index
    %5 = vector.load %arg4[%c0_3, %c0_4] : memref<32x32xbf16, #tpu.memory_space<vmem>>, vector<32x32xbf16>
    %6 = arith.truncf %4 : vector<32x512xf32> to vector<32x512xbf16>
    %cst = arith.constant dense<0.000000e+00> : vector<32x512xf32>
    %7 = tpu.matmul %5, %6, %cst {dimension_numbers = #tpu.dot_dimension_numbers<[1], [0], [0], [1], [0, 0, 1, 1], [], []>} : vector<32x32xbf16>, vector<32x512xbf16>, vector<32x512xf32> -> vector<32x512xf32>
    %c0_5 = arith.constant 0 : index
    %c0_6 = arith.constant 0 : index
    %8 = vector.load %arg5[%c0_5, %c0_6] : memref<32x1xf32, #tpu.memory_space<vmem>>, vector<32x1xf32>
    %9 = vector.broadcast %8 : vector<32x1xf32> to vector<32x512xf32>
    %10 = arith.addf %7, %9 : vector<32x512xf32>
    %11 = vector.extract_strided_slice %10 {offsets = [0, 0], sizes = [16, 512], strides = [1, 1]} : vector<32x512xf32> to vector<16x512xf32>
    %12 = arith.truncf %11 : vector<16x512xf32> to vector<16x512xbf16>
    %13 = vector.extract_strided_slice %10 {offsets = [16, 0], sizes = [16, 512], strides = [1, 1]} : vector<32x512xf32> to vector<16x512xf32>
    %14 = arith.truncf %13 : vector<16x512xf32> to vector<16x512xbf16>
    %c0_7 = arith.constant 0 : index
    %c0_8 = arith.constant 0 : index
    %15 = vector.load %arg19[%c0_7, %c0_8] : memref<32x16xbf16, #tpu.memory_space<vmem>>, vector<32x16xbf16>
    %cst_9 = arith.constant dense<0.000000e+00> : vector<32x512xf32>
    %16 = tpu.matmul %15, %14, %cst_9 {dimension_numbers = #tpu.dot_dimension_numbers<[1], [0], [0], [1], [0, 0, 1, 1], [], []>} : vector<32x16xbf16>, vector<16x512xbf16>, vector<32x512xf32> -> vector<32x512xf32>
    %c0_10 = arith.constant 0 : index
    %c0_11 = arith.constant 0 : index
    %17 = vector.load %arg11[%c0_10, %c0_11] : memref<32x1xf32, #tpu.memory_space<vmem>>, vector<32x1xf32>
    %18 = vector.broadcast %17 : vector<32x1xf32> to vector<32x512xf32>
    %19 = arith.addf %16, %18 : vector<32x512xf32>
    %20 = arith.addf %19, %4 : vector<32x512xf32>
    %c0_12 = arith.constant 0 : index
    %c0_13 = arith.constant 0 : index
    %21 = vector.load %arg21[%c0_12, %c0_13] : memref<32x1xf32, #tpu.memory_space<vmem>>, vector<32x1xf32>
    %22 = vector.broadcast %21 : vector<32x1xf32> to vector<32x512xf32>
    %23 = arith.mulf %20, %22 : vector<32x512xf32>
    %c0_14 = arith.constant 0 : index
    %c0_15 = arith.constant 0 : index
    %c0_16 = arith.constant 0 : index
    %24 = vector.load %arg16[%c0_14, %c0_15, %c0_16] : memref<1x32x512xf32, #tpu.memory_space<vmem>>, vector<1x32x512xf32>
    %25 = vector.shape_cast %24 : vector<1x32x512xf32> to vector<32x512xf32>
    %26 = vector.shape_cast %23 : vector<32x512xf32> to vector<1x32x512xf32>
    tpu.vector_store %arg16[%c0_14, %c0_15, %c0_16], %26 {strides = array<i32>} : memref<1x32x512xf32, #tpu.memory_space<vmem>>, vector<1x32x512xf32>,
    %c0_17 = arith.constant 0 : index
    %c0_18 = arith.constant 0 : index
    %27 = vector.load %arg20[%c0_17, %c0_18] : memref<16x16xf32, #tpu.memory_space<vmem>>, vector<16x16xf32>
    %cst_19 = arith.constant dense<0.000000e+00> : vector<16x16xf32>
    %28 = tpu.matmul %12, %14, %cst_19 {dimension_numbers = #tpu.dot_dimension_numbers<[1], [1], [0], [0], [0, 0, 1, 0], [], []>} : vector<16x512xbf16>, vector<16x512xbf16>, vector<16x16xf32> -> vector<16x16xf32>
    %29 = arith.addf %27, %28 : vector<16x16xf32>
    %c0_20 = arith.constant 0 : index
    %c0_21 = arith.constant 0 : index
    %30 = vector.load %arg20[%c0_20, %c0_21] : memref<16x16xf32, #tpu.memory_space<vmem>>, vector<16x16xf32>
    tpu.vector_store %arg20[%c0_20, %c0_21], %29 {strides = array<i32>} : memref<16x16xf32, #tpu.memory_space<vmem>>, vector<16x16xf32>,
    %c1_i32 = arith.constant 1 : i32
    %31 = arith.cmpi eq, %arg1, %c1_i32 : i32
    %32 = arith.extui %31 : i1 to i32
    %c0_i32_22 = arith.constant 0 : i32
    %33 = arith.cmpi ne, %32, %c0_i32_22 : i32
    scf.if %33 {
      %c0_23 = arith.constant 0 : index
      %c0_24 = arith.constant 0 : index
      %34 = vector.load %arg8[%c0_23, %c0_24] : memref<32x16xbf16, #tpu.memory_space<vmem>>, vector<32x16xbf16>
      %c0_25 = arith.constant 0 : index
      %c0_26 = arith.constant 0 : index
      %35 = vector.load %arg20[%c0_25, %c0_26] : memref<16x16xf32, #tpu.memory_space<vmem>>, vector<16x16xf32>
      %36 = arith.truncf %35 : vector<16x16xf32> to vector<16x16xbf16>
      %cst_27 = arith.constant dense<0.000000e+00> : vector<32x16xf32>
      %37 = tpu.matmul %34, %36, %cst_27 {dimension_numbers = #tpu.dot_dimension_numbers<[1], [0], [0], [1], [0, 0, 1, 1], [], []>} : vector<32x16xbf16>, vector<16x16xbf16>, vector<32x16xf32> -> vector<32x16xf32>
      %38 = arith.truncf %37 : vector<32x16xf32> to vector<32x16xbf16>
      %c0_28 = arith.constant 0 : index
      %c0_29 = arith.constant 0 : index
      %39 = vector.load %arg18[%c0_28, %c0_29] : memref<16x256xbf16, #tpu.memory_space<vmem>>, vector<16x256xbf16>
      %cst_30 = arith.constant dense<0.000000e+00> : vector<32x256xf32>
      %40 = tpu.matmul %38, %39, %cst_30 {dimension_numbers = #tpu.dot_dimension_numbers<[1], [0], [0], [1], [0, 0, 1, 1], [], []>} : vector<32x16xbf16>, vector<16x256xbf16>, vector<32x256xf32> -> vector<32x256xf32>
      %c0_31 = arith.constant 0 : index
      %c0_32 = arith.constant 0 : index
      %41 = vector.load %arg9[%c0_31, %c0_32] : memref<32x1xf32, #tpu.memory_space<vmem>>, vector<32x1xf32>
      %42 = vector.broadcast %41 : vector<32x1xf32> to vector<32x256xf32>
      %43 = arith.addf %40, %42 : vector<32x256xf32>
      %c0_33 = arith.constant 0 : index
      %c0_34 = arith.constant 0 : index
      %c0_35 = arith.constant 0 : index
      %44 = vector.load %arg3[%c0_33, %c0_34, %c0_35] : memref<1x32x256xf32, #tpu.memory_space<vmem>>, vector<1x32x256xf32>
      %45 = vector.shape_cast %44 : vector<1x32x256xf32> to vector<32x256xf32>
      %46 = arith.addf %43, %45 : vector<32x256xf32>
      %c0_36 = arith.constant 0 : index
      %c0_37 = arith.constant 0 : index
      %47 = vector.load %arg21[%c0_36, %c0_37] : memref<32x1xf32, #tpu.memory_space<vmem>>, vector<32x1xf32>
      %48 = vector.broadcast %47 : vector<32x1xf32> to vector<32x256xf32>
      %49 = arith.mulf %46, %48 : vector<32x256xf32>
      %c0_38 = arith.constant 0 : index
      %c0_39 = arith.constant 0 : index
      %c0_40 = arith.constant 0 : index
      %50 = vector.load %arg17[%c0_38, %c0_39, %c0_40] : memref<1x32x256xf32, #tpu.memory_space<vmem>>, vector<1x32x256xf32>
      %51 = vector.shape_cast %50 : vector<1x32x256xf32> to vector<32x256xf32>
      %52 = vector.shape_cast %49 : vector<32x256xf32> to vector<1x32x256xf32>
      tpu.vector_store %arg17[%c0_38, %c0_39, %c0_40], %52 {strides = array<i32>} : memref<1x32x256xf32, #tpu.memory_space<vmem>>, vector<1x32x256xf32>,
    } else {
    }
    return
  }
  func.func @transform_0(%arg0: i32, %arg1: i32) -> (i32, i32, i32) {
    %c0_i32 = arith.constant 0 : i32
    %c0_i32_0 = arith.constant 0 : i32
    return %arg0, %c0_i32, %arg1 : i32, i32, i32
  }
  func.func @transform_1(%arg0: i32, %arg1: i32) -> (i32, i32, i32) {
    %c0_i32 = arith.constant 0 : i32
    %c0_i32_0 = arith.constant 0 : i32
    %c0_i32_1 = arith.constant 0 : i32
    return %arg0, %c0_i32, %c0_i32_0 : i32, i32, i32
  }
  func.func @transform_2(%arg0: i32, %arg1: i32) -> (i32, i32) {
    %c0_i32 = arith.constant 0 : i32
    %c0_i32_0 = arith.constant 0 : i32
    %c0_i32_1 = arith.constant 0 : i32
    return %c0_i32, %c0_i32_0 : i32, i32
  }
  func.func @transform_3(%arg0: i32, %arg1: i32) -> (i32, i32) {
    %c0_i32 = arith.constant 0 : i32
    %c0_i32_0 = arith.constant 0 : i32
    %c0_i32_1 = arith.constant 0 : i32
    return %c0_i32, %c0_i32_0 : i32, i32
  }
  func.func @transform_4(%arg0: i32, %arg1: i32) -> (i32, i32) {
    %c0_i32 = arith.constant 0 : i32
    %c0_i32_0 = arith.constant 0 : i32
    %c0_i32_1 = arith.constant 0 : i32
    return %c0_i32, %c0_i32_0 : i32, i32
  }
  func.func @transform_5(%arg0: i32, %arg1: i32) -> (i32, i32) {
    %c0_i32 = arith.constant 0 : i32
    %c0_i32_0 = arith.constant 0 : i32
    %c0_i32_1 = arith.constant 0 : i32
    return %c0_i32, %c0_i32_0 : i32, i32
  }
  func.func @transform_6(%arg0: i32, %arg1: i32) -> (i32, i32) {
    %c0_i32 = arith.constant 0 : i32
    %c0_i32_0 = arith.constant 0 : i32
    %c0_i32_1 = arith.constant 0 : i32
    return %c0_i32, %c0_i32_0 : i32, i32
  }
  func.func @transform_7(%arg0: i32, %arg1: i32) -> (i32, i32) {
    %c0_i32 = arith.constant 0 : i32
    %c0_i32_0 = arith.constant 0 : i32
    %c0_i32_1 = arith.constant 0 : i32
    return %c0_i32, %c0_i32_0 : i32, i32
  }
  func.func @transform_8(%arg0: i32, %arg1: i32) -> (i32, i32) {
    %c0_i32 = arith.constant 0 : i32
    %c0_i32_0 = arith.constant 0 : i32
    %c0_i32_1 = arith.constant 0 : i32
    return %c0_i32, %c0_i32_0 : i32, i32
  }
  func.func @transform_9(%arg0: i32, %arg1: i32) -> (i32, i32) {
    %c0_i32 = arith.constant 0 : i32
    %c0_i32_0 = arith.constant 0 : i32
    %c0_i32_1 = arith.constant 0 : i32
    return %c0_i32, %c0_i32_0 : i32, i32
  }
  func.func @transform_10(%arg0: i32, %arg1: i32) -> (i32, i32) {
    %c0_i32 = arith.constant 0 : i32
    %c0_i32_0 = arith.constant 0 : i32
    %c0_i32_1 = arith.constant 0 : i32
    return %c0_i32, %c0_i32_0 : i32, i32
  }
  func.func @transform_11(%arg0: i32, %arg1: i32) -> (i32, i32) {
    %c0_i32 = arith.constant 0 : i32
    %c0_i32_0 = arith.constant 0 : i32
    %c0_i32_1 = arith.constant 0 : i32
    return %c0_i32, %c0_i32_0 : i32, i32
  }
  func.func @transform_12(%arg0: i32, %arg1: i32) -> (i32, i32) {
    %c0_i32 = arith.constant 0 : i32
    %c0_i32_0 = arith.constant 0 : i32
    %c0_i32_1 = arith.constant 0 : i32
    return %c0_i32, %c0_i32_0 : i32, i32
  }
  func.func @transform_13(%arg0: i32, %arg1: i32) -> (i32, i32) {
    %c0_i32 = arith.constant 0 : i32
    %c0_i32_0 = arith.constant 0 : i32
    %c0_i32_1 = arith.constant 0 : i32
    return %c0_i32, %c0_i32_0 : i32, i32
  }
  func.func @transform_14(%arg0: i32, %arg1: i32) -> (i32, i32, i32) {
    %c0_i32 = arith.constant 0 : i32
    %c0_i32_0 = arith.constant 0 : i32
    return %arg0, %c0_i32, %arg1 : i32, i32, i32
  }
  func.func @transform_15(%arg0: i32, %arg1: i32) -> (i32, i32, i32) {
    %c0_i32 = arith.constant 0 : i32
    %c0_i32_0 = arith.constant 0 : i32
    %c0_i32_1 = arith.constant 0 : i32
    return %arg0, %c0_i32, %c0_i32_0 : i32, i32, i32
  }
}

module attributes {stable_mosaic.version = 11 : i64} {
  func.func @iem_kernel(%arg0: i32, %arg1: i32, %arg2: memref<1x32x512xf32, #tpu.memory_space<vmem>>, %arg3: memref<1x32x256xf32, #tpu.memory_space<vmem>>, %arg4: memref<32x32xbf16, #tpu.memory_space<vmem>>, %arg5: memref<32x1xf32, #tpu.memory_space<vmem>>, %arg6: memref<32x32xbf16, #tpu.memory_space<vmem>>, %arg7: memref<32x1xf32, #tpu.memory_space<vmem>>, %arg8: memref<32x16xbf16, #tpu.memory_space<vmem>>, %arg9: memref<32x1xf32, #tpu.memory_space<vmem>>, %arg10: memref<32x16xbf16, #tpu.memory_space<vmem>>, %arg11: memref<32x1xf32, #tpu.memory_space<vmem>>, %arg12: memref<2x32xf32, #tpu.memory_space<vmem>>, %arg13: memref<2x1xf32, #tpu.memory_space<vmem>>, %arg14: memref<32x2xf32, #tpu.memory_space<vmem>>, %arg15: memref<32x1xf32, #tpu.memory_space<vmem>>, %arg16: memref<1x32x512xf32, #tpu.memory_space<vmem>>, %arg17: memref<1x32x256xf32, #tpu.memory_space<vmem>>, %arg18: memref<16x256xbf16, #tpu.memory_space<vmem>>, %arg19: memref<32x16xbf16, #tpu.memory_space<vmem>>, %arg20: memref<16x16xf32, #tpu.memory_space<vmem>>, %arg21: memref<32x1xf32, #tpu.memory_space<vmem>>) attributes {dimension_semantics = [#tpu.dimension_semantics<parallel>, #tpu.dimension_semantics<arbitrary>], iteration_bounds = array<i64: 2, 2>, scalar_prefetch = 0 : i64, scratch_operands = 4 : i64, tpu.core_type = #tpu.core_type<tc>, window_params = [{transform_indices = @transform_0, window_bounds = array<i64: 1, 32, 512>}, {transform_indices = @transform_1, window_bounds = array<i64: 1, 32, 256>}, {pipeline_mode = #tpu.pipeline_mode<synchronous>, transform_indices = @transform_2, window_bounds = array<i64: 32, 32>}, {pipeline_mode = #tpu.pipeline_mode<synchronous>, transform_indices = @transform_3, window_bounds = array<i64: 32, 1>}, {pipeline_mode = #tpu.pipeline_mode<synchronous>, transform_indices = @transform_4, window_bounds = array<i64: 32, 32>}, {pipeline_mode = #tpu.pipeline_mode<synchronous>, transform_indices = @transform_5, window_bounds = array<i64: 32, 1>}, {pipeline_mode = #tpu.pipeline_mode<synchronous>, transform_indices = @transform_6, window_bounds = array<i64: 32, 16>}, {pipeline_mode = #tpu.pipeline_mode<synchronous>, transform_indices = @transform_7, window_bounds = array<i64: 32, 1>}, {pipeline_mode = #tpu.pipeline_mode<synchronous>, transform_indices = @transform_8, window_bounds = array<i64: 32, 16>}, {pipeline_mode = #tpu.pipeline_mode<synchronous>, transform_indices = @transform_9, window_bounds = array<i64: 32, 1>}, {pipeline_mode = #tpu.pipeline_mode<synchronous>, transform_indices = @transform_10, window_bounds = array<i64: 2, 32>}, {pipeline_mode = #tpu.pipeline_mode<synchronous>, transform_indices = @transform_11, window_bounds = array<i64: 2, 1>}, {pipeline_mode = #tpu.pipeline_mode<synchronous>, transform_indices = @transform_12, window_bounds = array<i64: 32, 2>}, {pipeline_mode = #tpu.pipeline_mode<synchronous>, transform_indices = @transform_13, window_bounds = array<i64: 32, 1>}, {transform_indices = @transform_14, window_bounds = array<i64: 1, 32, 512>}, {transform_indices = @transform_15, window_bounds = array<i64: 1, 32, 256>}]} {
    %c0_i32 = arith.constant 0 : i32
    %0 = arith.cmpi eq, %arg1, %c0_i32 : i32
    %1 = arith.extui %0 : i1 to i32
    %c0_i32_0 = arith.constant 0 : i32
    %2 = arith.cmpi ne, %1, %c0_i32_0 : i32
    scf.if %2 {
      %c0_23 = arith.constant 0 : index
      %c0_24 = arith.constant 0 : index
      %c0_25 = arith.constant 0 : index
      %34 = vector.load %arg3[%c0_23, %c0_24, %c0_25] : memref<1x32x256xf32, #tpu.memory_space<vmem>>, vector<1x32x256xf32>
      %35 = vector.shape_cast %34 : vector<1x32x256xf32> to vector<32x256xf32>
      %c0_26 = arith.constant 0 : index
      %c0_27 = arith.constant 0 : index
      %36 = vector.load %arg6[%c0_26, %c0_27] : memref<32x32xbf16, #tpu.memory_space<vmem>>, vector<32x32xbf16>
      %37 = arith.truncf %35 : vector<32x256xf32> to vector<32x256xbf16>
      %cst_28 = arith.constant dense<0.000000e+00> : vector<32x256xf32>
      %38 = tpu.matmul %36, %37, %cst_28 {dimension_numbers = #tpu.dot_dimension_numbers<[1], [0], [0], [1], [0, 0, 1, 1], [], []>} : vector<32x32xbf16>, vector<32x256xbf16>, vector<32x256xf32> -> vector<32x256xf32>
      %c0_29 = arith.constant 0 : index
      %c0_30 = arith.constant 0 : index
      %39 = vector.load %arg7[%c0_29, %c0_30] : memref<32x1xf32, #tpu.memory_space<vmem>>, vector<32x1xf32>
      %40 = vector.broadcast %39 : vector<32x1xf32> to vector<32x256xf32>
      %41 = arith.addf %38, %40 : vector<32x256xf32>
      %42 = vector.extract_strided_slice %41 {offsets = [0, 0], sizes = [16, 256], strides = [1, 1]} : vector<32x256xf32> to vector<16x256xf32>
      %43 = arith.truncf %42 : vector<16x256xf32> to vector<16x256xbf16>
      %44 = vector.extract_strided_slice %41 {offsets = [16, 0], sizes = [16, 256], strides = [1, 1]} : vector<32x256xf32> to vector<16x256xf32>
      %45 = arith.truncf %44 : vector<16x256xf32> to vector<16x256xbf16>
      %c0_31 = arith.constant 0 : index
      %c0_32 = arith.constant 0 : index
      %46 = vector.load %arg18[%c0_31, %c0_32] : memref<16x256xbf16, #tpu.memory_space<vmem>>, vector<16x256xbf16>
      tpu.vector_store %arg18[%c0_31, %c0_32], %45 {strides = array<i32>} : memref<16x256xbf16, #tpu.memory_space<vmem>>, vector<16x256xbf16>,
      %cst_33 = arith.constant dense<0.000000e+00> : vector<16x16xf32>
      %47 = tpu.matmul %43, %45, %cst_33 {dimension_numbers = #tpu.dot_dimension_numbers<[1], [1], [0], [0], [0, 0, 1, 0], [], []>} : vector<16x256xbf16>, vector<16x256xbf16>, vector<16x16xf32> -> vector<16x16xf32>
      %c0_34 = arith.constant 0 : index
      %c0_35 = arith.constant 0 : index
      %48 = vector.load %arg10[%c0_34, %c0_35] : memref<32x16xbf16, #tpu.memory_space<vmem>>, vector<32x16xbf16>
      %49 = arith.truncf %47 : vector<16x16xf32> to vector<16x16xbf16>
      %cst_36 = arith.constant dense<0.000000e+00> : vector<32x16xf32>
      %50 = tpu.matmul %48, %49, %cst_36 {dimension_numbers = #tpu.dot_dimension_numbers<[1], [0], [0], [1], [0, 0, 1, 1], [], []>} : vector<32x16xbf16>, vector<16x16xbf16>, vector<32x16xf32> -> vector<32x16xf32>
      %51 = arith.truncf %50 : vector<32x16xf32> to vector<32x16xbf16>
      %c0_37 = arith.constant 0 : index
      %c0_38 = arith.constant 0 : index
      %52 = vector.load %arg19[%c0_37, %c0_38] : memref<32x16xbf16, #tpu.memory_space<vmem>>, vector<32x16xbf16>
      tpu.vector_store %arg19[%c0_37, %c0_38], %51 {strides = array<i32>} : memref<32x16xbf16, #tpu.memory_space<vmem>>, vector<32x16xbf16>,
      %cst_39 = arith.constant dense<0.000000e+00> : vector<32xf32>
      %53 = vector.multi_reduction <add>, %35, %cst_39 [1] : vector<32x256xf32> to vector<32xf32>
      %54 = vector.shape_cast %53 : vector<32xf32> to vector<32x1xf32>
      %cst_40 = arith.constant 2.560000e+02 : f32
      %55 = vector.broadcast %cst_40 : f32 to vector<32x1xf32>
      %56 = arith.divf %54, %55 : vector<32x1xf32>
      %cst_41 = arith.constant dense<0xFF800000> : vector<32xf32>
      %57 = vector.multi_reduction <maximumf>, %35, %cst_41 [1] : vector<32x256xf32> to vector<32xf32>
      %58 = vector.shape_cast %57 : vector<32xf32> to vector<32x1xf32>
      %59 = tpu.iota {dimensions = array<i32: 1>} : vector<32x2xi32>
      %c0_i32_42 = arith.constant 0 : i32
      %60 = vector.broadcast %c0_i32_42 : i32 to vector<32x2xi32>
      %61 = arith.cmpi eq, %59, %60 : vector<32x2xi32>
      %62 = vector.shape_cast %56 : vector<32x1xf32> to vector<32x1xf32>
      %63 = vector.broadcast %62 : vector<32x1xf32> to vector<32x2xf32>
      %64 = vector.shape_cast %58 : vector<32x1xf32> to vector<32x1xf32>
      %65 = vector.broadcast %64 : vector<32x1xf32> to vector<32x2xf32>
      %66 = arith.select %61, %63, %65 : vector<32x2xi1>, vector<32x2xf32>
      %c0_43 = arith.constant 0 : index
      %c0_44 = arith.constant 0 : index
      %67 = vector.load %arg12[%c0_43, %c0_44] : memref<2x32xf32, #tpu.memory_space<vmem>>, vector<2x32xf32>
      %cst_45 = arith.constant dense<0.000000e+00> : vector<2x2xf32>
      %68 = tpu.matmul %67, %66, %cst_45 {dimension_numbers = #tpu.dot_dimension_numbers<[1], [0], [0], [1], [0, 0, 1, 1], [], []>} : vector<2x32xf32>, vector<32x2xf32>, vector<2x2xf32> -> vector<2x2xf32>
      %c0_46 = arith.constant 0 : index
      %c0_47 = arith.constant 0 : index
      %69 = vector.load %arg13[%c0_46, %c0_47] : memref<2x1xf32, #tpu.memory_space<vmem>>, vector<2x1xf32>
      %70 = vector.broadcast %69 : vector<2x1xf32> to vector<2x2xf32>
      %71 = arith.addf %68, %70 : vector<2x2xf32>
      %cst_48 = arith.constant 0.000000e+00 : f32
      %72 = vector.broadcast %cst_48 : f32 to vector<2x2xf32>
      %73 = arith.maximumf %71, %72 : vector<2x2xf32>
      %c0_49 = arith.constant 0 : index
      %c0_50 = arith.constant 0 : index
      %74 = vector.load %arg14[%c0_49, %c0_50] : memref<32x2xf32, #tpu.memory_space<vmem>>, vector<32x2xf32>
      %cst_51 = arith.constant dense<0.000000e+00> : vector<32x2xf32>
      %75 = tpu.matmul %74, %73, %cst_51 {dimension_numbers = #tpu.dot_dimension_numbers<[1], [0], [0], [1], [0, 0, 1, 1], [], []>} : vector<32x2xf32>, vector<2x2xf32>, vector<32x2xf32> -> vector<32x2xf32>
      %c0_52 = arith.constant 0 : index
      %c0_53 = arith.constant 0 : index
      %76 = vector.load %arg15[%c0_52, %c0_53] : memref<32x1xf32, #tpu.memory_space<vmem>>, vector<32x1xf32>
      %77 = vector.broadcast %76 : vector<32x1xf32> to vector<32x2xf32>
      %78 = arith.addf %75, %77 : vector<32x2xf32>
      %cst_54 = arith.constant dense<0.000000e+00> : vector<32xf32>
      %79 = vector.multi_reduction <add>, %78, %cst_54 [1] : vector<32x2xf32> to vector<32xf32>
      %80 = vector.shape_cast %79 : vector<32xf32> to vector<32x1xf32>
      %81 = arith.negf %80 : vector<32x1xf32>
      %82 = math.exp %81 : vector<32x1xf32>
      %cst_55 = arith.constant 1.000000e+00 : f32
      %83 = vector.broadcast %cst_55 : f32 to vector<32x1xf32>
      %84 = arith.addf %83, %82 : vector<32x1xf32>
      %85 = arith.divf %83, %84 : vector<32x1xf32>
      %c0_56 = arith.constant 0 : index
      %c0_57 = arith.constant 0 : index
      %86 = vector.load %arg21[%c0_56, %c0_57] : memref<32x1xf32, #tpu.memory_space<vmem>>, vector<32x1xf32>
      tpu.vector_store %arg21[%c0_56, %c0_57], %85 {strides = array<i32>} : memref<32x1xf32, #tpu.memory_space<vmem>>, vector<32x1xf32>,
      %cst_58 = arith.constant 0.000000e+00 : f32
      %87 = vector.broadcast %cst_58 : f32 to vector<16x16xf32>
      %c0_59 = arith.constant 0 : index
      %c0_60 = arith.constant 0 : index
      %88 = vector.load %arg20[%c0_59, %c0_60] : memref<16x16xf32, #tpu.memory_space<vmem>>, vector<16x16xf32>
      tpu.vector_store %arg20[%c0_59, %c0_60], %87 {strides = array<i32>} : memref<16x16xf32, #tpu.memory_space<vmem>>, vector<16x16xf32>,
    } else {
    }
    %c0 = arith.constant 0 : index
    %c0_1 = arith.constant 0 : index
    %c0_2 = arith.constant 0 : index
    %3 = vector.load %arg2[%c0, %c0_1, %c0_2] : memref<1x32x512xf32, #tpu.memory_space<vmem>>, vector<1x32x512xf32>
    %4 = vector.shape_cast %3 : vector<1x32x512xf32> to vector<32x512xf32>
    %c0_3 = arith.constant 0 : index
    %c0_4 = arith.constant 0 : index
    %5 = vector.load %arg4[%c0_3, %c0_4] : memref<32x32xbf16, #tpu.memory_space<vmem>>, vector<32x32xbf16>
    %6 = arith.truncf %4 : vector<32x512xf32> to vector<32x512xbf16>
    %cst = arith.constant dense<0.000000e+00> : vector<32x512xf32>
    %7 = tpu.matmul %5, %6, %cst {dimension_numbers = #tpu.dot_dimension_numbers<[1], [0], [0], [1], [0, 0, 1, 1], [], []>} : vector<32x32xbf16>, vector<32x512xbf16>, vector<32x512xf32> -> vector<32x512xf32>
    %c0_5 = arith.constant 0 : index
    %c0_6 = arith.constant 0 : index
    %8 = vector.load %arg5[%c0_5, %c0_6] : memref<32x1xf32, #tpu.memory_space<vmem>>, vector<32x1xf32>
    %9 = vector.broadcast %8 : vector<32x1xf32> to vector<32x512xf32>
    %10 = arith.addf %7, %9 : vector<32x512xf32>
    %11 = vector.extract_strided_slice %10 {offsets = [0, 0], sizes = [16, 512], strides = [1, 1]} : vector<32x512xf32> to vector<16x512xf32>
    %12 = arith.truncf %11 : vector<16x512xf32> to vector<16x512xbf16>
    %13 = vector.extract_strided_slice %10 {offsets = [16, 0], sizes = [16, 512], strides = [1, 1]} : vector<32x512xf32> to vector<16x512xf32>
    %14 = arith.truncf %13 : vector<16x512xf32> to vector<16x512xbf16>
    %c0_7 = arith.constant 0 : index
    %c0_8 = arith.constant 0 : index
    %15 = vector.load %arg19[%c0_7, %c0_8] : memref<32x16xbf16, #tpu.memory_space<vmem>>, vector<32x16xbf16>
    %cst_9 = arith.constant dense<0.000000e+00> : vector<32x512xf32>
    %16 = tpu.matmul %15, %14, %cst_9 {dimension_numbers = #tpu.dot_dimension_numbers<[1], [0], [0], [1], [0, 0, 1, 1], [], []>} : vector<32x16xbf16>, vector<16x512xbf16>, vector<32x512xf32> -> vector<32x512xf32>
    %c0_10 = arith.constant 0 : index
    %c0_11 = arith.constant 0 : index
    %17 = vector.load %arg11[%c0_10, %c0_11] : memref<32x1xf32, #tpu.memory_space<vmem>>, vector<32x1xf32>
    %18 = vector.broadcast %17 : vector<32x1xf32> to vector<32x512xf32>
    %19 = arith.addf %16, %18 : vector<32x512xf32>
    %20 = arith.addf %19, %4 : vector<32x512xf32>
    %c0_12 = arith.constant 0 : index
    %c0_13 = arith.constant 0 : index
    %21 = vector.load %arg21[%c0_12, %c0_13] : memref<32x1xf32, #tpu.memory_space<vmem>>, vector<32x1xf32>
    %22 = vector.broadcast %21 : vector<32x1xf32> to vector<32x512xf32>
    %23 = arith.mulf %20, %22 : vector<32x512xf32>
    %c0_14 = arith.constant 0 : index
    %c0_15 = arith.constant 0 : index
    %c0_16 = arith.constant 0 : index
    %24 = vector.load %arg16[%c0_14, %c0_15, %c0_16] : memref<1x32x512xf32, #tpu.memory_space<vmem>>, vector<1x32x512xf32>
    %25 = vector.shape_cast %24 : vector<1x32x512xf32> to vector<32x512xf32>
    %26 = vector.shape_cast %23 : vector<32x512xf32> to vector<1x32x512xf32>
    tpu.vector_store %arg16[%c0_14, %c0_15, %c0_16], %26 {strides = array<i32>} : memref<1x32x512xf32, #tpu.memory_space<vmem>>, vector<1x32x512xf32>,
    %c0_17 = arith.constant 0 : index
    %c0_18 = arith.constant 0 : index
    %27 = vector.load %arg20[%c0_17, %c0_18] : memref<16x16xf32, #tpu.memory_space<vmem>>, vector<16x16xf32>
    %cst_19 = arith.constant dense<0.000000e+00> : vector<16x16xf32>
    %28 = tpu.matmul %12, %14, %cst_19 {dimension_numbers = #tpu.dot_dimension_numbers<[1], [1], [0], [0], [0, 0, 1, 0], [], []>} : vector<16x512xbf16>, vector<16x512xbf16>, vector<16x16xf32> -> vector<16x16xf32>
    %29 = arith.addf %27, %28 : vector<16x16xf32>
    %c0_20 = arith.constant 0 : index
    %c0_21 = arith.constant 0 : index
    %30 = vector.load %arg20[%c0_20, %c0_21] : memref<16x16xf32, #tpu.memory_space<vmem>>, vector<16x16xf32>
    tpu.vector_store %arg20[%c0_20, %c0_21], %29 {strides = array<i32>} : memref<16x16xf32, #tpu.memory_space<vmem>>, vector<16x16xf32>,
    %c1_i32 = arith.constant 1 : i32
    %31 = arith.cmpi eq, %arg1, %c1_i32 : i32
    %32 = arith.extui %31 : i1 to i32
    %c0_i32_22 = arith.constant 0 : i32
    %33 = arith.cmpi ne, %32, %c0_i32_22 : i32
    scf.if %33 {
      %c0_23 = arith.constant 0 : index
      %c0_24 = arith.constant 0 : index
      %34 = vector.load %arg8[%c0_23, %c0_24] : memref<32x16xbf16, #tpu.memory_space<vmem>>, vector<32x16xbf16>
      %c0_25 = arith.constant 0 : index
      %c0_26 = arith.constant 0 : index
      %35 = vector.load %arg20[%c0_25, %c0_26] : memref<16x16xf32, #tpu.memory_space<vmem>>, vector<16x16xf32>
      %36 = arith.truncf %35 : vector<16x16xf32> to vector<16x16xbf16>
      %cst_27 = arith.constant dense<0.000000e+00> : vector<32x16xf32>
      %37 = tpu.matmul %34, %36, %cst_27 {dimension_numbers = #tpu.dot_dimension_numbers<[1], [0], [0], [1], [0, 0, 1, 1], [], []>} : vector<32x16xbf16>, vector<16x16xbf16>, vector<32x16xf32> -> vector<32x16xf32>
      %38 = arith.truncf %37 : vector<32x16xf32> to vector<32x16xbf16>
      %c0_28 = arith.constant 0 : index
      %c0_29 = arith.constant 0 : index
      %39 = vector.load %arg18[%c0_28, %c0_29] : memref<16x256xbf16, #tpu.memory_space<vmem>>, vector<16x256xbf16>
      %cst_30 = arith.constant dense<0.000000e+00> : vector<32x256xf32>
      %40 = tpu.matmul %38, %39, %cst_30 {dimension_numbers = #tpu.dot_dimension_numbers<[1], [0], [0], [1], [0, 0, 1, 1], [], []>} : vector<32x16xbf16>, vector<16x256xbf16>, vector<32x256xf32> -> vector<32x256xf32>
      %c0_31 = arith.constant 0 : index
      %c0_32 = arith.constant 0 : index
      %41 = vector.load %arg9[%c0_31, %c0_32] : memref<32x1xf32, #tpu.memory_space<vmem>>, vector<32x1xf32>
      %42 = vector.broadcast %41 : vector<32x1xf32> to vector<32x256xf32>
      %43 = arith.addf %40, %42 : vector<32x256xf32>
      %c0_33 = arith.constant 0 : index
      %c0_34 = arith.constant 0 : index
      %c0_35 = arith.constant 0 : index
      %44 = vector.load %arg3[%c0_33, %c0_34, %c0_35] : memref<1x32x256xf32, #tpu.memory_space<vmem>>, vector<1x32x256xf32>
      %45 = vector.shape_cast %44 : vector<1x32x256xf32> to vector<32x256xf32>
      %46 = arith.addf %43, %45 : vector<32x256xf32>
      %c0_36 = arith.constant 0 : index
      %c0_37 = arith.constant 0 : index
      %47 = vector.load %arg21[%c0_36, %c0_37] : memref<32x1xf32, #tpu.memory_space<vmem>>, vector<32x1xf32>
      %48 = vector.broadcast %47 : vector<32x1xf32> to vector<32x256xf32>
      %49 = arith.mulf %46, %48 : vector<32x256xf32>
      %c0_38 = arith.constant 0 : index
      %c0_39 = arith.constant 0 : index
      %c0_40 = arith.constant 0 : index
      %50 = vector.load %arg17[%c0_38, %c0_39, %c0_40] : memref<1x32x256xf32, #tpu.memory_space<vmem>>, vector<1x32x256xf32>
      %51 = vector.shape_cast %50 : vector<1x32x256xf32> to vector<32x256xf32>
      %52 = vector.shape_cast %49 : vector<32x256xf32> to vector<1x32x256xf32>
      tpu.vector_store %arg17[%c0_38, %c0_39, %c0_40], %52 {strides = array<i32>} : memref<1x32x256xf32, #tpu.memory_space<vmem>>, vector<1x32x256xf32>,
    } else {
    }
    return
  }
  func.func @transform_0(%arg0: i32, %arg1: i32) -> (i32, i32, i32) {
    %c0_i32 = arith.constant 0 : i32
    %c0_i32_0 = arith.constant 0 : i32
    return %arg0, %c0_i32, %arg1 : i32, i32, i32
  }
  func.func @transform_1(%arg0: i32, %arg1: i32) -> (i32, i32, i32) {
    %c0_i32 = arith.constant 0 : i32
    %c0_i32_0 = arith.constant 0 : i32
    %c0_i32_1 = arith.constant 0 : i32
    return %arg0, %c0_i32, %c0_i32_0 : i32, i32, i32
  }
  func.func @transform_2(%arg0: i32, %arg1: i32) -> (i32, i32) {
    %c0_i32 = arith.constant 0 : i32
    %c0_i32_0 = arith.constant 0 : i32
    %c0_i32_1 = arith.constant 0 : i32
    return %c0_i32, %c0_i32_0 : i32, i32
  }
  func.func @transform_3(%arg0: i32, %arg1: i32) -> (i32, i32) {
    %c0_i32 = arith.constant 0 : i32
    %c0_i32_0 = arith.constant 0 : i32
    %c0_i32_1 = arith.constant 0 : i32
    return %c0_i32, %c0_i32_0 : i32, i32
  }
  func.func @transform_4(%arg0: i32, %arg1: i32) -> (i32, i32) {
    %c0_i32 = arith.constant 0 : i32
    %c0_i32_0 = arith.constant 0 : i32
    %c0_i32_1 = arith.constant 0 : i32
    return %c0_i32, %c0_i32_0 : i32, i32
  }
  func.func @transform_5(%arg0: i32, %arg1: i32) -> (i32, i32) {
    %c0_i32 = arith.constant 0 : i32
    %c0_i32_0 = arith.constant 0 : i32
    %c0_i32_1 = arith.constant 0 : i32
    return %c0_i32, %c0_i32_0 : i32, i32
  }
  func.func @transform_6(%arg0: i32, %arg1: i32) -> (i32, i32) {
    %c0_i32 = arith.constant 0 : i32
    %c0_i32_0 = arith.constant 0 : i32
    %c0_i32_1 = arith.constant 0 : i32
    return %c0_i32, %c0_i32_0 : i32, i32
  }
  func.func @transform_7(%arg0: i32, %arg1: i32) -> (i32, i32) {
    %c0_i32 = arith.constant 0 : i32
    %c0_i32_0 = arith.constant 0 : i32
    %c0_i32_1 = arith.constant 0 : i32
    return %c0_i32, %c0_i32_0 : i32, i32
  }
  func.func @transform_8(%arg0: i32, %arg1: i32) -> (i32, i32) {
    %c0_i32 = arith.constant 0 : i32
    %c0_i32_0 = arith.constant 0 : i32
    %c0_i32_1 = arith.constant 0 : i32
    return %c0_i32, %c0_i32_0 : i32, i32
  }
  func.func @transform_9(%arg0: i32, %arg1: i32) -> (i32, i32) {
    %c0_i32 = arith.constant 0 : i32
    %c0_i32_0 = arith.constant 0 : i32
    %c0_i32_1 = arith.constant 0 : i32
    return %c0_i32, %c0_i32_0 : i32, i32
  }
  func.func @transform_10(%arg0: i32, %arg1: i32) -> (i32, i32) {
    %c0_i32 = arith.constant 0 : i32
    %c0_i32_0 = arith.constant 0 : i32
    %c0_i32_1 = arith.constant 0 : i32
    return %c0_i32, %c0_i32_0 : i32, i32
  }
  func.func @transform_11(%arg0: i32, %arg1: i32) -> (i32, i32) {
    %c0_i32 = arith.constant 0 : i32
    %c0_i32_0 = arith.constant 0 : i32
    %c0_i32_1 = arith.constant 0 : i32
    return %c0_i32, %c0_i32_0 : i32, i32
  }
  func.func @transform_12(%arg0: i32, %arg1: i32) -> (i32, i32) {
    %c0_i32 = arith.constant 0 : i32
    %c0_i32_0 = arith.constant 0 : i32
    %c0_i32_1 = arith.constant 0 : i32
    return %c0_i32, %c0_i32_0 : i32, i32
  }
  func.func @transform_13(%arg0: i32, %arg1: i32) -> (i32, i32) {
    %c0_i32 = arith.constant 0 : i32
    %c0_i32_0 = arith.constant 0 : i32
    %c0_i32_1 = arith.constant 0 : i32
    return %c0_i32, %c0_i32_0 : i32, i32
  }
  func.func @transform_14(%arg0: i32, %arg1: i32) -> (i32, i32, i32) {
    %c0_i32 = arith.constant 0 : i32
    %c0_i32_0 = arith.constant 0 : i32
    return %arg0, %c0_i32, %arg1 : i32, i32, i32
  }
  func.func @transform_15(%arg0: i32, %arg1: i32) -> (i32, i32, i32) {
    %c0_i32 = arith.constant 0 : i32
    %c0_i32_0 = arith.constant 0 : i32
    %c0_i32_1 = arith.constant 0 : i32
    return %arg0, %c0_i32, %c0_i32_0 : i32, i32, i32
  }
}

</mosaic_0001>

<llo_original>
// kernel: tpu_custom_call.1
$region0: #{tpu_custom_call.1}
  #allocation0 [shape = 'u32[]', space=smem, size = 0x4, offset = 0x4, fixed_abs, tag = 'smem constant byte address 0x4 - core index']
  #allocation1 [shape = 'u32[72,128]{1,0:T(1,128)}', space=vmem, size = 0x9000, scoped, tag = 'internal scratch']
  #allocation2 [shape = 'bf16[16,256]{1,0:T(8,128)(2,1)}', space=vmem, size = 0x2000, scoped, tag = 'scratch operand']
  #allocation3 [shape = 'bf16[32,16]{1,0:T(8,128)(2,1)}', space=vmem, size = 0x2000, scoped, tag = 'scratch operand']
  #allocation4 [shape = 'f32[16,16]{1,0:T(8,128)}', space=vmem, size = 0x2000, scoped, tag = 'scratch operand']
  #allocation5 [shape = 'f32[32,1]{1,0:T(8,128)}', space=vmem, size = 0x4000, scoped, tag = 'scratch operand']
  %s0 = inlined_call_operand.hbm [shape: f32[2,32,1024], index: 0, kind: input, shape index: {}]
  %s1 = inlined_call_operand.vmem [shape: f32[2,32,256], index: 1, kind: input, shape index: {}]
  %s2 = inlined_call_operand.vmem [shape: bf16[32,32], index: 2, kind: input, shape index: {}]
  %s3 = inlined_call_operand.vmem [shape: f32[32,1], index: 3, kind: input, shape index: {}]
  %s4 = inlined_call_operand.vmem [shape: bf16[32,32], index: 4, kind: input, shape index: {}]
  %s5 = inlined_call_operand.vmem [shape: f32[32,1], index: 5, kind: input, shape index: {}]
  %s6 = inlined_call_operand.vmem [shape: bf16[32,16], index: 6, kind: input, shape index: {}]
  %s7 = inlined_call_operand.vmem [shape: f32[32,1], index: 7, kind: input, shape index: {}]
  %s8 = inlined_call_operand.vmem [shape: bf16[32,16], index: 8, kind: input, shape index: {}]
  %s9 = inlined_call_operand.vmem [shape: f32[32,1], index: 9, kind: input, shape index: {}]
  %s10 = inlined_call_operand.vmem [shape: f32[2,32], index: 10, kind: input, shape index: {}]
  %s11 = inlined_call_operand.vmem [shape: f32[2,1], index: 11, kind: input, shape index: {}]
  %s12 = inlined_call_operand.vmem [shape: f32[32,2], index: 12, kind: input, shape index: {}]
  %s13 = inlined_call_operand.vmem [shape: f32[32,1], index: 13, kind: input, shape index: {}]
  %s14 = inlined_call_operand.hbm [shape: f32[2,32,1024], index: 14, kind: output, shape index: {0}]
  %s15 = inlined_call_operand.hbm [shape: f32[2,32,256], index: 15, kind: output, shape index: {1}]
  %16 = xla_tuple %s14, %s15
  %s17 = sld [smem:[#allocation0]]
  $region109: #{tpu_custom_call.1} parent=0
    _
  %s19 = ssub.s32 1, %s17
  %s20 = scalar_select 0, %s19, %s17
  $region1: #{tpu_custom_call.1} parent=0
    #allocation6 [shape = 'u8[131072]{0}', space=vmem, size = 0x20000, scoped, tag = 'input window, operand 0']
    #allocation7 [shape = 's32[2]{0}', space=sflag, size = 0x8, scoped, tag = 'scoped memory for tpu_custom_call.1']
    #allocation8 [shape = 's32[2]{0}', space=sflag, size = 0x8, scoped, tag = 'scoped memory for tpu_custom_call.1']
    #allocation9 [shape = 'u8[131072]{0}', space=vmem, size = 0x20000, scoped, tag = 'output window, operand 0']
    #allocation10 [shape = 'u8[32768]{0}', space=vmem, size = 0x8000, scoped, tag = 'output window, operand 1, single buffered']
    #allocation11 [shape = 's32[1]{0}', space=sflag, size = 0x4, scoped, tag = 'scoped memory for tpu_custom_call.1']
    %21 = vsyncpa [#allocation7], 0
    %s22 = scalar_lea.sflag [#allocation7], 1
    %23 = vsyncpa %s22, 0
    %24 = vsyncpa [#allocation8], 0
    %s25 = scalar_lea.sflag [#allocation8], 1
    %26 = vsyncpa %s25, 0
    %27 = vsyncpa [#allocation11], 0
    loop: start=0, step=1, limit=6
    $region2: #{tpu_custom_call.1} parent=1 // loop_pre_header
      _
    $region3: #{tpu_custom_call.1} parent=1 // loop_header
      %s29 = sphi 0, %s33
      %p30 = scmp.ge.s32.totalorder %s29, 6
      %s36 = sphi 0, %s48
      %s37 = sphi 0, %s44
      %s38 = sphi 0, %s36
      %s39 = sphi 0, %s37
      %s40 = sphi 0, %s38
      %s41 = sphi 0, %s39
      %s53 = sphi 0, %s55
      %s56 = sphi 0, %s53
      %s57 = sphi 0, %s56
      %s73 = sphi 0, %s57
      %s79 = sphi 0, %s81
      %s82 = sphi 0, %s79
      %s83 = sphi 0, %s82
      %s99 = sphi 0, %s83
      %s103 = sphi 0, %s103
      %s105 = sphi 0, %s103
      %s106 = sphi 0, %s105
      %s120 = sphi 0, %s106
      %s124 = sphi 0, %s124
      %s126 = sphi 0, %s124
      %s127 = sphi 0, %s126
      %s141 = sphi 0, %s127
      %s145 = sphi 0, %s145
      %s147 = sphi 0, %s145
      %s148 = sphi 0, %s147
      %s162 = sphi 0, %s148
      %s166 = sphi 0, %s166
      %s168 = sphi 0, %s166
      %s169 = sphi 0, %s168
      %s183 = sphi 0, %s169
      %s187 = sphi 0, %s187
      %s189 = sphi 0, %s187
      %s190 = sphi 0, %s189
      %s204 = sphi 0, %s190
      %s208 = sphi 0, %s208
      %s210 = sphi 0, %s208
      %s211 = sphi 0, %s210
      %s225 = sphi 0, %s211
      %s229 = sphi 0, %s229
      %s231 = sphi 0, %s229
      %s232 = sphi 0, %s231
      %s246 = sphi 0, %s232
      %s250 = sphi 0, %s250
      %s252 = sphi 0, %s250
      %s253 = sphi 0, %s252
      %s267 = sphi 0, %s253
      %s271 = sphi 0, %s271
      %s273 = sphi 0, %s271
      %s274 = sphi 0, %s273
      %s288 = sphi 0, %s274
      %s292 = sphi 0, %s292
      %s294 = sphi 0, %s292
      %s295 = sphi 0, %s294
      %s309 = sphi 0, %s295
      %s313 = sphi 0, %s313
      %s315 = sphi 0, %s313
      %s316 = sphi 0, %s315
      %s330 = sphi 0, %s316
      %s334 = sphi 0, %s334
      %s336 = sphi 0, %s334
      %s337 = sphi 0, %s336
      %s351 = sphi 0, %s337
      %s359 = sphi 0, %s361
      %s362 = sphi 0, %s359
      %s363 = sphi 0, %s362
      %s379 = sphi 0, %s363
      %s385 = sphi 0, %s387
      %s388 = sphi 0, %s385
      %s389 = sphi 0, %s388
      %s405 = sphi 0, %s389
    $region4: #{tpu_custom_call.1} parent=1 // loop_header_branch
      %32 = sbr.rel (%p30) target = $region8
    $region5: #{tpu_custom_call.1} parent=1 // loop_body
      %s34 = ssub.s32 %s29, 1
      %s35 = ssub.s32 %s29, 2
      %s42 = sadd.s32 1, %s37
      %p43 = scmp.ge.s32.totalorder %s42, 2
      %s44 = scalar_select %p43, 0, %s42
      %s45 = sadd.s32 1, %s36
      %s46 = scalar_select %p43, %s45, %s36
      %p47 = scmp.ge.s32.totalorder %s46, 2
      %s48 = scalar_select %p47, 0, %s46
      %s49 = ssub.s32 %s36, %s48
      %s50 = ssub.s32 %s37, %s44
      %s51 = sor.u32 %s49, %s50
      %p52 = scmp.eq.s32.totalorder %s51, 0
      %s54 = sadd.s32 %s53, 1
      %s55 = scalar_select %p52, %s53, %s54
      %p58 = pneg %p52
      %p59 = scmp.eq.s32.totalorder %s29, 3
      %p60 = por %p58, %p59
      %p61 = scmp.ne.s32.totalorder %s53, %s56
      %p62 = scmp.eq.s32.totalorder %s29, 0
      %p63 = por %p61, %p62
      %p64 = scmp.ne.s32.totalorder %s53, %s56
      %p65 = scmp.eq.s32.totalorder %s34, 3
      %p66 = por %p64, %p65
      %p67 = scmp.ne.s32.totalorder %s56, %s57
      %p68 = scmp.eq.s32.totalorder %s34, 0
      %p69 = por %p67, %p68
      %p70 = scmp.ne.s32.totalorder %s56, %s57
      %p71 = scmp.eq.s32.totalorder %s35, 3
      %p72 = por %p70, %p71
      %p74 = scmp.ne.s32.totalorder %s57, %s73
      %p75 = scmp.eq.s32.totalorder %s35, 0
      %p76 = por %p74, %p75
      %s77 = ssub.s32 %s36, %s48
      %p78 = scmp.eq.s32.totalorder %s77, 0
      %s80 = sadd.s32 %s79, 1
      %s81 = scalar_select %p78, %s79, %s80
      %p84 = pneg %p78
      %p85 = scmp.eq.s32.totalorder %s29, 3
      %p86 = por %p84, %p85
      %p87 = scmp.ne.s32.totalorder %s79, %s82
      %p88 = scmp.eq.s32.totalorder %s29, 0
      %p89 = por %p87, %p88
      %p90 = scmp.ne.s32.totalorder %s79, %s82
      %p91 = scmp.eq.s32.totalorder %s34, 3
      %p92 = por %p90, %p91
      %p93 = scmp.ne.s32.totalorder %s82, %s83
      %p94 = scmp.eq.s32.totalorder %s34, 0
      %p95 = por %p93, %p94
      %p96 = scmp.ne.s32.totalorder %s82, %s83
      %p97 = scmp.eq.s32.totalorder %s35, 3
      %p98 = por %p96, %p97
      %p100 = scmp.ne.s32.totalorder %s83, %s99
      %p101 = scmp.eq.s32.totalorder %s35, 0
      %p102 = por %p100, %p101
      %s104 = sadd.s32 %s103, 1
      %p107 = scmp.eq.s32.totalorder %s29, 3
      %p108 = scmp.ne.s32.totalorder %s103, %s105
      %p109 = scmp.eq.s32.totalorder %s29, 0
      %p110 = por %p108, %p109
      %p111 = scmp.ne.s32.totalorder %s103, %s105
      %p112 = scmp.eq.s32.totalorder %s34, 3
      %p113 = por %p111, %p112
      %p114 = scmp.ne.s32.totalorder %s105, %s106
      %p115 = scmp.eq.s32.totalorder %s34, 0
      %p116 = por %p114, %p115
      %p117 = scmp.ne.s32.totalorder %s105, %s106
      %p118 = scmp.eq.s32.totalorder %s35, 3
      %p119 = por %p117, %p118
      %p121 = scmp.ne.s32.totalorder %s106, %s120
      %p122 = scmp.eq.s32.totalorder %s35, 0
      %p123 = por %p121, %p122
      %s125 = sadd.s32 %s124, 1
      %p128 = scmp.eq.s32.totalorder %s29, 3
      %p129 = scmp.ne.s32.totalorder %s124, %s126
      %p130 = scmp.eq.s32.totalorder %s29, 0
      %p131 = por %p129, %p130
      %p132 = scmp.ne.s32.totalorder %s124, %s126
      %p133 = scmp.eq.s32.totalorder %s34, 3
      %p134 = por %p132, %p133
      %p135 = scmp.ne.s32.totalorder %s126, %s127
      %p136 = scmp.eq.s32.totalorder %s34, 0
      %p137 = por %p135, %p136
      %p138 = scmp.ne.s32.totalorder %s126, %s127
      %p139 = scmp.eq.s32.totalorder %s35, 3
      %p140 = por %p138, %p139
      %p142 = scmp.ne.s32.totalorder %s127, %s141
      %p143 = scmp.eq.s32.totalorder %s35, 0
      %p144 = por %p142, %p143
      %s146 = sadd.s32 %s145, 1
      %p149 = scmp.eq.s32.totalorder %s29, 3
      %p150 = scmp.ne.s32.totalorder %s145, %s147
      %p151 = scmp.eq.s32.totalorder %s29, 0
      %p152 = por %p150, %p151
      %p153 = scmp.ne.s32.totalorder %s145, %s147
      %p154 = scmp.eq.s32.totalorder %s34, 3
      %p155 = por %p153, %p154
      %p156 = scmp.ne.s32.totalorder %s147, %s148
      %p157 = scmp.eq.s32.totalorder %s34, 0
      %p158 = por %p156, %p157
      %p159 = scmp.ne.s32.totalorder %s147, %s148
      %p160 = scmp.eq.s32.totalorder %s35, 3
      %p161 = por %p159, %p160
      %p163 = scmp.ne.s32.totalorder %s148, %s162
      %p164 = scmp.eq.s32.totalorder %s35, 0
      %p165 = por %p163, %p164
      %s167 = sadd.s32 %s166, 1
      %p170 = scmp.eq.s32.totalorder %s29, 3
      %p171 = scmp.ne.s32.totalorder %s166, %s168
      %p172 = scmp.eq.s32.totalorder %s29, 0
      %p173 = por %p171, %p172
      %p174 = scmp.ne.s32.totalorder %s166, %s168
      %p175 = scmp.eq.s32.totalorder %s34, 3
      %p176 = por %p174, %p175
      %p177 = scmp.ne.s32.totalorder %s168, %s169
      %p178 = scmp.eq.s32.totalorder %s34, 0
      %p179 = por %p177, %p178
      %p180 = scmp.ne.s32.totalorder %s168, %s169
      %p181 = scmp.eq.s32.totalorder %s35, 3
      %p182 = por %p180, %p181
      %p184 = scmp.ne.s32.totalorder %s169, %s183
      %p185 = scmp.eq.s32.totalorder %s35, 0
      %p186 = por %p184, %p185
      %s188 = sadd.s32 %s187, 1
      %p191 = scmp.eq.s32.totalorder %s29, 3
      %p192 = scmp.ne.s32.totalorder %s187, %s189
      %p193 = scmp.eq.s32.totalorder %s29, 0
      %p194 = por %p192, %p193
      %p195 = scmp.ne.s32.totalorder %s187, %s189
      %p196 = scmp.eq.s32.totalorder %s34, 3
      %p197 = por %p195, %p196
      %p198 = scmp.ne.s32.totalorder %s189, %s190
      %p199 = scmp.eq.s32.totalorder %s34, 0
      %p200 = por %p198, %p199
      %p201 = scmp.ne.s32.totalorder %s189, %s190
      %p202 = scmp.eq.s32.totalorder %s35, 3
      %p203 = por %p201, %p202
      %p205 = scmp.ne.s32.totalorder %s190, %s204
      %p206 = scmp.eq.s32.totalorder %s35, 0
      %p207 = por %p205, %p206
      %s209 = sadd.s32 %s208, 1
      %p212 = scmp.eq.s32.totalorder %s29, 3
      %p213 = scmp.ne.s32.totalorder %s208, %s210
      %p214 = scmp.eq.s32.totalorder %s29, 0
      %p215 = por %p213, %p214
      %p216 = scmp.ne.s32.totalorder %s208, %s210
      %p217 = scmp.eq.s32.totalorder %s34, 3
      %p218 = por %p216, %p217
      %p219 = scmp.ne.s32.totalorder %s210, %s211
      %p220 = scmp.eq.s32.totalorder %s34, 0
      %p221 = por %p219, %p220
      %p222 = scmp.ne.s32.totalorder %s210, %s211
      %p223 = scmp.eq.s32.totalorder %s35, 3
      %p224 = por %p222, %p223
      %p226 = scmp.ne.s32.totalorder %s211, %s225
      %p227 = scmp.eq.s32.totalorder %s35, 0
      %p228 = por %p226, %p227
      %s230 = sadd.s32 %s229, 1
      %p233 = scmp.eq.s32.totalorder %s29, 3
      %p234 = scmp.ne.s32.totalorder %s229, %s231
      %p235 = scmp.eq.s32.totalorder %s29, 0
      %p236 = por %p234, %p235
      %p237 = scmp.ne.s32.totalorder %s229, %s231
      %p238 = scmp.eq.s32.totalorder %s34, 3
      %p239 = por %p237, %p238
      %p240 = scmp.ne.s32.totalorder %s231, %s232
      %p241 = scmp.eq.s32.totalorder %s34, 0
      %p242 = por %p240, %p241
      %p243 = scmp.ne.s32.totalorder %s231, %s232
      %p244 = scmp.eq.s32.totalorder %s35, 3
      %p245 = por %p243, %p244
      %p247 = scmp.ne.s32.totalorder %s232, %s246
      %p248 = scmp.eq.s32.totalorder %s35, 0
      %p249 = por %p247, %p248
      %s251 = sadd.s32 %s250, 1
      %p254 = scmp.eq.s32.totalorder %s29, 3
      %p255 = scmp.ne.s32.totalorder %s250, %s252
      %p256 = scmp.eq.s32.totalorder %s29, 0
      %p257 = por %p255, %p256
      %p258 = scmp.ne.s32.totalorder %s250, %s252
      %p259 = scmp.eq.s32.totalorder %s34, 3
      %p260 = por %p258, %p259
      %p261 = scmp.ne.s32.totalorder %s252, %s253
      %p262 = scmp.eq.s32.totalorder %s34, 0
      %p263 = por %p261, %p262
      %p264 = scmp.ne.s32.totalorder %s252, %s253
      %p265 = scmp.eq.s32.totalorder %s35, 3
      %p266 = por %p264, %p265
      %p268 = scmp.ne.s32.totalorder %s253, %s267
      %p269 = scmp.eq.s32.totalorder %s35, 0
      %p270 = por %p268, %p269
      %s272 = sadd.s32 %s271, 1
      %p275 = scmp.eq.s32.totalorder %s29, 3
      %p276 = scmp.ne.s32.totalorder %s271, %s273
      %p277 = scmp.eq.s32.totalorder %s29, 0
      %p278 = por %p276, %p277
      %p279 = scmp.ne.s32.totalorder %s271, %s273
      %p280 = scmp.eq.s32.totalorder %s34, 3
      %p281 = por %p279, %p280
      %p282 = scmp.ne.s32.totalorder %s273, %s274
      %p283 = scmp.eq.s32.totalorder %s34, 0
      %p284 = por %p282, %p283
      %p285 = scmp.ne.s32.totalorder %s273, %s274
      %p286 = scmp.eq.s32.totalorder %s35, 3
      %p287 = por %p285, %p286
      %p289 = scmp.ne.s32.totalorder %s274, %s288
      %p290 = scmp.eq.s32.totalorder %s35, 0
      %p291 = por %p289, %p290
      %s293 = sadd.s32 %s292, 1
      %p296 = scmp.eq.s32.totalorder %s29, 3
      %p297 = scmp.ne.s32.totalorder %s292, %s294
      %p298 = scmp.eq.s32.totalorder %s29, 0
      %p299 = por %p297, %p298
      %p300 = scmp.ne.s32.totalorder %s292, %s294
      %p301 = scmp.eq.s32.totalorder %s34, 3
      %p302 = por %p300, %p301
      %p303 = scmp.ne.s32.totalorder %s294, %s295
      %p304 = scmp.eq.s32.totalorder %s34, 0
      %p305 = por %p303, %p304
      %p306 = scmp.ne.s32.totalorder %s294, %s295
      %p307 = scmp.eq.s32.totalorder %s35, 3
      %p308 = por %p306, %p307
      %p310 = scmp.ne.s32.totalorder %s295, %s309
      %p311 = scmp.eq.s32.totalorder %s35, 0
      %p312 = por %p310, %p311
      %s314 = sadd.s32 %s313, 1
      %p317 = scmp.eq.s32.totalorder %s29, 3
      %p318 = scmp.ne.s32.totalorder %s313, %s315
      %p319 = scmp.eq.s32.totalorder %s29, 0
      %p320 = por %p318, %p319
      %p321 = scmp.ne.s32.totalorder %s313, %s315
      %p322 = scmp.eq.s32.totalorder %s34, 3
      %p323 = por %p321, %p322
      %p324 = scmp.ne.s32.totalorder %s315, %s316
      %p325 = scmp.eq.s32.totalorder %s34, 0
      %p326 = por %p324, %p325
      %p327 = scmp.ne.s32.totalorder %s315, %s316
      %p328 = scmp.eq.s32.totalorder %s35, 3
      %p329 = por %p327, %p328
      %p331 = scmp.ne.s32.totalorder %s316, %s330
      %p332 = scmp.eq.s32.totalorder %s35, 0
      %p333 = por %p331, %p332
      %s335 = sadd.s32 %s334, 1
      %p338 = scmp.eq.s32.totalorder %s29, 3
      %p339 = scmp.ne.s32.totalorder %s334, %s336
      %p340 = scmp.eq.s32.totalorder %s29, 0
      %p341 = por %p339, %p340
      %p342 = scmp.ne.s32.totalorder %s334, %s336
      %p343 = scmp.eq.s32.totalorder %s34, 3
      %p344 = por %p342, %p343
      %p345 = scmp.ne.s32.totalorder %s336, %s337
      %p346 = scmp.eq.s32.totalorder %s34, 0
      %p347 = por %p345, %p346
      %p348 = scmp.ne.s32.totalorder %s336, %s337
      %p349 = scmp.eq.s32.totalorder %s35, 3
      %p350 = por %p348, %p349
      %p352 = scmp.ne.s32.totalorder %s337, %s351
      %p353 = scmp.eq.s32.totalorder %s35, 0
      %p354 = por %p352, %p353
      %s355 = ssub.s32 %s36, %s48
      %s356 = ssub.s32 %s37, %s44
      %s357 = sor.u32 %s355, %s356
      %p358 = scmp.eq.s32.totalorder %s357, 0
      %s360 = sadd.s32 %s359, 1
      %s361 = scalar_select %p358, %s359, %s360
      %p364 = pneg %p358
      %p365 = scmp.eq.s32.totalorder %s29, 3
      %p366 = por %p364, %p365
      %p367 = scmp.ne.s32.totalorder %s359, %s362
      %p368 = scmp.eq.s32.totalorder %s29, 0
      %p369 = por %p367, %p368
      %p370 = scmp.ne.s32.totalorder %s359, %s362
      %p371 = scmp.eq.s32.totalorder %s34, 3
      %p372 = por %p370, %p371
      %p373 = scmp.ne.s32.totalorder %s362, %s363
      %p374 = scmp.eq.s32.totalorder %s34, 0
      %p375 = por %p373, %p374
      %p376 = scmp.ne.s32.totalorder %s362, %s363
      %p377 = scmp.eq.s32.totalorder %s35, 3
      %p378 = por %p376, %p377
      %p380 = scmp.ne.s32.totalorder %s363, %s379
      %p381 = scmp.eq.s32.totalorder %s35, 0
      %p382 = por %p380, %p381
      %s383 = ssub.s32 %s36, %s48
      %p384 = scmp.eq.s32.totalorder %s383, 0
      %s386 = sadd.s32 %s385, 1
      %s387 = scalar_select %p384, %s385, %s386
      %p390 = pneg %p384
      %p391 = scmp.eq.s32.totalorder %s29, 3
      %p392 = por %p390, %p391
      %p393 = scmp.ne.s32.totalorder %s385, %s388
      %p394 = scmp.eq.s32.totalorder %s29, 0
      %p395 = por %p393, %p394
      %p396 = scmp.ne.s32.totalorder %s385, %s388
      %p397 = scmp.eq.s32.totalorder %s34, 3
      %p398 = por %p396, %p397
      %p399 = scmp.ne.s32.totalorder %s388, %s389
      %p400 = scmp.eq.s32.totalorder %s34, 0
      %p401 = por %p399, %p400
      %p402 = scmp.ne.s32.totalorder %s388, %s389
      %p403 = scmp.eq.s32.totalorder %s35, 3
      %p404 = por %p402, %p403
      %p406 = scmp.ne.s32.totalorder %s389, %s405
      %p407 = scmp.eq.s32.totalorder %s35, 0
      %p408 = por %p406, %p407
      %p409 = scmp.le.s32.totalorder 1, %s29
      %p410 = scmp.lt.s32.totalorder %s29, 5
      %p411 = pnand %p409, %p410
      %p412 = pneg %p411
      // Predicated region
      $region9: #{tpu_custom_call.1} parent=5 // pred_check
        _
      $region10: #{tpu_custom_call.1} parent=5 // pred_check_branch
        %414 = sbr.rel (%p411) target = $region12
      $region11: #{tpu_custom_call.1} parent=5 // pred_region
        %s415 = ssub.s32 %s29, 1
        // Predicated region
        $region13: #{tpu_custom_call.1} parent=11 // pred_check
          %p416 = pneg %p95
        $region14: #{tpu_custom_call.1} parent=11 // pred_check_branch
          %418 = sbr.rel (%p416) target = $region16
        $region15: #{tpu_custom_call.1} parent=11 // pred_region
          %p419 = scmp.lt.s32.totalorder %s38, 1
          %s420 = scalar_select %p419, %s38, 1
          %s421 = smul.addr %s420, 8
          %s422 = smul.addr %s421, 8
          %s423 = scalar_lea.vmem %s1, %s422
        $region16: #{tpu_custom_call.1} parent=11 // pred_fallthru
          _
        // Predicated region
        $region17: #{tpu_custom_call.1} parent=11 // pred_check
          %p424 = pneg %p116
        $region18: #{tpu_custom_call.1} parent=11 // pred_check_branch
          %426 = sbr.rel (%p424) target = $region20
        $region19: #{tpu_custom_call.1} parent=11 // pred_region
          _
        $region20: #{tpu_custom_call.1} parent=11 // pred_fallthru
          _
        // Predicated region
        $region21: #{tpu_custom_call.1} parent=11 // pred_check
          %p427 = pneg %p137
        $region22: #{tpu_custom_call.1} parent=11 // pred_check_branch
          %429 = sbr.rel (%p427) target = $region24
        $region23: #{tpu_custom_call.1} parent=11 // pred_region
          _
        $region24: #{tpu_custom_call.1} parent=11 // pred_fallthru
          _
        // Predicated region
        $region25: #{tpu_custom_call.1} parent=11 // pred_check
          %p430 = pneg %p158
        $region26: #{tpu_custom_call.1} parent=11 // pred_check_branch
          %432 = sbr.rel (%p430) target = $region28
        $region27: #{tpu_custom_call.1} parent=11 // pred_region
          _
        $region28: #{tpu_custom_call.1} parent=11 // pred_fallthru
          _
        // Predicated region
        $region29: #{tpu_custom_call.1} parent=11 // pred_check
          %p433 = pneg %p179
        $region30: #{tpu_custom_call.1} parent=11 // pred_check_branch
          %435 = sbr.rel (%p433) target = $region32
        $region31: #{tpu_custom_call.1} parent=11 // pred_region
          _
        $region32: #{tpu_custom_call.1} parent=11 // pred_fallthru
          _
        // Predicated region
        $region33: #{tpu_custom_call.1} parent=11 // pred_check
          %p436 = pneg %p200
        $region34: #{tpu_custom_call.1} parent=11 // pred_check_branch
          %438 = sbr.rel (%p436) target = $region36
        $region35: #{tpu_custom_call.1} parent=11 // pred_region
          _
        $region36: #{tpu_custom_call.1} parent=11 // pred_fallthru
          _
        // Predicated region
        $region37: #{tpu_custom_call.1} parent=11 // pred_check
          %p439 = pneg %p221
        $region38: #{tpu_custom_call.1} parent=11 // pred_check_branch
          %441 = sbr.rel (%p439) target = $region40
        $region39: #{tpu_custom_call.1} parent=11 // pred_region
          _
        $region40: #{tpu_custom_call.1} parent=11 // pred_fallthru
          _
        // Predicated region
        $region41: #{tpu_custom_call.1} parent=11 // pred_check
          %p442 = pneg %p242
        $region42: #{tpu_custom_call.1} parent=11 // pred_check_branch
          %444 = sbr.rel (%p442) target = $region44
        $region43: #{tpu_custom_call.1} parent=11 // pred_region
          _
        $region44: #{tpu_custom_call.1} parent=11 // pred_fallthru
          _
        // Predicated region
        $region45: #{tpu_custom_call.1} parent=11 // pred_check
          %p445 = pneg %p263
        $region46: #{tpu_custom_call.1} parent=11 // pred_check_branch
          %447 = sbr.rel (%p445) target = $region48
        $region47: #{tpu_custom_call.1} parent=11 // pred_region
          _
        $region48: #{tpu_custom_call.1} parent=11 // pred_fallthru
          _
        // Predicated region
        $region49: #{tpu_custom_call.1} parent=11 // pred_check
          %p448 = pneg %p284
        $region50: #{tpu_custom_call.1} parent=11 // pred_check_branch
          %450 = sbr.rel (%p448) target = $region52
        $region51: #{tpu_custom_call.1} parent=11 // pred_region
          _
        $region52: #{tpu_custom_call.1} parent=11 // pred_fallthru
          _
        // Predicated region
        $region53: #{tpu_custom_call.1} parent=11 // pred_check
          %p451 = pneg %p305
        $region54: #{tpu_custom_call.1} parent=11 // pred_check_branch
          %453 = sbr.rel (%p451) target = $region56
        $region55: #{tpu_custom_call.1} parent=11 // pred_region
          _
        $region56: #{tpu_custom_call.1} parent=11 // pred_fallthru
          _
        // Predicated region
        $region57: #{tpu_custom_call.1} parent=11 // pred_check
          %p454 = pneg %p326
        $region58: #{tpu_custom_call.1} parent=11 // pred_check_branch
          %456 = sbr.rel (%p454) target = $region60
        $region59: #{tpu_custom_call.1} parent=11 // pred_region
          _
        $region60: #{tpu_custom_call.1} parent=11 // pred_fallthru
          _
        // Predicated region
        $region61: #{tpu_custom_call.1} parent=11 // pred_check
          %p457 = pneg %p347
        $region62: #{tpu_custom_call.1} parent=11 // pred_check_branch
          %459 = sbr.rel (%p457) target = $region64
        $region63: #{tpu_custom_call.1} parent=11 // pred_region
          _
        $region64: #{tpu_custom_call.1} parent=11 // pred_fallthru
          _
      $region12: #{tpu_custom_call.1} parent=5 // pred_fallthru
        _
      %p460 = scmp.lt.s32.totalorder %s29, 4
      // Predicated region
      $region65: #{tpu_custom_call.1} parent=5 // pred_check
        %p461 = pneg %p460
      $region66: #{tpu_custom_call.1} parent=5 // pred_check_branch
        %463 = sbr.rel (%p461) target = $region68
      $region67: #{tpu_custom_call.1} parent=5 // pred_region
        // Predicated region
        $region69: #{tpu_custom_call.1} parent=67 // pred_check
          %p464 = pneg %p63
        $region70: #{tpu_custom_call.1} parent=67 // pred_check_branch
          %466 = sbr.rel (%p464) target = $region72
        $region71: #{tpu_custom_call.1} parent=67 // pred_region
          %s467 = sand.u32 %s53, 1
          %s468 = scalar_lea.sflag [#allocation7], %s467
          %s469 = sand.u32 %s53, 1
          %s470 = smul.addr %s469, 128
          %s471 = scalar_lea.vmem [#allocation6], %s470
          %s472 = smul.u32 4, %s37
          %474 = vsyncadd %s468, 0
          %s475 = smul.addr %s36, 32
          %s476 = sadd.s32 %s472, %s475
          %s477 = smul.addr %s476, 8
          %s478 = scalar_lea.hbm %s0, %s477
          %s479 = sshll.u32 %s478, 4
          %s480 = int_to_ptr.hbm [resolvable:$true] %s479
          %s481 = sshll.u32 %s471, 4
          %s482 = int_to_ptr.vmem [resolvable:$true] %s481
          %487 = dma.hbm_to_vmem [thread:$0]  %s480, 2048, %s482, %s468, 1024, 512, 32
        $region72: #{tpu_custom_call.1} parent=67 // pred_fallthru
          _
      $region68: #{tpu_custom_call.1} parent=5 // pred_fallthru
        _
      %p488 = scmp.le.s32.totalorder 1, %s29
      %p489 = scmp.lt.s32.totalorder %s29, 5
      %p490 = pnand %p488, %p489
      %p491 = pneg %p490
      // Predicated region
      $region73: #{tpu_custom_call.1} parent=5 // pred_check
        _
      $region74: #{tpu_custom_call.1} parent=5 // pred_check_branch
        %493 = sbr.rel (%p490) target = $region76
      $region75: #{tpu_custom_call.1} parent=5 // pred_region
        %s494 = ssub.s32 %s29, 1
        %s495 = sand.u32 %s56, 1
        %s496 = scalar_lea.sflag [#allocation7], %s495
        %s497 = sand.u32 %s56, 1
        %s498 = smul.addr %s497, 128
        %s499 = scalar_lea.vmem [#allocation6], %s498
        // Predicated region
        $region77: #{tpu_custom_call.1} parent=75 // pred_check
          %p500 = pneg %p69
        $region78: #{tpu_custom_call.1} parent=75 // pred_check_branch
          %502 = sbr.rel (%p500) target = $region80
        $region79: #{tpu_custom_call.1} parent=75 // pred_region
          %504 = dma.done %s496, 2048
        $region80: #{tpu_custom_call.1} parent=75 // pred_fallthru
          _
        %s505 = sand.u32 %s56, 1
        %s506 = scalar_lea.sflag [#allocation7], %s505
        %s507 = sand.u32 %s56, 1
        %s508 = smul.addr %s507, 128
        %s509 = scalar_lea.vmem [#allocation6], %s508
        %p510 = pneg %p69
        %p511 = pneg %p66
        %p512 = scmp.lt.s32.totalorder %s38, 1
        %s513 = scalar_select %p512, %s38, 1
        %s514 = smul.addr %s513, 8
        %s515 = smul.addr %s514, 8
        %s516 = scalar_lea.vmem %s1, %s515
        %p517 = pneg %p95
        %p518 = pneg %p92
        %p519 = pneg %p116
        %p520 = pneg %p113
        %p521 = pneg %p137
        %p522 = pneg %p134
        %p523 = pneg %p158
        %p524 = pneg %p155
        %p525 = pneg %p179
        %p526 = pneg %p176
        %p527 = pneg %p200
        %p528 = pneg %p197
        %p529 = pneg %p221
        %p530 = pneg %p218
        %p531 = pneg %p242
        %p532 = pneg %p239
        %p533 = pneg %p263
        %p534 = pneg %p260
        %p535 = pneg %p284
        %p536 = pneg %p281
        %p537 = pneg %p305
        %p538 = pneg %p302
        %p539 = pneg %p326
        %p540 = pneg %p323
        %p541 = pneg %p347
        %p542 = pneg %p344
        %p543 = pneg %p375
        %p544 = pneg %p372
        %s545 = sand.u32 %s362, 1
        %s546 = scalar_lea.sflag [#allocation8], %s545
        %s547 = sand.u32 %s362, 1
        %s548 = smul.addr %s547, 128
        %s549 = scalar_lea.vmem [#allocation9], %s548
        %p550 = pneg %p401
        %p551 = pneg %p398
        %s552 = smul.u32 4, %s39
        %p553 = scmp.lt.s32.totalorder %s38, 1
        %s554 = scalar_select %p553, %s38, 1
        %s555 = smul.addr %s554, 8
        %s556 = smul.addr %s555, 8
        %s557 = scalar_lea.vmem %s1, %s556
        %s558 = smul.u32 4, %s39
        %p560 = scmp.eq.s32.totalorder %s39, 0
        // Predicated region
        $region81: #{tpu_custom_call.1} parent=75 // pred_check
          %p561 = pneg %p560
        $region82: #{tpu_custom_call.1} parent=75 // pred_check_branch
          %563 = sbr.rel (%p561) target = $region84
        $region83: #{tpu_custom_call.1} parent=75 // pred_region
          %v564 = vld [vmem:[%s557] sm:$0xff]
          %v565 = vld [vmem:[%s557 + $0x8] sm:$0xff]
          %v566 = vld [vmem:[%s557 + $0x10] sm:$0xff]
          %v567 = vld [vmem:[%s557 + $0x18] sm:$0xff]
          %v568 = vld [vmem:[%s557 + $0x20] sm:$0xff]
          %v569 = vld [vmem:[%s557 + $0x28] sm:$0xff]
          %v570 = vld [vmem:[%s557 + $0x30] sm:$0xff]
          %v571 = vld [vmem:[%s557 + $0x38] sm:$0xff]
          %v572 = vld [vmem:[%s4] sm:$0xf]
          %v573 = vld [vmem:[%s4 + $0x4] sm:$0xf]
          %v574 = vld [vmem:[%s4 + $0x8] sm:$0xf]
          %v575 = vld [vmem:[%s4 + $0xc] sm:$0xf]
          %v576 = vpack.c.bf16 %v566, %v564
          %v577 = vpack.c.bf16 %v567, %v565
          %v578 = vpack.c.bf16 %v570, %v568
          %v579 = vpack.c.bf16 %v571, %v569
          %v580 = vld [vmem:[%s5] sm:$0xff]
          %v581 = vld [vmem:[%s5 + $0x8] sm:$0xff]
          %v582 = vld [vmem:[%s5 + $0x10] sm:$0xff]
          %v583 = vld [vmem:[%s5 + $0x18] sm:$0xff]
          %585 = vset.pattern.permute.xlu0 0
          %586 = vperm.xlu0 %585, %v580
          %v587 = vpop.permute.xlu0 %586
          %590 = vset.pattern.permute.xlu0 0
          %591 = vperm.xlu0 %590, %v581
          %v592 = vpop.permute.xlu0 %591
          %595 = vset.pattern.permute.xlu0 0
          %596 = vperm.xlu0 %595, %v582
          %v597 = vpop.permute.xlu0 %596
          %600 = vset.pattern.permute.xlu0 0
          %601 = vperm.xlu0 %600, %v583
          %v602 = vpop.permute.xlu0 %601
          %v608 = vunpack.c.l.b16 %v572
          %v609 = vunpack.c.l.b16 %v573
          %v610 = vunpack.c.l.b16 %v574
          %v611 = vunpack.c.l.b16 %v575
          %v612 = vpack.c.b16 %v609, %v608
          %v613 = vpack.c.b16 %v611, %v610
          %vm614 = vcmask 261120
          %v616 = vsel %vm614, %v612, 0
          %v619 = vsel %vm614, %v613, 0
          %621 = vmatpush.bf16.msra.mxu0 0
          %622 = vmatpush.bf16.msra.mxu0 0
          %623 = vmatpush.bf16.msra.mxu0 0
          %624 = vmatpush.bf16.msra.mxu0 0
          %625 = vmatpush.bf16.msra.mxu0 0
          %626 = vmatpush.bf16.msra.mxu0 0
          %627 = vmatpush.bf16.msra.mxu0 %v578
          %628 = vmatpush.bf16.msra.mxu0 %v576
          %629 = vmatmul.bf16.gmra.mxu0 %v616
          %v630 = vpop.f32.mrf.mxu0
          %v631 = vadd.f32 %v587, %v630
          %v632 = vpop.f32.mrf.mxu0
          %v633 = vadd.f32 %v592, %v632
          %634 = vmatmul.bf16.gmra.mxu0 %v619
          %v635 = vpop.f32.mrf.mxu0
          %v636 = vadd.f32 %v597, %v635
          %v637 = vpop.f32.mrf.mxu0
          %v638 = vadd.f32 %v602, %v637
          %639 = vdwg.mxu0
          %640 = vmatpush.bf16.msra.mxu0 0
          %641 = vmatpush.bf16.msra.mxu0 0
          %642 = vmatpush.bf16.msra.mxu0 0
          %643 = vmatpush.bf16.msra.mxu0 0
          %644 = vmatpush.bf16.msra.mxu0 0
          %645 = vmatpush.bf16.msra.mxu0 0
          %646 = vmatpush.bf16.msra.mxu0 %v579
          %647 = vmatpush.bf16.msra.mxu0 %v577
          %648 = vmatmul.bf16.gmra.mxu0 %v616
          %v649 = vpop.f32.mrf.mxu0
          %v650 = vadd.f32 %v587, %v649
          %v651 = vpop.f32.mrf.mxu0
          %v652 = vadd.f32 %v592, %v651
          %653 = vmatmul.bf16.gmra.mxu0 %v619
          %v654 = vpop.f32.mrf.mxu0
          %v655 = vadd.f32 %v597, %v654
          %v656 = vpop.f32.mrf.mxu0
          %v657 = vadd.f32 %v602, %v656
          %658 = vdwg.mxu0
          %v659 = vpack.c.bf16 %v633, %v631
          %v660 = vpack.c.bf16 %v652, %v650
          %v661 = vpack.c.bf16 %v655, %v636
          %v662 = vpack.c.bf16 %v657, %v638
          %663 = vst [vmem:[#allocation2] sm:$0xff] %v661
          %664 = vst [vmem:[#allocation2 + $0x8] sm:$0xff] %v662
          %v667 = vunpack.c.l.b16 %v661
          %v668 = vunpack.c.h.b16 %v661
          %v669 = vunpack.c.l.b16 %v662
          %v670 = vunpack.c.h.b16 %v662
          %v671 = vpack.c.b16 %v669, %v667
          %v672 = vpack.c.b16 %v670, %v668
          %675 = vmatpush.bf16.xpose.msra.mxu0 0
          %676 = vmatpush.bf16.xpose.msra.mxu0 0
          %677 = vmatpush.bf16.xpose.msra.mxu0 0
          %678 = vmatpush.bf16.xpose.msra.mxu0 0
          %679 = vmatpush.bf16.xpose.msra.mxu0 0
          %680 = vmatpush.bf16.xpose.msra.mxu0 0
          %681 = vmatpush.bf16.xpose.msra.mxu0 0
          %682 = vmatpush.bf16.xpose.msra.mxu0 %v671
          %683 = vmatmul.bf16.gmra.mxu0 %v659
          %v684 = vpop.f32.mrf.mxu0
          %v685 = vadd.f32 0.0, %v684
          %v686 = vpop.f32.mrf.mxu0
          %v687 = vadd.f32 0.0, %v686
          %688 = vdwg.mxu0
          %689 = vmatpush.bf16.xpose.msra.mxu0 0
          %690 = vmatpush.bf16.xpose.msra.mxu0 0
          %691 = vmatpush.bf16.xpose.msra.mxu0 0
          %692 = vmatpush.bf16.xpose.msra.mxu0 0
          %693 = vmatpush.bf16.xpose.msra.mxu0 0
          %694 = vmatpush.bf16.xpose.msra.mxu0 0
          %695 = vmatpush.bf16.xpose.msra.mxu0 0
          %696 = vmatpush.bf16.xpose.msra.mxu0 %v672
          %697 = vmatmul.bf16.gmra.mxu0 %v660
          %v698 = vpop.f32.mrf.mxu0
          %v699 = vadd.f32 %v685, %v698
          %v700 = vpop.f32.mrf.mxu0
          %v701 = vadd.f32 %v687, %v700
          %702 = vdwg.mxu0
          %v703 = vld [vmem:[%s8] sm:$0xf]
          %v704 = vld [vmem:[%s8 + $0x4] sm:$0xf]
          %v705 = vld [vmem:[%s8 + $0x8] sm:$0xf]
          %v706 = vld [vmem:[%s8 + $0xc] sm:$0xf]
          %v707 = vpack.c.bf16 %v701, %v699
          %v712 = vunpack.c.l.b16 %v703
          %v713 = vunpack.c.l.b16 %v704
          %v714 = vunpack.c.l.b16 %v705
          %v715 = vunpack.c.l.b16 %v706
          %v716 = vpack.c.b16 %v713, %v712
          %v717 = vpack.c.b16 %v715, %v714
          %vm718 = vcmask 130048
          %v720 = vsel %vm718, %v716, 0
          %v723 = vsel %vm718, %v717, 0
          %725 = vmatpush.bf16.msra.mxu0 0
          %726 = vmatpush.bf16.msra.mxu0 0
          %727 = vmatpush.bf16.msra.mxu0 0
          %728 = vmatpush.bf16.msra.mxu0 0
          %729 = vmatpush.bf16.msra.mxu0 0
          %730 = vmatpush.bf16.msra.mxu0 0
          %731 = vmatpush.bf16.msra.mxu0 0
          %732 = vmatpush.bf16.msra.mxu0 %v707
          %733 = vmatmul.bf16.gmra.mxu0 %v720
          %v734 = vpop.f32.mrf.mxu0
          %v735 = vadd.f32 0.0, %v734
          %v736 = vpop.f32.mrf.mxu0
          %v737 = vadd.f32 0.0, %v736
          %738 = vmatmul.bf16.gmra.mxu0 %v723
          %v739 = vpop.f32.mrf.mxu0
          %v740 = vadd.f32 0.0, %v739
          %v741 = vpop.f32.mrf.mxu0
          %v742 = vadd.f32 0.0, %v741
          %743 = vdwg.mxu0
          %v744 = vpack.c.bf16 %v735, %v735
          %v745 = vpack.c.bf16 %v737, %v737
          %v746 = vpack.c.bf16 %v740, %v740
          %v747 = vpack.c.bf16 %v742, %v742
          %vm748 = vcmask 125952
          %749 = vst.msk [vmem:[#allocation3] sm:$0xf] %vm748, %v744
          %750 = vst.msk [vmem:[#allocation3 + $0x4] sm:$0xf] %vm748, %v745
          %751 = vst.msk [vmem:[#allocation3 + $0x8] sm:$0xf] %vm748, %v746
          %752 = vst.msk [vmem:[#allocation3 + $0xc] sm:$0xf] %vm748, %v747
          %v753 = vadd.f32 %v564, %v565
          %754 = vadd.xlane.f32.xlu0 %v753
          %v755 = vpop.xlane.xlu0 %754
          %v756 = vadd.f32 %v566, %v567
          %757 = vadd.xlane.f32.xlu0 %v756
          %v758 = vpop.xlane.xlu0 %757
          %v759 = vadd.f32 %v568, %v569
          %760 = vadd.xlane.f32.xlu0 %v759
          %v761 = vpop.xlane.xlu0 %760
          %v762 = vadd.f32 %v570, %v571
          %763 = vadd.xlane.f32.xlu0 %v762
          %v764 = vpop.xlane.xlu0 %763
          %v765 = vrcp.pop 256.0
          %v766 = vmul.f32 256.0, %v765
          %v767 = vsub.f32 1.0, %v766
          %v768 = vmul.f32 %v765, %v767
          %v769 = vadd.f32 %v765, %v768
          %vm770 = vweird.f32 %v765
          %v771 = vsel %vm770, %v765, %v769
          %v772 = vmul.f32 %v755, %v771
          %v773 = vmul.f32 %v758, %v771
          %v774 = vmul.f32 %v761, %v771
          %v775 = vmul.f32 %v764, %v771
          %v776 = vmax.f32 %v564, %v565
          %777 = vmax.xlane.f32.xlu0 %v776
          %v778 = vpop.xlane.xlu0 %777
          %v779 = vmax.f32 %v566, %v567
          %780 = vmax.xlane.f32.xlu0 %v779
          %v781 = vpop.xlane.xlu0 %780
          %v782 = vmax.f32 %v568, %v569
          %783 = vmax.xlane.f32.xlu0 %v782
          %v784 = vpop.xlane.xlu0 %783
          %v785 = vmax.f32 %v570, %v571
          %786 = vmax.xlane.f32.xlu0 %v785
          %v787 = vpop.xlane.xlu0 %786
          %v788 = vlaneseq
          %v789 = vand.u32 %v788, 127
          %vm790 = vcmp.eq.s32.totalorder %v789, 0
          %v791 = vsel %vm790, %v772, %v778
          %v792 = vsel %vm790, %v773, %v781
          %v793 = vsel %vm790, %v774, %v784
          %v794 = vsel %vm790, %v775, %v787
          %v795 = vld [vmem:[%s10] sm:$0x3]
          %v796 = vld [vmem:[%s11] sm:$0x3]
          %798 = vset.pattern.permute.xlu0 0
          %799 = vperm.xlu0 %798, %v796
          %v800 = vpop.permute.xlu0 %799
          %v803 = vsel %vm614, %v795, 0
          %805 = vmatpush.msra.mxu0 0.0
          %806 = vmatpush.msra.mxu0 0.0
          %807 = vmatpush.msra.mxu0 0.0
          %808 = vmatpush.msra.mxu0 0.0
          %809 = vmatpush.msra.mxu0 0.0
          %810 = vmatpush.msra.mxu0 0.0
          %811 = vmatpush.msra.mxu0 0.0
          %812 = vmatpush.msra.mxu0 0.0
          %813 = vmatpush.msra.mxu0 0.0
          %814 = vmatpush.msra.mxu0 0.0
          %815 = vmatpush.msra.mxu0 0.0
          %816 = vmatpush.msra.mxu0 0.0
          %817 = vmatpush.msra.mxu0 %v794
          %818 = vmatpush.msra.mxu0 %v793
          %819 = vmatpush.msra.mxu0 %v792
          %820 = vmatpush.msra.mxu0 %v791
          %821 = vmatmul.f32.gmra.mxu0 %v803
          %v822 = vpop.f32.mrf.mxu0
          %v823 = vadd.f32 %v800, %v822
          %824 = vdwg.mxu0
          %v825 = vmax.f32 %v823, 0.0
          %v826 = vld [vmem:[%s12] sm:$0xff]
          %v827 = vld [vmem:[%s12 + $0x8] sm:$0xff]
          %v828 = vld [vmem:[%s12 + $0x10] sm:$0xff]
          %v829 = vld [vmem:[%s12 + $0x18] sm:$0xff]
          %v830 = vld [vmem:[%s13] sm:$0xff]
          %v831 = vld [vmem:[%s13 + $0x8] sm:$0xff]
          %v832 = vld [vmem:[%s13 + $0x10] sm:$0xff]
          %v833 = vld [vmem:[%s13 + $0x18] sm:$0xff]
          %835 = vset.pattern.permute.xlu0 0
          %836 = vperm.xlu0 %835, %v830
          %v837 = vpop.permute.xlu0 %836
          %840 = vset.pattern.permute.xlu0 0
          %841 = vperm.xlu0 %840, %v831
          %v842 = vpop.permute.xlu0 %841
          %845 = vset.pattern.permute.xlu0 0
          %846 = vperm.xlu0 %845, %v832
          %v847 = vpop.permute.xlu0 %846
          %850 = vset.pattern.permute.xlu0 0
          %851 = vperm.xlu0 %850, %v833
          %v852 = vpop.permute.xlu0 %851
          %vm854 = vcmask 15360
          %v856 = vsel %vm854, %v826, 0
          %v859 = vsel %vm854, %v827, 0
          %v862 = vsel %vm854, %v828, 0
          %v865 = vsel %vm854, %v829, 0
          %vm867 = vcmask 1041408
          %v869 = vsel %vm867, %v825, 0
          %871 = vmatpush.msra.mxu0 0.0
          %872 = vmatpush.msra.mxu0 0.0
          %873 = vmatpush.msra.mxu0 0.0
          %874 = vmatpush.msra.mxu0 0.0
          %875 = vmatpush.msra.mxu0 0.0
          %876 = vmatpush.msra.mxu0 0.0
          %877 = vmatpush.msra.mxu0 0.0
          %878 = vmatpush.msra.mxu0 0.0
          %879 = vmatpush.msra.mxu0 0.0
          %880 = vmatpush.msra.mxu0 0.0
          %881 = vmatpush.msra.mxu0 0.0
          %882 = vmatpush.msra.mxu0 0.0
          %883 = vmatpush.msra.mxu0 0.0
          %884 = vmatpush.msra.mxu0 0.0
          %885 = vmatpush.msra.mxu0 0.0
          %886 = vmatpush.msra.mxu0 %v869
          %887 = vmatmul.f32.gmra.mxu0 %v856
          %v888 = vpop.f32.mrf.mxu0
          %v889 = vadd.f32 %v837, %v888
          %890 = vmatmul.f32.gmra.mxu0 %v859
          %v891 = vpop.f32.mrf.mxu0
          %v892 = vadd.f32 %v842, %v891
          %893 = vmatmul.f32.gmra.mxu0 %v862
          %v894 = vpop.f32.mrf.mxu0
          %v895 = vadd.f32 %v847, %v894
          %896 = vmatmul.f32.gmra.mxu0 %v865
          %v897 = vpop.f32.mrf.mxu0
          %v898 = vadd.f32 %v852, %v897
          %899 = vdwg.mxu0
          %v900 = vsel %vm854, %v889, 0.0
          %901 = vadd.xlane.f32.xlu0 %v900
          %v902 = vpop.xlane.xlu0 %901
          %v903 = vsel %vm854, %v892, 0.0
          %904 = vadd.xlane.f32.xlu0 %v903
          %v905 = vpop.xlane.xlu0 %904
          %v906 = vsel %vm854, %v895, 0.0
          %907 = vadd.xlane.f32.xlu0 %v906
          %v908 = vpop.xlane.xlu0 %907
          %v909 = vsel %vm854, %v898, 0.0
          %910 = vadd.xlane.f32.xlu0 %v909
          %v911 = vpop.xlane.xlu0 %910
          %v912 = vxor.u32 %v902, 2147483648
          %v913 = vxor.u32 %v905, 2147483648
          %v914 = vxor.u32 %v908, 2147483648
          %v915 = vxor.u32 %v911, 2147483648
          %v916 = vmul.f32 %v912, 1.442695
          %v917 = vpow.pop %v916
          %v918 = vmul.f32 %v913, 1.442695
          %v919 = vpow.pop %v918
          %v920 = vmul.f32 %v914, 1.442695
          %v921 = vpow.pop %v920
          %v922 = vmul.f32 %v915, 1.442695
          %v923 = vpow.pop %v922
          %v924 = vadd.f32 %v917, 1.0
          %v925 = vadd.f32 %v919, 1.0
          %v926 = vadd.f32 %v921, 1.0
          %v927 = vadd.f32 %v923, 1.0
          %v928 = vrcp.pop %v924
          %v929 = vmul.f32 %v924, %v928
          %v930 = vsub.f32 1.0, %v929
          %v931 = vmul.f32 %v928, %v930
          %v932 = vadd.f32 %v928, %v931
          %vm933 = vweird.f32 %v924
          %vm934 = vweird.f32 %v928
          %vm935 = vmor %vm933, %vm934
          %v936 = vsel %vm935, %v928, %v932
          %v937 = vand.u32 2147483647, %v924
          %vm938 = vcmp.eq.f32.partialorder %v937, 8.507059e+37
          %v939 = vand.u32 %v924, 2147483648
          %v940 = vor.u32 1.1754944e-38, %v939
          %v941 = vsel %vm938, %v940, %v936
          %v942 = vmul.f32 1.0, %v941
          %v943 = vrcp.pop %v925
          %v944 = vmul.f32 %v925, %v943
          %v945 = vsub.f32 1.0, %v944
          %v946 = vmul.f32 %v943, %v945
          %v947 = vadd.f32 %v943, %v946
          %vm948 = vweird.f32 %v925
          %vm949 = vweird.f32 %v943
          %vm950 = vmor %vm948, %vm949
          %v951 = vsel %vm950, %v943, %v947
          %v952 = vand.u32 2147483647, %v925
          %vm953 = vcmp.eq.f32.partialorder %v952, 8.507059e+37
          %v954 = vand.u32 %v925, 2147483648
          %v955 = vor.u32 1.1754944e-38, %v954
          %v956 = vsel %vm953, %v955, %v951
          %v957 = vmul.f32 1.0, %v956
          %v958 = vrcp.pop %v926
          %v959 = vmul.f32 %v926, %v958
          %v960 = vsub.f32 1.0, %v959
          %v961 = vmul.f32 %v958, %v960
          %v962 = vadd.f32 %v958, %v961
          %vm963 = vweird.f32 %v926
          %vm964 = vweird.f32 %v958
          %vm965 = vmor %vm963, %vm964
          %v966 = vsel %vm965, %v958, %v962
          %v967 = vand.u32 2147483647, %v926
          %vm968 = vcmp.eq.f32.partialorder %v967, 8.507059e+37
          %v969 = vand.u32 %v926, 2147483648
          %v970 = vor.u32 1.1754944e-38, %v969
          %v971 = vsel %vm968, %v970, %v966
          %v972 = vmul.f32 1.0, %v971
          %v973 = vrcp.pop %v927
          %v974 = vmul.f32 %v927, %v973
          %v975 = vsub.f32 1.0, %v974
          %v976 = vmul.f32 %v973, %v975
          %v977 = vadd.f32 %v973, %v976
          %vm978 = vweird.f32 %v927
          %vm979 = vweird.f32 %v973
          %vm980 = vmor %vm978, %vm979
          %v981 = vsel %vm980, %v973, %v977
          %v982 = vand.u32 2147483647, %v927
          %vm983 = vcmp.eq.f32.partialorder %v982, 8.507059e+37
          %v984 = vand.u32 %v927, 2147483648
          %v985 = vor.u32 1.1754944e-38, %v984
          %v986 = vsel %vm983, %v985, %v981
          %v987 = vmul.f32 1.0, %v986
          %vm988 = vcmask 7168
          %989 = vst.msk [vmem:[#allocation5] sm:$0xff] %vm988, %v942
          %990 = vst.msk [vmem:[#allocation5 + $0x8] sm:$0xff] %vm988, %v957
          %991 = vst.msk [vmem:[#allocation5 + $0x10] sm:$0xff] %vm988, %v972
          %992 = vst.msk [vmem:[#allocation5 + $0x18] sm:$0xff] %vm988, %v987
          %993 = vst.msk [vmem:[#allocation4] sm:$0xff] %vm718, 0.0
          %994 = vst.msk [vmem:[#allocation4 + $0x8] sm:$0xff] %vm718, 0.0
        $region84: #{tpu_custom_call.1} parent=75 // pred_fallthru
          _
        %v995 = vld [vmem:[%s499] sm:$0xff]
        %v996 = vld [vmem:[%s499 + $0x8] sm:$0xff]
        %v997 = vld [vmem:[%s499 + $0x10] sm:$0xff]
        %v998 = vld [vmem:[%s499 + $0x18] sm:$0xff]
        %v999 = vld [vmem:[%s499 + $0x20] sm:$0xff]
        %v1000 = vld [vmem:[%s499 + $0x28] sm:$0xff]
        %v1001 = vld [vmem:[%s499 + $0x30] sm:$0xff]
        %v1002 = vld [vmem:[%s499 + $0x38] sm:$0xff]
        %v1003 = vld [vmem:[%s499 + $0x40] sm:$0xff]
        %v1004 = vld [vmem:[%s499 + $0x48] sm:$0xff]
        %v1005 = vld [vmem:[%s499 + $0x50] sm:$0xff]
        %v1006 = vld [vmem:[%s499 + $0x58] sm:$0xff]
        %v1007 = vld [vmem:[%s499 + $0x60] sm:$0xff]
        %v1008 = vld [vmem:[%s499 + $0x68] sm:$0xff]
        %v1009 = vld [vmem:[%s499 + $0x70] sm:$0xff]
        %v1010 = vld [vmem:[%s499 + $0x78] sm:$0xff]
        %v1011 = vld [vmem:[%s2] sm:$0xf]
        %v1012 = vld [vmem:[%s2 + $0x4] sm:$0xf]
        %v1013 = vld [vmem:[%s2 + $0x8] sm:$0xf]
        %v1014 = vld [vmem:[%s2 + $0xc] sm:$0xf]
        %v1015 = vpack.c.bf16 %v999, %v995
        %v1016 = vpack.c.bf16 %v1000, %v996
        %v1017 = vpack.c.bf16 %v1001, %v997
        %v1018 = vpack.c.bf16 %v1002, %v998
        %v1019 = vpack.c.bf16 %v1007, %v1003
        %v1020 = vpack.c.bf16 %v1008, %v1004
        %v1021 = vpack.c.bf16 %v1009, %v1005
        %v1022 = vpack.c.bf16 %v1010, %v1006
        %v1023 = vld [vmem:[%s3] sm:$0xff]
        %v1024 = vld [vmem:[%s3 + $0x8] sm:$0xff]
        %v1025 = vld [vmem:[%s3 + $0x10] sm:$0xff]
        %v1026 = vld [vmem:[%s3 + $0x18] sm:$0xff]
        %1028 = vset.pattern.permute.xlu0 0
        %1029 = vperm.xlu0 %1028, %v1023
        %v1030 = vpop.permute.xlu0 %1029
        %1033 = vset.pattern.permute.xlu0 0
        %1034 = vperm.xlu0 %1033, %v1024
        %v1035 = vpop.permute.xlu0 %1034
        %1038 = vset.pattern.permute.xlu0 0
        %1039 = vperm.xlu0 %1038, %v1025
        %v1040 = vpop.permute.xlu0 %1039
        %1043 = vset.pattern.permute.xlu0 0
        %1044 = vperm.xlu0 %1043, %v1026
        %v1045 = vpop.permute.xlu0 %1044
        %v1051 = vunpack.c.l.b16 %v1011
        %v1052 = vunpack.c.l.b16 %v1012
        %v1053 = vunpack.c.l.b16 %v1013
        %v1054 = vunpack.c.l.b16 %v1014
        %v1055 = vpack.c.b16 %v1052, %v1051
        %v1056 = vpack.c.b16 %v1054, %v1053
        %vm1057 = vcmask 261120
        %v1059 = vsel %vm1057, %v1055, 0
        %v1062 = vsel %vm1057, %v1056, 0
        %1064 = vmatpush.bf16.msra.mxu0 0
        %1065 = vmatpush.bf16.msra.mxu0 0
        %1066 = vmatpush.bf16.msra.mxu0 0
        %1067 = vmatpush.bf16.msra.mxu0 0
        %1068 = vmatpush.bf16.msra.mxu0 0
        %1069 = vmatpush.bf16.msra.mxu0 0
        %1070 = vmatpush.bf16.msra.mxu0 %v1019
        %1071 = vmatpush.bf16.msra.mxu0 %v1015
        %1072 = vmatmul.bf16.gmra.mxu0 %v1059
        %v1073 = vpop.f32.mrf.mxu0
        %v1074 = vadd.f32 %v1030, %v1073
        %v1075 = vpop.f32.mrf.mxu0
        %v1076 = vadd.f32 %v1035, %v1075
        %1077 = vmatmul.bf16.gmra.mxu0 %v1062
        %v1078 = vpop.f32.mrf.mxu0
        %v1079 = vadd.f32 %v1040, %v1078
        %v1080 = vpop.f32.mrf.mxu0
        %v1081 = vadd.f32 %v1045, %v1080
        %1082 = vdwg.mxu0
        %1083 = vmatpush.bf16.msra.mxu0 0
        %1084 = vmatpush.bf16.msra.mxu0 0
        %1085 = vmatpush.bf16.msra.mxu0 0
        %1086 = vmatpush.bf16.msra.mxu0 0
        %1087 = vmatpush.bf16.msra.mxu0 0
        %1088 = vmatpush.bf16.msra.mxu0 0
        %1089 = vmatpush.bf16.msra.mxu0 %v1020
        %1090 = vmatpush.bf16.msra.mxu0 %v1016
        %1091 = vmatmul.bf16.gmra.mxu0 %v1059
        %v1092 = vpop.f32.mrf.mxu0
        %v1093 = vadd.f32 %v1030, %v1092
        %v1094 = vpop.f32.mrf.mxu0
        %v1095 = vadd.f32 %v1035, %v1094
        %1096 = vmatmul.bf16.gmra.mxu0 %v1062
        %v1097 = vpop.f32.mrf.mxu0
        %v1098 = vadd.f32 %v1040, %v1097
        %v1099 = vpop.f32.mrf.mxu0
        %v1100 = vadd.f32 %v1045, %v1099
        %1101 = vdwg.mxu0
        %1102 = vmatpush.bf16.msra.mxu0 0
        %1103 = vmatpush.bf16.msra.mxu0 0
        %1104 = vmatpush.bf16.msra.mxu0 0
        %1105 = vmatpush.bf16.msra.mxu0 0
        %1106 = vmatpush.bf16.msra.mxu0 0
        %1107 = vmatpush.bf16.msra.mxu0 0
        %1108 = vmatpush.bf16.msra.mxu0 %v1021
        %1109 = vmatpush.bf16.msra.mxu0 %v1017
        %1110 = vmatmul.bf16.gmra.mxu0 %v1059
        %v1111 = vpop.f32.mrf.mxu0
        %v1112 = vadd.f32 %v1030, %v1111
        %v1113 = vpop.f32.mrf.mxu0
        %v1114 = vadd.f32 %v1035, %v1113
        %1115 = vmatmul.bf16.gmra.mxu0 %v1062
        %v1116 = vpop.f32.mrf.mxu0
        %v1117 = vadd.f32 %v1040, %v1116
        %v1118 = vpop.f32.mrf.mxu0
        %v1119 = vadd.f32 %v1045, %v1118
        %1120 = vdwg.mxu0
        %1121 = vmatpush.bf16.msra.mxu0 0
        %1122 = vmatpush.bf16.msra.mxu0 0
        %1123 = vmatpush.bf16.msra.mxu0 0
        %1124 = vmatpush.bf16.msra.mxu0 0
        %1125 = vmatpush.bf16.msra.mxu0 0
        %1126 = vmatpush.bf16.msra.mxu0 0
        %1127 = vmatpush.bf16.msra.mxu0 %v1022
        %1128 = vmatpush.bf16.msra.mxu0 %v1018
        %1129 = vmatmul.bf16.gmra.mxu0 %v1059
        %v1130 = vpop.f32.mrf.mxu0
        %v1131 = vadd.f32 %v1030, %v1130
        %v1132 = vpop.f32.mrf.mxu0
        %v1133 = vadd.f32 %v1035, %v1132
        %1134 = vmatmul.bf16.gmra.mxu0 %v1062
        %v1135 = vpop.f32.mrf.mxu0
        %v1136 = vadd.f32 %v1040, %v1135
        %v1137 = vpop.f32.mrf.mxu0
        %v1138 = vadd.f32 %v1045, %v1137
        %1139 = vdwg.mxu0
        %v1140 = vpack.c.bf16 %v1076, %v1074
        %v1141 = vpack.c.bf16 %v1095, %v1093
        %v1142 = vpack.c.bf16 %v1114, %v1112
        %v1143 = vpack.c.bf16 %v1133, %v1131
        %v1144 = vpack.c.bf16 %v1081, %v1079
        %v1145 = vpack.c.bf16 %v1100, %v1098
        %v1146 = vpack.c.bf16 %v1119, %v1117
        %v1147 = vpack.c.bf16 %v1138, %v1136
        %v1148 = vld [vmem:[#allocation3] sm:$0xf]
        %v1149 = vld [vmem:[#allocation3 + $0x4] sm:$0xf]
        %v1150 = vld [vmem:[#allocation3 + $0x8] sm:$0xf]
        %v1151 = vld [vmem:[#allocation3 + $0xc] sm:$0xf]
        %v1152 = vld [vmem:[%s9] sm:$0xff]
        %v1153 = vld [vmem:[%s9 + $0x8] sm:$0xff]
        %v1154 = vld [vmem:[%s9 + $0x10] sm:$0xff]
        %v1155 = vld [vmem:[%s9 + $0x18] sm:$0xff]
        %1157 = vset.pattern.permute.xlu0 0
        %1158 = vperm.xlu0 %1157, %v1152
        %v1159 = vpop.permute.xlu0 %1158
        %1162 = vset.pattern.permute.xlu0 0
        %1163 = vperm.xlu0 %1162, %v1153
        %v1164 = vpop.permute.xlu0 %1163
        %1167 = vset.pattern.permute.xlu0 0
        %1168 = vperm.xlu0 %1167, %v1154
        %v1169 = vpop.permute.xlu0 %1168
        %1172 = vset.pattern.permute.xlu0 0
        %1173 = vperm.xlu0 %1172, %v1155
        %v1174 = vpop.permute.xlu0 %1173
        %v1180 = vunpack.c.l.b16 %v1148
        %v1181 = vunpack.c.l.b16 %v1149
        %v1182 = vunpack.c.l.b16 %v1150
        %v1183 = vunpack.c.l.b16 %v1151
        %v1184 = vpack.c.b16 %v1181, %v1180
        %v1185 = vpack.c.b16 %v1183, %v1182
        %vm1186 = vcmask 130048
        %v1188 = vsel %vm1186, %v1184, 0
        %v1191 = vsel %vm1186, %v1185, 0
        %1193 = vmatpush.bf16.msra.mxu0 0
        %1194 = vmatpush.bf16.msra.mxu0 0
        %1195 = vmatpush.bf16.msra.mxu0 0
        %1196 = vmatpush.bf16.msra.mxu0 0
        %1197 = vmatpush.bf16.msra.mxu0 0
        %1198 = vmatpush.bf16.msra.mxu0 0
        %1199 = vmatpush.bf16.msra.mxu0 0
        %1200 = vmatpush.bf16.msra.mxu0 %v1144
        %1201 = vmatmul.bf16.gmra.mxu0 %v1188
        %v1202 = vpop.f32.mrf.mxu0
        %v1203 = vadd.f32 %v1159, %v1202
        %v1204 = vpop.f32.mrf.mxu0
        %v1205 = vadd.f32 %v1164, %v1204
        %1206 = vmatmul.bf16.gmra.mxu0 %v1191
        %v1207 = vpop.f32.mrf.mxu0
        %v1208 = vadd.f32 %v1169, %v1207
        %v1209 = vpop.f32.mrf.mxu0
        %v1210 = vadd.f32 %v1174, %v1209
        %1211 = vdwg.mxu0
        %1212 = vmatpush.bf16.msra.mxu0 0
        %1213 = vmatpush.bf16.msra.mxu0 0
        %1214 = vmatpush.bf16.msra.mxu0 0
        %1215 = vmatpush.bf16.msra.mxu0 0
        %1216 = vmatpush.bf16.msra.mxu0 0
        %1217 = vmatpush.bf16.msra.mxu0 0
        %1218 = vmatpush.bf16.msra.mxu0 0
        %1219 = vmatpush.bf16.msra.mxu0 %v1145
        %1220 = vmatmul.bf16.gmra.mxu0 %v1188
        %v1221 = vpop.f32.mrf.mxu0
        %v1222 = vadd.f32 %v1159, %v1221
        %v1223 = vpop.f32.mrf.mxu0
        %v1224 = vadd.f32 %v1164, %v1223
        %1225 = vmatmul.bf16.gmra.mxu0 %v1191
        %v1226 = vpop.f32.mrf.mxu0
        %v1227 = vadd.f32 %v1169, %v1226
        %v1228 = vpop.f32.mrf.mxu0
        %v1229 = vadd.f32 %v1174, %v1228
        %1230 = vdwg.mxu0
        %1231 = vmatpush.bf16.msra.mxu0 0
        %1232 = vmatpush.bf16.msra.mxu0 0
        %1233 = vmatpush.bf16.msra.mxu0 0
        %1234 = vmatpush.bf16.msra.mxu0 0
        %1235 = vmatpush.bf16.msra.mxu0 0
        %1236 = vmatpush.bf16.msra.mxu0 0
        %1237 = vmatpush.bf16.msra.mxu0 0
        %1238 = vmatpush.bf16.msra.mxu0 %v1146
        %1239 = vmatmul.bf16.gmra.mxu0 %v1188
        %v1240 = vpop.f32.mrf.mxu0
        %v1241 = vadd.f32 %v1159, %v1240
        %v1242 = vpop.f32.mrf.mxu0
        %v1243 = vadd.f32 %v1164, %v1242
        %1244 = vmatmul.bf16.gmra.mxu0 %v1191
        %v1245 = vpop.f32.mrf.mxu0
        %v1246 = vadd.f32 %v1169, %v1245
        %v1247 = vpop.f32.mrf.mxu0
        %v1248 = vadd.f32 %v1174, %v1247
        %1249 = vdwg.mxu0
        %1250 = vmatpush.bf16.msra.mxu0 0
        %1251 = vmatpush.bf16.msra.mxu0 0
        %1252 = vmatpush.bf16.msra.mxu0 0
        %1253 = vmatpush.bf16.msra.mxu0 0
        %1254 = vmatpush.bf16.msra.mxu0 0
        %1255 = vmatpush.bf16.msra.mxu0 0
        %1256 = vmatpush.bf16.msra.mxu0 0
        %1257 = vmatpush.bf16.msra.mxu0 %v1147
        %1258 = vmatmul.bf16.gmra.mxu0 %v1188
        %v1259 = vpop.f32.mrf.mxu0
        %v1260 = vadd.f32 %v1159, %v1259
        %v1261 = vpop.f32.mrf.mxu0
        %v1262 = vadd.f32 %v1164, %v1261
        %1263 = vmatmul.bf16.gmra.mxu0 %v1191
        %v1264 = vpop.f32.mrf.mxu0
        %v1265 = vadd.f32 %v1169, %v1264
        %v1266 = vpop.f32.mrf.mxu0
        %v1267 = vadd.f32 %v1174, %v1266
        %1268 = vdwg.mxu0
        %v1269 = vadd.f32 %v1203, %v995
        %v1270 = vadd.f32 %v1222, %v996
        %v1271 = vadd.f32 %v1241, %v997
        %v1272 = vadd.f32 %v1260, %v998
        %v1273 = vadd.f32 %v1205, %v999
        %v1274 = vadd.f32 %v1224, %v1000
        %v1275 = vadd.f32 %v1243, %v1001
        %v1276 = vadd.f32 %v1262, %v1002
        %v1277 = vadd.f32 %v1208, %v1003
        %v1278 = vadd.f32 %v1227, %v1004
        %v1279 = vadd.f32 %v1246, %v1005
        %v1280 = vadd.f32 %v1265, %v1006
        %v1281 = vadd.f32 %v1210, %v1007
        %v1282 = vadd.f32 %v1229, %v1008
        %v1283 = vadd.f32 %v1248, %v1009
        %v1284 = vadd.f32 %v1267, %v1010
        %v1285 = vld [vmem:[#allocation5] sm:$0xff]
        %v1286 = vld [vmem:[#allocation5 + $0x8] sm:$0xff]
        %v1287 = vld [vmem:[#allocation5 + $0x10] sm:$0xff]
        %v1288 = vld [vmem:[#allocation5 + $0x18] sm:$0xff]
        %1290 = vset.pattern.permute.xlu0 0
        %1291 = vperm.xlu0 %1290, %v1285
        %v1292 = vpop.permute.xlu0 %1291
        %1295 = vset.pattern.permute.xlu0 0
        %1296 = vperm.xlu0 %1295, %v1286
        %v1297 = vpop.permute.xlu0 %1296
        %1300 = vset.pattern.permute.xlu0 0
        %1301 = vperm.xlu0 %1300, %v1287
        %v1302 = vpop.permute.xlu0 %1301
        %1305 = vset.pattern.permute.xlu0 0
        %1306 = vperm.xlu0 %1305, %v1288
        %v1307 = vpop.permute.xlu0 %1306
        %v1309 = vmul.f32 %v1269, %v1292
        %v1310 = vmul.f32 %v1270, %v1292
        %v1311 = vmul.f32 %v1271, %v1292
        %v1312 = vmul.f32 %v1272, %v1292
        %v1313 = vmul.f32 %v1273, %v1297
        %v1314 = vmul.f32 %v1274, %v1297
        %v1315 = vmul.f32 %v1275, %v1297
        %v1316 = vmul.f32 %v1276, %v1297
        %v1317 = vmul.f32 %v1277, %v1302
        %v1318 = vmul.f32 %v1278, %v1302
        %v1319 = vmul.f32 %v1279, %v1302
        %v1320 = vmul.f32 %v1280, %v1302
        %v1321 = vmul.f32 %v1281, %v1307
        %v1322 = vmul.f32 %v1282, %v1307
        %v1323 = vmul.f32 %v1283, %v1307
        %v1324 = vmul.f32 %v1284, %v1307
        %1325 = vst [vmem:[%s549] sm:$0xff] %v1309
        %1326 = vst [vmem:[%s549 + $0x8] sm:$0xff] %v1310
        %1327 = vst [vmem:[%s549 + $0x10] sm:$0xff] %v1311
        %1328 = vst [vmem:[%s549 + $0x18] sm:$0xff] %v1312
        %1329 = vst [vmem:[%s549 + $0x20] sm:$0xff] %v1313
        %1330 = vst [vmem:[%s549 + $0x28] sm:$0xff] %v1314
        %1331 = vst [vmem:[%s549 + $0x30] sm:$0xff] %v1315
        %1332 = vst [vmem:[%s549 + $0x38] sm:$0xff] %v1316
        %1333 = vst [vmem:[%s549 + $0x40] sm:$0xff] %v1317
        %1334 = vst [vmem:[%s549 + $0x48] sm:$0xff] %v1318
        %1335 = vst [vmem:[%s549 + $0x50] sm:$0xff] %v1319
        %1336 = vst [vmem:[%s549 + $0x58] sm:$0xff] %v1320
        %1337 = vst [vmem:[%s549 + $0x60] sm:$0xff] %v1321
        %1338 = vst [vmem:[%s549 + $0x68] sm:$0xff] %v1322
        %1339 = vst [vmem:[%s549 + $0x70] sm:$0xff] %v1323
        %1340 = vst [vmem:[%s549 + $0x78] sm:$0xff] %v1324
        %v1341 = vld [vmem:[#allocation4] sm:$0xff]
        %v1342 = vld [vmem:[#allocation4 + $0x8] sm:$0xff]
        %1343 = vmatpush.bf16.xpose.msra.mxu0 0
        %1344 = vmatpush.bf16.xpose.msra.mxu0 0
        %1345 = vmatpush.bf16.xpose.msra.mxu0 0
        %1346 = vmatpush.bf16.xpose.msra.mxu0 0
        %1347 = vmatpush.bf16.xpose.msra.mxu0 0
        %1348 = vmatpush.bf16.xpose.msra.mxu0 0
        %1349 = vmatpush.bf16.xpose.msra.mxu0 0
        %1350 = vmatpush.bf16.xpose.msra.mxu0 %v1144
        %1351 = vmatmul.bf16.gmra.mxu0 %v1140
        %v1352 = vpop.f32.mrf.mxu0
        %v1353 = vadd.f32 0.0, %v1352
        %v1354 = vpop.f32.mrf.mxu0
        %v1355 = vadd.f32 0.0, %v1354
        %1356 = vdwg.mxu0
        %1357 = vmatpush.bf16.xpose.msra.mxu0 0
        %1358 = vmatpush.bf16.xpose.msra.mxu0 0
        %1359 = vmatpush.bf16.xpose.msra.mxu0 0
        %1360 = vmatpush.bf16.xpose.msra.mxu0 0
        %1361 = vmatpush.bf16.xpose.msra.mxu0 0
        %1362 = vmatpush.bf16.xpose.msra.mxu0 0
        %1363 = vmatpush.bf16.xpose.msra.mxu0 0
        %1364 = vmatpush.bf16.xpose.msra.mxu0 %v1145
        %1365 = vmatmul.bf16.gmra.mxu0 %v1141
        %v1366 = vpop.f32.mrf.mxu0
        %v1367 = vadd.f32 %v1353, %v1366
        %v1368 = vpop.f32.mrf.mxu0
        %v1369 = vadd.f32 %v1355, %v1368
        %1370 = vdwg.mxu0
        %1371 = vmatpush.bf16.xpose.msra.mxu0 0
        %1372 = vmatpush.bf16.xpose.msra.mxu0 0
        %1373 = vmatpush.bf16.xpose.msra.mxu0 0
        %1374 = vmatpush.bf16.xpose.msra.mxu0 0
        %1375 = vmatpush.bf16.xpose.msra.mxu0 0
        %1376 = vmatpush.bf16.xpose.msra.mxu0 0
        %1377 = vmatpush.bf16.xpose.msra.mxu0 0
        %1378 = vmatpush.bf16.xpose.msra.mxu0 %v1146
        %1379 = vmatmul.bf16.gmra.mxu0 %v1142
        %v1380 = vpop.f32.mrf.mxu0
        %v1381 = vadd.f32 %v1367, %v1380
        %v1382 = vpop.f32.mrf.mxu0
        %v1383 = vadd.f32 %v1369, %v1382
        %1384 = vdwg.mxu0
        %1385 = vmatpush.bf16.xpose.msra.mxu0 0
        %1386 = vmatpush.bf16.xpose.msra.mxu0 0
        %1387 = vmatpush.bf16.xpose.msra.mxu0 0
        %1388 = vmatpush.bf16.xpose.msra.mxu0 0
        %1389 = vmatpush.bf16.xpose.msra.mxu0 0
        %1390 = vmatpush.bf16.xpose.msra.mxu0 0
        %1391 = vmatpush.bf16.xpose.msra.mxu0 0
        %1392 = vmatpush.bf16.xpose.msra.mxu0 %v1147
        %1393 = vmatmul.bf16.gmra.mxu0 %v1143
        %v1394 = vpop.f32.mrf.mxu0
        %v1395 = vadd.f32 %v1381, %v1394
        %v1396 = vpop.f32.mrf.mxu0
        %v1397 = vadd.f32 %v1383, %v1396
        %1398 = vdwg.mxu0
        %v1399 = vadd.f32 %v1341, %v1395
        %v1400 = vadd.f32 %v1342, %v1397
        %1401 = vst.msk [vmem:[#allocation4] sm:$0xff] %vm1186, %v1399
        %1402 = vst.msk [vmem:[#allocation4 + $0x8] sm:$0xff] %vm1186, %v1400
        %p1403 = scmp.eq.s32.totalorder %s39, 1
        // Predicated region
        $region85: #{tpu_custom_call.1} parent=75 // pred_check
          %p1404 = pneg %p1403
        $region86: #{tpu_custom_call.1} parent=75 // pred_check_branch
          %1406 = sbr.rel (%p1404) target = $region88
        $region87: #{tpu_custom_call.1} parent=75 // pred_region
          %v1407 = vld [vmem:[%s6] sm:$0xf]
          %v1408 = vld [vmem:[%s6 + $0x4] sm:$0xf]
          %v1409 = vld [vmem:[%s6 + $0x8] sm:$0xf]
          %v1410 = vld [vmem:[%s6 + $0xc] sm:$0xf]
          %v1411 = vld [vmem:[#allocation4] sm:$0xff]
          %v1412 = vld [vmem:[#allocation4 + $0x8] sm:$0xff]
          %v1413 = vpack.c.bf16 %v1412, %v1411
          %v1418 = vunpack.c.l.b16 %v1407
          %v1419 = vunpack.c.l.b16 %v1408
          %v1420 = vunpack.c.l.b16 %v1409
          %v1421 = vunpack.c.l.b16 %v1410
          %v1422 = vpack.c.b16 %v1419, %v1418
          %v1423 = vpack.c.b16 %v1421, %v1420
          %v1425 = vsel %vm1186, %v1422, 0
          %v1428 = vsel %vm1186, %v1423, 0
          %1430 = vmatpush.bf16.msra.mxu0 0
          %1431 = vmatpush.bf16.msra.mxu0 0
          %1432 = vmatpush.bf16.msra.mxu0 0
          %1433 = vmatpush.bf16.msra.mxu0 0
          %1434 = vmatpush.bf16.msra.mxu0 0
          %1435 = vmatpush.bf16.msra.mxu0 0
          %1436 = vmatpush.bf16.msra.mxu0 0
          %1437 = vmatpush.bf16.msra.mxu0 %v1413
          %1438 = vmatmul.bf16.gmra.mxu0 %v1425
          %v1439 = vpop.f32.mrf.mxu0
          %v1440 = vadd.f32 0.0, %v1439
          %v1441 = vpop.f32.mrf.mxu0
          %v1442 = vadd.f32 0.0, %v1441
          %1443 = vmatmul.bf16.gmra.mxu0 %v1428
          %v1444 = vpop.f32.mrf.mxu0
          %v1445 = vadd.f32 0.0, %v1444
          %v1446 = vpop.f32.mrf.mxu0
          %v1447 = vadd.f32 0.0, %v1446
          %1448 = vdwg.mxu0
          %v1449 = vpack.c.bf16 %v1442, %v1440
          %v1450 = vpack.c.bf16 %v1447, %v1445
          %v1451 = vld [vmem:[#allocation2] sm:$0xff]
          %v1452 = vld [vmem:[#allocation2 + $0x8] sm:$0xff]
          %v1453 = vld [vmem:[%s7] sm:$0xff]
          %v1454 = vld [vmem:[%s7 + $0x8] sm:$0xff]
          %v1455 = vld [vmem:[%s7 + $0x10] sm:$0xff]
          %v1456 = vld [vmem:[%s7 + $0x18] sm:$0xff]
          %1458 = vset.pattern.permute.xlu0 0
          %1459 = vperm.xlu0 %1458, %v1453
          %v1460 = vpop.permute.xlu0 %1459
          %1463 = vset.pattern.permute.xlu0 0
          %1464 = vperm.xlu0 %1463, %v1454
          %v1465 = vpop.permute.xlu0 %1464
          %1468 = vset.pattern.permute.xlu0 0
          %1469 = vperm.xlu0 %1468, %v1455
          %v1470 = vpop.permute.xlu0 %1469
          %1473 = vset.pattern.permute.xlu0 0
          %1474 = vperm.xlu0 %1473, %v1456
          %v1475 = vpop.permute.xlu0 %1474
          %v1479 = vunpack.c.l.b16 %v1451
          %v1480 = vunpack.c.h.b16 %v1451
          %v1481 = vunpack.c.l.b16 %v1452
          %v1482 = vunpack.c.h.b16 %v1452
          %v1483 = vpack.c.b16 %v1481, %v1479
          %v1484 = vpack.c.b16 %v1482, %v1480
          %v1488 = vsel %vm1186, %v1449, 0
          %v1491 = vsel %vm1186, %v1450, 0
          %1493 = vmatpush.bf16.msra.mxu0 0
          %1494 = vmatpush.bf16.msra.mxu0 0
          %1495 = vmatpush.bf16.msra.mxu0 0
          %1496 = vmatpush.bf16.msra.mxu0 0
          %1497 = vmatpush.bf16.msra.mxu0 0
          %1498 = vmatpush.bf16.msra.mxu0 0
          %1499 = vmatpush.bf16.msra.mxu0 0
          %1500 = vmatpush.bf16.msra.mxu0 %v1483
          %1501 = vmatmul.bf16.gmra.mxu0 %v1488
          %v1502 = vpop.f32.mrf.mxu0
          %v1503 = vadd.f32 %v1460, %v1502
          %v1504 = vpop.f32.mrf.mxu0
          %v1505 = vadd.f32 %v1465, %v1504
          %1506 = vmatmul.bf16.gmra.mxu0 %v1491
          %v1507 = vpop.f32.mrf.mxu0
          %v1508 = vadd.f32 %v1470, %v1507
          %v1509 = vpop.f32.mrf.mxu0
          %v1510 = vadd.f32 %v1475, %v1509
          %1511 = vdwg.mxu0
          %1512 = vmatpush.bf16.msra.mxu0 0
          %1513 = vmatpush.bf16.msra.mxu0 0
          %1514 = vmatpush.bf16.msra.mxu0 0
          %1515 = vmatpush.bf16.msra.mxu0 0
          %1516 = vmatpush.bf16.msra.mxu0 0
          %1517 = vmatpush.bf16.msra.mxu0 0
          %1518 = vmatpush.bf16.msra.mxu0 0
          %1519 = vmatpush.bf16.msra.mxu0 %v1484
          %1520 = vmatmul.bf16.gmra.mxu0 %v1488
          %v1521 = vpop.f32.mrf.mxu0
          %v1522 = vadd.f32 %v1460, %v1521
          %v1523 = vpop.f32.mrf.mxu0
          %v1524 = vadd.f32 %v1465, %v1523
          %1525 = vmatmul.bf16.gmra.mxu0 %v1491
          %v1526 = vpop.f32.mrf.mxu0
          %v1527 = vadd.f32 %v1470, %v1526
          %v1528 = vpop.f32.mrf.mxu0
          %v1529 = vadd.f32 %v1475, %v1528
          %1530 = vdwg.mxu0
          %v1531 = vld [vmem:[%s557] sm:$0xff]
          %v1532 = vld [vmem:[%s557 + $0x8] sm:$0xff]
          %v1533 = vld [vmem:[%s557 + $0x10] sm:$0xff]
          %v1534 = vld [vmem:[%s557 + $0x18] sm:$0xff]
          %v1535 = vld [vmem:[%s557 + $0x20] sm:$0xff]
          %v1536 = vld [vmem:[%s557 + $0x28] sm:$0xff]
          %v1537 = vld [vmem:[%s557 + $0x30] sm:$0xff]
          %v1538 = vld [vmem:[%s557 + $0x38] sm:$0xff]
          %v1539 = vadd.f32 %v1503, %v1531
          %v1540 = vadd.f32 %v1522, %v1532
          %v1541 = vadd.f32 %v1505, %v1533
          %v1542 = vadd.f32 %v1524, %v1534
          %v1543 = vadd.f32 %v1508, %v1535
          %v1544 = vadd.f32 %v1527, %v1536
          %v1545 = vadd.f32 %v1510, %v1537
          %v1546 = vadd.f32 %v1529, %v1538
          %v1547 = vld [vmem:[#allocation5] sm:$0xff]
          %v1548 = vld [vmem:[#allocation5 + $0x8] sm:$0xff]
          %v1549 = vld [vmem:[#allocation5 + $0x10] sm:$0xff]
          %v1550 = vld [vmem:[#allocation5 + $0x18] sm:$0xff]
          %1552 = vset.pattern.permute.xlu0 0
          %1553 = vperm.xlu0 %1552, %v1547
          %v1554 = vpop.permute.xlu0 %1553
          %1557 = vset.pattern.permute.xlu0 0
          %1558 = vperm.xlu0 %1557, %v1548
          %v1559 = vpop.permute.xlu0 %1558
          %1562 = vset.pattern.permute.xlu0 0
          %1563 = vperm.xlu0 %1562, %v1549
          %v1564 = vpop.permute.xlu0 %1563
          %1567 = vset.pattern.permute.xlu0 0
          %1568 = vperm.xlu0 %1567, %v1550
          %v1569 = vpop.permute.xlu0 %1568
          %v1571 = vmul.f32 %v1539, %v1554
          %v1572 = vmul.f32 %v1540, %v1554
          %v1573 = vmul.f32 %v1541, %v1559
          %v1574 = vmul.f32 %v1542, %v1559
          %v1575 = vmul.f32 %v1543, %v1564
          %v1576 = vmul.f32 %v1544, %v1564
          %v1577 = vmul.f32 %v1545, %v1569
          %v1578 = vmul.f32 %v1546, %v1569
          %1579 = vst [vmem:[#allocation10] sm:$0xff] %v1571
          %1580 = vst [vmem:[#allocation10 + $0x8] sm:$0xff] %v1572
          %1581 = vst [vmem:[#allocation10 + $0x10] sm:$0xff] %v1573
          %1582 = vst [vmem:[#allocation10 + $0x18] sm:$0xff] %v1574
          %1583 = vst [vmem:[#allocation10 + $0x20] sm:$0xff] %v1575
          %1584 = vst [vmem:[#allocation10 + $0x28] sm:$0xff] %v1576
          %1585 = vst [vmem:[#allocation10 + $0x30] sm:$0xff] %v1577
          %1586 = vst [vmem:[#allocation10 + $0x38] sm:$0xff] %v1578
        $region88: #{tpu_custom_call.1} parent=75 // pred_fallthru
          _
        %s1587 = sand.u32 %s362, 1
        %s1588 = scalar_lea.sflag [#allocation8], %s1587
        %s1589 = sand.u32 %s362, 1
        %s1590 = smul.addr %s1589, 128
        %s1591 = scalar_lea.vmem [#allocation9], %s1590
        // Predicated region
        $region89: #{tpu_custom_call.1} parent=75 // pred_check
          %p1592 = pneg %p372
        $region90: #{tpu_custom_call.1} parent=75 // pred_check_branch
          %1594 = sbr.rel (%p1592) target = $region92
        $region91: #{tpu_custom_call.1} parent=75 // pred_region
          %s1595 = smul.u32 4, %s39
          %1597 = vsyncadd %s1588, 0
          %s1598 = smul.addr %s38, 32
          %s1599 = sadd.s32 %s1595, %s1598
          %s1600 = smul.addr %s1599, 8
          %s1601 = scalar_lea.hbm %s14, %s1600
          %s1602 = sshll.u32 %s1591, 4
          %s1603 = int_to_ptr.vmem [resolvable:$true] %s1602
          %s1604 = sshll.u32 %s1601, 4
          %s1605 = int_to_ptr.hbm [resolvable:$true] %s1604
          %1610 = dma.vmem_to_hbm [thread:$0]  %s1603, 2048, %s1605, %s1588, 512, 1024, 32
        $region92: #{tpu_custom_call.1} parent=75 // pred_fallthru
          _
        // Predicated region
        $region93: #{tpu_custom_call.1} parent=75 // pred_check
          %p1611 = pneg %p398
        $region94: #{tpu_custom_call.1} parent=75 // pred_check_branch
          %1613 = sbr.rel (%p1611) target = $region96
        $region95: #{tpu_custom_call.1} parent=75 // pred_region
          %1615 = vsyncadd [#allocation11], 0
          %s1616 = smul.addr %s38, 8
          %s1617 = smul.addr %s1616, 8
          %s1618 = scalar_lea.hbm %s15, %s1617
          %s1619 = sshll.u32 [#allocation10], 4
          %s1620 = int_to_ptr.vmem [resolvable:$true] %s1619
          %s1621 = sshll.u32 %s1618, 4
          %s1622 = int_to_ptr.hbm [resolvable:$true] %s1621
          %1627 = dma.vmem_to_hbm [thread:$0]  %s1620, 1024, %s1622, [#allocation11], 256, 256, 16
        $region96: #{tpu_custom_call.1} parent=75 // pred_fallthru
          _
        // Predicated region
        $region97: #{tpu_custom_call.1} parent=75 // pred_check
          %p1628 = pneg %p398
        $region98: #{tpu_custom_call.1} parent=75 // pred_check_branch
          %1630 = sbr.rel (%p1628) target = $region100
        $region99: #{tpu_custom_call.1} parent=75 // pred_region
          %1632 = dma.done [#allocation11], 1024
        $region100: #{tpu_custom_call.1} parent=75 // pred_fallthru
          _
      $region76: #{tpu_custom_call.1} parent=5 // pred_fallthru
        _
      %p1633 = scmp.le.s32.totalorder 2, %s29
      // Predicated region
      $region101: #{tpu_custom_call.1} parent=5 // pred_check
        %p1634 = pneg %p1633
      $region102: #{tpu_custom_call.1} parent=5 // pred_check_branch
        %1636 = sbr.rel (%p1634) target = $region104
      $region103: #{tpu_custom_call.1} parent=5 // pred_region
        %s1637 = ssub.s32 %s29, 2
        // Predicated region
        $region105: #{tpu_custom_call.1} parent=103 // pred_check
          %p1638 = pneg %p378
        $region106: #{tpu_custom_call.1} parent=103 // pred_check_branch
          %1640 = sbr.rel (%p1638) target = $region108
        $region107: #{tpu_custom_call.1} parent=103 // pred_region
          %s1641 = sand.u32 %s363, 1
          %s1642 = scalar_lea.sflag [#allocation8], %s1641
          %s1643 = sand.u32 %s363, 1
          %s1644 = smul.addr %s1643, 128
          %s1645 = scalar_lea.vmem [#allocation9], %s1644
          %1647 = dma.done %s1642, 2048
        $region108: #{tpu_custom_call.1} parent=103 // pred_fallthru
          _
      $region104: #{tpu_custom_call.1} parent=5 // pred_fallthru
        _
    $region6: #{tpu_custom_call.1} parent=1 // loop_footer
      %s33 = sadd.s32 1, %s29
    $region7: #{tpu_custom_call.1} parent=1 // loop_footer_branch
      %28 = sbr.rel target = $region3
    $region8: #{tpu_custom_call.1} parent=1 // loop_exit
      _
    %1648 = vsyncpa [#allocation7], 1
    %s1649 = scalar_lea.sflag [#allocation7], 1
    %1650 = vsyncpa %s1649, 1
    %1651 = vsyncpa [#allocation8], 1
    %s1652 = scalar_lea.sflag [#allocation8], 1
    %1653 = vsyncpa %s1652, 1
    %1654 = vsyncpa [#allocation11], 1

// kernel: tpu_custom_call.1
$region0: #{tpu_custom_call.1}
  #allocation0 [shape = 'u32[]', space=smem, size = 0x4, offset = 0x4, fixed_abs, tag = 'smem constant byte address 0x4 - core index']
  #allocation1 [shape = 'u32[72,128]{1,0:T(1,128)}', space=vmem, size = 0x9000, scoped, tag = 'internal scratch']
  #allocation2 [shape = 'bf16[16,256]{1,0:T(8,128)(2,1)}', space=vmem, size = 0x2000, scoped, tag = 'scratch operand']
  #allocation3 [shape = 'bf16[32,16]{1,0:T(8,128)(2,1)}', space=vmem, size = 0x2000, scoped, tag = 'scratch operand']
  #allocation4 [shape = 'f32[16,16]{1,0:T(8,128)}', space=vmem, size = 0x2000, scoped, tag = 'scratch operand']
  #allocation5 [shape = 'f32[32,1]{1,0:T(8,128)}', space=vmem, size = 0x4000, scoped, tag = 'scratch operand']
  %s0 = inlined_call_operand.hbm [shape: f32[2,32,1024], index: 0, kind: input, shape index: {}]
  %s1 = inlined_call_operand.vmem [shape: f32[2,32,256], index: 1, kind: input, shape index: {}]
  %s2 = inlined_call_operand.vmem [shape: bf16[32,32], index: 2, kind: input, shape index: {}]
  %s3 = inlined_call_operand.vmem [shape: f32[32,1], index: 3, kind: input, shape index: {}]
  %s4 = inlined_call_operand.vmem [shape: bf16[32,32], index: 4, kind: input, shape index: {}]
  %s5 = inlined_call_operand.vmem [shape: f32[32,1], index: 5, kind: input, shape index: {}]
  %s6 = inlined_call_operand.vmem [shape: bf16[32,16], index: 6, kind: input, shape index: {}]
  %s7 = inlined_call_operand.vmem [shape: f32[32,1], index: 7, kind: input, shape index: {}]
  %s8 = inlined_call_operand.vmem [shape: bf16[32,16], index: 8, kind: input, shape index: {}]
  %s9 = inlined_call_operand.vmem [shape: f32[32,1], index: 9, kind: input, shape index: {}]
  %s10 = inlined_call_operand.vmem [shape: f32[2,32], index: 10, kind: input, shape index: {}]
  %s11 = inlined_call_operand.vmem [shape: f32[2,1], index: 11, kind: input, shape index: {}]
  %s12 = inlined_call_operand.vmem [shape: f32[32,2], index: 12, kind: input, shape index: {}]
  %s13 = inlined_call_operand.vmem [shape: f32[32,1], index: 13, kind: input, shape index: {}]
  %s14 = inlined_call_operand.hbm [shape: f32[2,32,1024], index: 14, kind: output, shape index: {0}]
  %s15 = inlined_call_operand.hbm [shape: f32[2,32,256], index: 15, kind: output, shape index: {1}]
  %16 = xla_tuple %s14, %s15
  %s17 = sld [smem:[#allocation0]]
  $region109: #{tpu_custom_call.1} parent=0
    _
  %s19 = ssub.s32 1, %s17
  %s20 = scalar_select 0, %s19, %s17
  $region1: #{tpu_custom_call.1} parent=0
    #allocation6 [shape = 'u8[131072]{0}', space=vmem, size = 0x20000, scoped, tag = 'input window, operand 0']
    #allocation7 [shape = 's32[2]{0}', space=sflag, size = 0x8, scoped, tag = 'scoped memory for tpu_custom_call.1']
    #allocation8 [shape = 's32[2]{0}', space=sflag, size = 0x8, scoped, tag = 'scoped memory for tpu_custom_call.1']
    #allocation9 [shape = 'u8[131072]{0}', space=vmem, size = 0x20000, scoped, tag = 'output window, operand 0']
    #allocation10 [shape = 'u8[65536]{0}', space=vmem, size = 0x10000, scoped, tag = 'output window, operand 1']
    #allocation11 [shape = 's32[2]{0}', space=sflag, size = 0x8, scoped, tag = 'scoped memory for tpu_custom_call.1']
    %21 = vsyncpa [#allocation7], 0
    %s22 = scalar_lea.sflag [#allocation7], 1
    %23 = vsyncpa %s22, 0
    %24 = vsyncpa [#allocation8], 0
    %s25 = scalar_lea.sflag [#allocation8], 1
    %26 = vsyncpa %s25, 0
    %27 = vsyncpa [#allocation11], 0
    %s28 = scalar_lea.sflag [#allocation11], 1
    %29 = vsyncpa %s28, 0
    loop: start=0, step=1, limit=6
    $region2: #{tpu_custom_call.1} parent=1 // loop_pre_header
      _
    $region3: #{tpu_custom_call.1} parent=1 // loop_header
      %s31 = sphi 0, %s35
      %p32 = scmp.ge.s32.totalorder %s31, 6
      %s38 = sphi 0, %s50
      %s39 = sphi 0, %s46
      %s40 = sphi 0, %s38
      %s41 = sphi 0, %s39
      %s42 = sphi 0, %s40
      %s43 = sphi 0, %s41
      %s55 = sphi 0, %s57
      %s58 = sphi 0, %s55
      %s59 = sphi 0, %s58
      %s75 = sphi 0, %s59
      %s81 = sphi 0, %s83
      %s84 = sphi 0, %s81
      %s85 = sphi 0, %s84
      %s101 = sphi 0, %s85
      %s105 = sphi 0, %s105
      %s107 = sphi 0, %s105
      %s108 = sphi 0, %s107
      %s122 = sphi 0, %s108
      %s126 = sphi 0, %s126
      %s128 = sphi 0, %s126
      %s129 = sphi 0, %s128
      %s143 = sphi 0, %s129
      %s147 = sphi 0, %s147
      %s149 = sphi 0, %s147
      %s150 = sphi 0, %s149
      %s164 = sphi 0, %s150
      %s168 = sphi 0, %s168
      %s170 = sphi 0, %s168
      %s171 = sphi 0, %s170
      %s185 = sphi 0, %s171
      %s189 = sphi 0, %s189
      %s191 = sphi 0, %s189
      %s192 = sphi 0, %s191
      %s206 = sphi 0, %s192
      %s210 = sphi 0, %s210
      %s212 = sphi 0, %s210
      %s213 = sphi 0, %s212
      %s227 = sphi 0, %s213
      %s231 = sphi 0, %s231
      %s233 = sphi 0, %s231
      %s234 = sphi 0, %s233
      %s248 = sphi 0, %s234
      %s252 = sphi 0, %s252
      %s254 = sphi 0, %s252
      %s255 = sphi 0, %s254
      %s269 = sphi 0, %s255
      %s273 = sphi 0, %s273
      %s275 = sphi 0, %s273
      %s276 = sphi 0, %s275
      %s290 = sphi 0, %s276
      %s294 = sphi 0, %s294
      %s296 = sphi 0, %s294
      %s297 = sphi 0, %s296
      %s311 = sphi 0, %s297
      %s315 = sphi 0, %s315
      %s317 = sphi 0, %s315
      %s318 = sphi 0, %s317
      %s332 = sphi 0, %s318
      %s336 = sphi 0, %s336
      %s338 = sphi 0, %s336
      %s339 = sphi 0, %s338
      %s353 = sphi 0, %s339
      %s361 = sphi 0, %s363
      %s364 = sphi 0, %s361
      %s365 = sphi 0, %s364
      %s381 = sphi 0, %s365
      %s387 = sphi 0, %s389
      %s390 = sphi 0, %s387
      %s391 = sphi 0, %s390
      %s407 = sphi 0, %s391
    $region4: #{tpu_custom_call.1} parent=1 // loop_header_branch
      %34 = sbr.rel (%p32) target = $region8
    $region5: #{tpu_custom_call.1} parent=1 // loop_body
      %s36 = ssub.s32 %s31, 1
      %s37 = ssub.s32 %s31, 2
      %s44 = sadd.s32 1, %s39
      %p45 = scmp.ge.s32.totalorder %s44, 2
      %s46 = scalar_select %p45, 0, %s44
      %s47 = sadd.s32 1, %s38
      %s48 = scalar_select %p45, %s47, %s38
      %p49 = scmp.ge.s32.totalorder %s48, 2
      %s50 = scalar_select %p49, 0, %s48
      %s51 = ssub.s32 %s38, %s50
      %s52 = ssub.s32 %s39, %s46
      %s53 = sor.u32 %s51, %s52
      %p54 = scmp.eq.s32.totalorder %s53, 0
      %s56 = sadd.s32 %s55, 1
      %s57 = scalar_select %p54, %s55, %s56
      %p60 = pneg %p54
      %p61 = scmp.eq.s32.totalorder %s31, 3
      %p62 = por %p60, %p61
      %p63 = scmp.ne.s32.totalorder %s55, %s58
      %p64 = scmp.eq.s32.totalorder %s31, 0
      %p65 = por %p63, %p64
      %p66 = scmp.ne.s32.totalorder %s55, %s58
      %p67 = scmp.eq.s32.totalorder %s36, 3
      %p68 = por %p66, %p67
      %p69 = scmp.ne.s32.totalorder %s58, %s59
      %p70 = scmp.eq.s32.totalorder %s36, 0
      %p71 = por %p69, %p70
      %p72 = scmp.ne.s32.totalorder %s58, %s59
      %p73 = scmp.eq.s32.totalorder %s37, 3
      %p74 = por %p72, %p73
      %p76 = scmp.ne.s32.totalorder %s59, %s75
      %p77 = scmp.eq.s32.totalorder %s37, 0
      %p78 = por %p76, %p77
      %s79 = ssub.s32 %s38, %s50
      %p80 = scmp.eq.s32.totalorder %s79, 0
      %s82 = sadd.s32 %s81, 1
      %s83 = scalar_select %p80, %s81, %s82
      %p86 = pneg %p80
      %p87 = scmp.eq.s32.totalorder %s31, 3
      %p88 = por %p86, %p87
      %p89 = scmp.ne.s32.totalorder %s81, %s84
      %p90 = scmp.eq.s32.totalorder %s31, 0
      %p91 = por %p89, %p90
      %p92 = scmp.ne.s32.totalorder %s81, %s84
      %p93 = scmp.eq.s32.totalorder %s36, 3
      %p94 = por %p92, %p93
      %p95 = scmp.ne.s32.totalorder %s84, %s85
      %p96 = scmp.eq.s32.totalorder %s36, 0
      %p97 = por %p95, %p96
      %p98 = scmp.ne.s32.totalorder %s84, %s85
      %p99 = scmp.eq.s32.totalorder %s37, 3
      %p100 = por %p98, %p99
      %p102 = scmp.ne.s32.totalorder %s85, %s101
      %p103 = scmp.eq.s32.totalorder %s37, 0
      %p104 = por %p102, %p103
      %s106 = sadd.s32 %s105, 1
      %p109 = scmp.eq.s32.totalorder %s31, 3
      %p110 = scmp.ne.s32.totalorder %s105, %s107
      %p111 = scmp.eq.s32.totalorder %s31, 0
      %p112 = por %p110, %p111
      %p113 = scmp.ne.s32.totalorder %s105, %s107
      %p114 = scmp.eq.s32.totalorder %s36, 3
      %p115 = por %p113, %p114
      %p116 = scmp.ne.s32.totalorder %s107, %s108
      %p117 = scmp.eq.s32.totalorder %s36, 0
      %p118 = por %p116, %p117
      %p119 = scmp.ne.s32.totalorder %s107, %s108
      %p120 = scmp.eq.s32.totalorder %s37, 3
      %p121 = por %p119, %p120
      %p123 = scmp.ne.s32.totalorder %s108, %s122
      %p124 = scmp.eq.s32.totalorder %s37, 0
      %p125 = por %p123, %p124
      %s127 = sadd.s32 %s126, 1
      %p130 = scmp.eq.s32.totalorder %s31, 3
      %p131 = scmp.ne.s32.totalorder %s126, %s128
      %p132 = scmp.eq.s32.totalorder %s31, 0
      %p133 = por %p131, %p132
      %p134 = scmp.ne.s32.totalorder %s126, %s128
      %p135 = scmp.eq.s32.totalorder %s36, 3
      %p136 = por %p134, %p135
      %p137 = scmp.ne.s32.totalorder %s128, %s129
      %p138 = scmp.eq.s32.totalorder %s36, 0
      %p139 = por %p137, %p138
      %p140 = scmp.ne.s32.totalorder %s128, %s129
      %p141 = scmp.eq.s32.totalorder %s37, 3
      %p142 = por %p140, %p141
      %p144 = scmp.ne.s32.totalorder %s129, %s143
      %p145 = scmp.eq.s32.totalorder %s37, 0
      %p146 = por %p144, %p145
      %s148 = sadd.s32 %s147, 1
      %p151 = scmp.eq.s32.totalorder %s31, 3
      %p152 = scmp.ne.s32.totalorder %s147, %s149
      %p153 = scmp.eq.s32.totalorder %s31, 0
      %p154 = por %p152, %p153
      %p155 = scmp.ne.s32.totalorder %s147, %s149
      %p156 = scmp.eq.s32.totalorder %s36, 3
      %p157 = por %p155, %p156
      %p158 = scmp.ne.s32.totalorder %s149, %s150
      %p159 = scmp.eq.s32.totalorder %s36, 0
      %p160 = por %p158, %p159
      %p161 = scmp.ne.s32.totalorder %s149, %s150
      %p162 = scmp.eq.s32.totalorder %s37, 3
      %p163 = por %p161, %p162
      %p165 = scmp.ne.s32.totalorder %s150, %s164
      %p166 = scmp.eq.s32.totalorder %s37, 0
      %p167 = por %p165, %p166
      %s169 = sadd.s32 %s168, 1
      %p172 = scmp.eq.s32.totalorder %s31, 3
      %p173 = scmp.ne.s32.totalorder %s168, %s170
      %p174 = scmp.eq.s32.totalorder %s31, 0
      %p175 = por %p173, %p174
      %p176 = scmp.ne.s32.totalorder %s168, %s170
      %p177 = scmp.eq.s32.totalorder %s36, 3
      %p178 = por %p176, %p177
      %p179 = scmp.ne.s32.totalorder %s170, %s171
      %p180 = scmp.eq.s32.totalorder %s36, 0
      %p181 = por %p179, %p180
      %p182 = scmp.ne.s32.totalorder %s170, %s171
      %p183 = scmp.eq.s32.totalorder %s37, 3
      %p184 = por %p182, %p183
      %p186 = scmp.ne.s32.totalorder %s171, %s185
      %p187 = scmp.eq.s32.totalorder %s37, 0
      %p188 = por %p186, %p187
      %s190 = sadd.s32 %s189, 1
      %p193 = scmp.eq.s32.totalorder %s31, 3
      %p194 = scmp.ne.s32.totalorder %s189, %s191
      %p195 = scmp.eq.s32.totalorder %s31, 0
      %p196 = por %p194, %p195
      %p197 = scmp.ne.s32.totalorder %s189, %s191
      %p198 = scmp.eq.s32.totalorder %s36, 3
      %p199 = por %p197, %p198
      %p200 = scmp.ne.s32.totalorder %s191, %s192
      %p201 = scmp.eq.s32.totalorder %s36, 0
      %p202 = por %p200, %p201
      %p203 = scmp.ne.s32.totalorder %s191, %s192
      %p204 = scmp.eq.s32.totalorder %s37, 3
      %p205 = por %p203, %p204
      %p207 = scmp.ne.s32.totalorder %s192, %s206
      %p208 = scmp.eq.s32.totalorder %s37, 0
      %p209 = por %p207, %p208
      %s211 = sadd.s32 %s210, 1
      %p214 = scmp.eq.s32.totalorder %s31, 3
      %p215 = scmp.ne.s32.totalorder %s210, %s212
      %p216 = scmp.eq.s32.totalorder %s31, 0
      %p217 = por %p215, %p216
      %p218 = scmp.ne.s32.totalorder %s210, %s212
      %p219 = scmp.eq.s32.totalorder %s36, 3
      %p220 = por %p218, %p219
      %p221 = scmp.ne.s32.totalorder %s212, %s213
      %p222 = scmp.eq.s32.totalorder %s36, 0
      %p223 = por %p221, %p222
      %p224 = scmp.ne.s32.totalorder %s212, %s213
      %p225 = scmp.eq.s32.totalorder %s37, 3
      %p226 = por %p224, %p225
      %p228 = scmp.ne.s32.totalorder %s213, %s227
      %p229 = scmp.eq.s32.totalorder %s37, 0
      %p230 = por %p228, %p229
      %s232 = sadd.s32 %s231, 1
      %p235 = scmp.eq.s32.totalorder %s31, 3
      %p236 = scmp.ne.s32.totalorder %s231, %s233
      %p237 = scmp.eq.s32.totalorder %s31, 0
      %p238 = por %p236, %p237
      %p239 = scmp.ne.s32.totalorder %s231, %s233
      %p240 = scmp.eq.s32.totalorder %s36, 3
      %p241 = por %p239, %p240
      %p242 = scmp.ne.s32.totalorder %s233, %s234
      %p243 = scmp.eq.s32.totalorder %s36, 0
      %p244 = por %p242, %p243
      %p245 = scmp.ne.s32.totalorder %s233, %s234
      %p246 = scmp.eq.s32.totalorder %s37, 3
      %p247 = por %p245, %p246
      %p249 = scmp.ne.s32.totalorder %s234, %s248
      %p250 = scmp.eq.s32.totalorder %s37, 0
      %p251 = por %p249, %p250
      %s253 = sadd.s32 %s252, 1
      %p256 = scmp.eq.s32.totalorder %s31, 3
      %p257 = scmp.ne.s32.totalorder %s252, %s254
      %p258 = scmp.eq.s32.totalorder %s31, 0
      %p259 = por %p257, %p258
      %p260 = scmp.ne.s32.totalorder %s252, %s254
      %p261 = scmp.eq.s32.totalorder %s36, 3
      %p262 = por %p260, %p261
      %p263 = scmp.ne.s32.totalorder %s254, %s255
      %p264 = scmp.eq.s32.totalorder %s36, 0
      %p265 = por %p263, %p264
      %p266 = scmp.ne.s32.totalorder %s254, %s255
      %p267 = scmp.eq.s32.totalorder %s37, 3
      %p268 = por %p266, %p267
      %p270 = scmp.ne.s32.totalorder %s255, %s269
      %p271 = scmp.eq.s32.totalorder %s37, 0
      %p272 = por %p270, %p271
      %s274 = sadd.s32 %s273, 1
      %p277 = scmp.eq.s32.totalorder %s31, 3
      %p278 = scmp.ne.s32.totalorder %s273, %s275
      %p279 = scmp.eq.s32.totalorder %s31, 0
      %p280 = por %p278, %p279
      %p281 = scmp.ne.s32.totalorder %s273, %s275
      %p282 = scmp.eq.s32.totalorder %s36, 3
      %p283 = por %p281, %p282
      %p284 = scmp.ne.s32.totalorder %s275, %s276
      %p285 = scmp.eq.s32.totalorder %s36, 0
      %p286 = por %p284, %p285
      %p287 = scmp.ne.s32.totalorder %s275, %s276
      %p288 = scmp.eq.s32.totalorder %s37, 3
      %p289 = por %p287, %p288
      %p291 = scmp.ne.s32.totalorder %s276, %s290
      %p292 = scmp.eq.s32.totalorder %s37, 0
      %p293 = por %p291, %p292
      %s295 = sadd.s32 %s294, 1
      %p298 = scmp.eq.s32.totalorder %s31, 3
      %p299 = scmp.ne.s32.totalorder %s294, %s296
      %p300 = scmp.eq.s32.totalorder %s31, 0
      %p301 = por %p299, %p300
      %p302 = scmp.ne.s32.totalorder %s294, %s296
      %p303 = scmp.eq.s32.totalorder %s36, 3
      %p304 = por %p302, %p303
      %p305 = scmp.ne.s32.totalorder %s296, %s297
      %p306 = scmp.eq.s32.totalorder %s36, 0
      %p307 = por %p305, %p306
      %p308 = scmp.ne.s32.totalorder %s296, %s297
      %p309 = scmp.eq.s32.totalorder %s37, 3
      %p310 = por %p308, %p309
      %p312 = scmp.ne.s32.totalorder %s297, %s311
      %p313 = scmp.eq.s32.totalorder %s37, 0
      %p314 = por %p312, %p313
      %s316 = sadd.s32 %s315, 1
      %p319 = scmp.eq.s32.totalorder %s31, 3
      %p320 = scmp.ne.s32.totalorder %s315, %s317
      %p321 = scmp.eq.s32.totalorder %s31, 0
      %p322 = por %p320, %p321
      %p323 = scmp.ne.s32.totalorder %s315, %s317
      %p324 = scmp.eq.s32.totalorder %s36, 3
      %p325 = por %p323, %p324
      %p326 = scmp.ne.s32.totalorder %s317, %s318
      %p327 = scmp.eq.s32.totalorder %s36, 0
      %p328 = por %p326, %p327
      %p329 = scmp.ne.s32.totalorder %s317, %s318
      %p330 = scmp.eq.s32.totalorder %s37, 3
      %p331 = por %p329, %p330
      %p333 = scmp.ne.s32.totalorder %s318, %s332
      %p334 = scmp.eq.s32.totalorder %s37, 0
      %p335 = por %p333, %p334
      %s337 = sadd.s32 %s336, 1
      %p340 = scmp.eq.s32.totalorder %s31, 3
      %p341 = scmp.ne.s32.totalorder %s336, %s338
      %p342 = scmp.eq.s32.totalorder %s31, 0
      %p343 = por %p341, %p342
      %p344 = scmp.ne.s32.totalorder %s336, %s338
      %p345 = scmp.eq.s32.totalorder %s36, 3
      %p346 = por %p344, %p345
      %p347 = scmp.ne.s32.totalorder %s338, %s339
      %p348 = scmp.eq.s32.totalorder %s36, 0
      %p349 = por %p347, %p348
      %p350 = scmp.ne.s32.totalorder %s338, %s339
      %p351 = scmp.eq.s32.totalorder %s37, 3
      %p352 = por %p350, %p351
      %p354 = scmp.ne.s32.totalorder %s339, %s353
      %p355 = scmp.eq.s32.totalorder %s37, 0
      %p356 = por %p354, %p355
      %s357 = ssub.s32 %s38, %s50
      %s358 = ssub.s32 %s39, %s46
      %s359 = sor.u32 %s357, %s358
      %p360 = scmp.eq.s32.totalorder %s359, 0
      %s362 = sadd.s32 %s361, 1
      %s363 = scalar_select %p360, %s361, %s362
      %p366 = pneg %p360
      %p367 = scmp.eq.s32.totalorder %s31, 3
      %p368 = por %p366, %p367
      %p369 = scmp.ne.s32.totalorder %s361, %s364
      %p370 = scmp.eq.s32.totalorder %s31, 0
      %p371 = por %p369, %p370
      %p372 = scmp.ne.s32.totalorder %s361, %s364
      %p373 = scmp.eq.s32.totalorder %s36, 3
      %p374 = por %p372, %p373
      %p375 = scmp.ne.s32.totalorder %s364, %s365
      %p376 = scmp.eq.s32.totalorder %s36, 0
      %p377 = por %p375, %p376
      %p378 = scmp.ne.s32.totalorder %s364, %s365
      %p379 = scmp.eq.s32.totalorder %s37, 3
      %p380 = por %p378, %p379
      %p382 = scmp.ne.s32.totalorder %s365, %s381
      %p383 = scmp.eq.s32.totalorder %s37, 0
      %p384 = por %p382, %p383
      %s385 = ssub.s32 %s38, %s50
      %p386 = scmp.eq.s32.totalorder %s385, 0
      %s388 = sadd.s32 %s387, 1
      %s389 = scalar_select %p386, %s387, %s388
      %p392 = pneg %p386
      %p393 = scmp.eq.s32.totalorder %s31, 3
      %p394 = por %p392, %p393
      %p395 = scmp.ne.s32.totalorder %s387, %s390
      %p396 = scmp.eq.s32.totalorder %s31, 0
      %p397 = por %p395, %p396
      %p398 = scmp.ne.s32.totalorder %s387, %s390
      %p399 = scmp.eq.s32.totalorder %s36, 3
      %p400 = por %p398, %p399
      %p401 = scmp.ne.s32.totalorder %s390, %s391
      %p402 = scmp.eq.s32.totalorder %s36, 0
      %p403 = por %p401, %p402
      %p404 = scmp.ne.s32.totalorder %s390, %s391
      %p405 = scmp.eq.s32.totalorder %s37, 3
      %p406 = por %p404, %p405
      %p408 = scmp.ne.s32.totalorder %s391, %s407
      %p409 = scmp.eq.s32.totalorder %s37, 0
      %p410 = por %p408, %p409
      %p411 = scmp.le.s32.totalorder 1, %s31
      %p412 = scmp.lt.s32.totalorder %s31, 5
      %p413 = pnand %p411, %p412
      %p414 = pneg %p413
      // Predicated region
      $region9: #{tpu_custom_call.1} parent=5 // pred_check
        _
      $region10: #{tpu_custom_call.1} parent=5 // pred_check_branch
        %416 = sbr.rel (%p413) target = $region12
      $region11: #{tpu_custom_call.1} parent=5 // pred_region
        %s417 = ssub.s32 %s31, 1
        // Predicated region
        $region13: #{tpu_custom_call.1} parent=11 // pred_check
          %p418 = pneg %p118
        $region14: #{tpu_custom_call.1} parent=11 // pred_check_branch
          %420 = sbr.rel (%p418) target = $region16
        $region15: #{tpu_custom_call.1} parent=11 // pred_region
          _
        $region16: #{tpu_custom_call.1} parent=11 // pred_fallthru
          _
        // Predicated region
        $region17: #{tpu_custom_call.1} parent=11 // pred_check
          %p421 = pneg %p139
        $region18: #{tpu_custom_call.1} parent=11 // pred_check_branch
          %423 = sbr.rel (%p421) target = $region20
        $region19: #{tpu_custom_call.1} parent=11 // pred_region
          _
        $region20: #{tpu_custom_call.1} parent=11 // pred_fallthru
          _
        // Predicated region
        $region21: #{tpu_custom_call.1} parent=11 // pred_check
          %p424 = pneg %p160
        $region22: #{tpu_custom_call.1} parent=11 // pred_check_branch
          %426 = sbr.rel (%p424) target = $region24
        $region23: #{tpu_custom_call.1} parent=11 // pred_region
          _
        $region24: #{tpu_custom_call.1} parent=11 // pred_fallthru
          _
        // Predicated region
        $region25: #{tpu_custom_call.1} parent=11 // pred_check
          %p427 = pneg %p181
        $region26: #{tpu_custom_call.1} parent=11 // pred_check_branch
          %429 = sbr.rel (%p427) target = $region28
        $region27: #{tpu_custom_call.1} parent=11 // pred_region
          _
        $region28: #{tpu_custom_call.1} parent=11 // pred_fallthru
          _
        // Predicated region
        $region29: #{tpu_custom_call.1} parent=11 // pred_check
          %p430 = pneg %p202
        $region30: #{tpu_custom_call.1} parent=11 // pred_check_branch
          %432 = sbr.rel (%p430) target = $region32
        $region31: #{tpu_custom_call.1} parent=11 // pred_region
          _
        $region32: #{tpu_custom_call.1} parent=11 // pred_fallthru
          _
        // Predicated region
        $region33: #{tpu_custom_call.1} parent=11 // pred_check
          %p433 = pneg %p223
        $region34: #{tpu_custom_call.1} parent=11 // pred_check_branch
          %435 = sbr.rel (%p433) target = $region36
        $region35: #{tpu_custom_call.1} parent=11 // pred_region
          _
        $region36: #{tpu_custom_call.1} parent=11 // pred_fallthru
          _
        // Predicated region
        $region37: #{tpu_custom_call.1} parent=11 // pred_check
          %p436 = pneg %p244
        $region38: #{tpu_custom_call.1} parent=11 // pred_check_branch
          %438 = sbr.rel (%p436) target = $region40
        $region39: #{tpu_custom_call.1} parent=11 // pred_region
          _
        $region40: #{tpu_custom_call.1} parent=11 // pred_fallthru
          _
        // Predicated region
        $region41: #{tpu_custom_call.1} parent=11 // pred_check
          %p439 = pneg %p265
        $region42: #{tpu_custom_call.1} parent=11 // pred_check_branch
          %441 = sbr.rel (%p439) target = $region44
        $region43: #{tpu_custom_call.1} parent=11 // pred_region
          _
        $region44: #{tpu_custom_call.1} parent=11 // pred_fallthru
          _
        // Predicated region
        $region45: #{tpu_custom_call.1} parent=11 // pred_check
          %p442 = pneg %p286
        $region46: #{tpu_custom_call.1} parent=11 // pred_check_branch
          %444 = sbr.rel (%p442) target = $region48
        $region47: #{tpu_custom_call.1} parent=11 // pred_region
          _
        $region48: #{tpu_custom_call.1} parent=11 // pred_fallthru
          _
        // Predicated region
        $region49: #{tpu_custom_call.1} parent=11 // pred_check
          %p445 = pneg %p307
        $region50: #{tpu_custom_call.1} parent=11 // pred_check_branch
          %447 = sbr.rel (%p445) target = $region52
        $region51: #{tpu_custom_call.1} parent=11 // pred_region
          _
        $region52: #{tpu_custom_call.1} parent=11 // pred_fallthru
          _
        // Predicated region
        $region53: #{tpu_custom_call.1} parent=11 // pred_check
          %p448 = pneg %p328
        $region54: #{tpu_custom_call.1} parent=11 // pred_check_branch
          %450 = sbr.rel (%p448) target = $region56
        $region55: #{tpu_custom_call.1} parent=11 // pred_region
          _
        $region56: #{tpu_custom_call.1} parent=11 // pred_fallthru
          _
        // Predicated region
        $region57: #{tpu_custom_call.1} parent=11 // pred_check
          %p451 = pneg %p349
        $region58: #{tpu_custom_call.1} parent=11 // pred_check_branch
          %453 = sbr.rel (%p451) target = $region60
        $region59: #{tpu_custom_call.1} parent=11 // pred_region
          _
        $region60: #{tpu_custom_call.1} parent=11 // pred_fallthru
          _
      $region12: #{tpu_custom_call.1} parent=5 // pred_fallthru
        _
      %p454 = scmp.lt.s32.totalorder %s31, 4
      // Predicated region
      $region61: #{tpu_custom_call.1} parent=5 // pred_check
        %p455 = pneg %p454
      $region62: #{tpu_custom_call.1} parent=5 // pred_check_branch
        %457 = sbr.rel (%p455) target = $region64
      $region63: #{tpu_custom_call.1} parent=5 // pred_region
        // Predicated region
        $region65: #{tpu_custom_call.1} parent=63 // pred_check
          %p458 = pneg %p65
        $region66: #{tpu_custom_call.1} parent=63 // pred_check_branch
          %460 = sbr.rel (%p458) target = $region68
        $region67: #{tpu_custom_call.1} parent=63 // pred_region
          %s461 = sand.u32 %s55, 1
          %s462 = scalar_lea.sflag [#allocation7], %s461
          %s463 = sand.u32 %s55, 1
          %s464 = smul.addr %s463, 128
          %s465 = scalar_lea.vmem [#allocation6], %s464
          %s466 = smul.u32 4, %s39
          %468 = vsyncadd %s462, 0
          %s469 = smul.addr %s38, 32
          %s470 = sadd.s32 %s466, %s469
          %s471 = smul.addr %s470, 8
          %s472 = scalar_lea.hbm %s0, %s471
          %s473 = sshll.u32 %s472, 4
          %s474 = int_to_ptr.hbm [resolvable:$true] %s473
          %s475 = sshll.u32 %s465, 4
          %s476 = int_to_ptr.vmem [resolvable:$true] %s475
          %481 = dma.hbm_to_vmem [thread:$0]  %s474, 2048, %s476, %s462, 1024, 512, 32
        $region68: #{tpu_custom_call.1} parent=63 // pred_fallthru
          _
        // Predicated region
        $region69: #{tpu_custom_call.1} parent=63 // pred_check
          %p482 = pneg %p91
        $region70: #{tpu_custom_call.1} parent=63 // pred_check_branch
          %484 = sbr.rel (%p482) target = $region72
        $region71: #{tpu_custom_call.1} parent=63 // pred_region
          %p485 = scmp.lt.s32.totalorder %s38, 1
          %s486 = scalar_select %p485, %s38, 1
          %s487 = smul.addr %s486, 8
          %s488 = smul.addr %s487, 8
          %s489 = scalar_lea.vmem %s1, %s488
        $region72: #{tpu_custom_call.1} parent=63 // pred_fallthru
          _
      $region64: #{tpu_custom_call.1} parent=5 // pred_fallthru
        _
      %p490 = scmp.le.s32.totalorder 1, %s31
      %p491 = scmp.lt.s32.totalorder %s31, 5
      %p492 = pnand %p490, %p491
      %p493 = pneg %p492
      // Predicated region
      $region73: #{tpu_custom_call.1} parent=5 // pred_check
        _
      $region74: #{tpu_custom_call.1} parent=5 // pred_check_branch
        %495 = sbr.rel (%p492) target = $region76
      $region75: #{tpu_custom_call.1} parent=5 // pred_region
        %s496 = ssub.s32 %s31, 1
        %s497 = sand.u32 %s58, 1
        %s498 = scalar_lea.sflag [#allocation7], %s497
        %s499 = sand.u32 %s58, 1
        %s500 = smul.addr %s499, 128
        %s501 = scalar_lea.vmem [#allocation6], %s500
        // Predicated region
        $region77: #{tpu_custom_call.1} parent=75 // pred_check
          %p502 = pneg %p71
        $region78: #{tpu_custom_call.1} parent=75 // pred_check_branch
          %504 = sbr.rel (%p502) target = $region80
        $region79: #{tpu_custom_call.1} parent=75 // pred_region
          %506 = dma.done %s498, 2048
        $region80: #{tpu_custom_call.1} parent=75 // pred_fallthru
          _
        %s507 = sand.u32 %s58, 1
        %s508 = scalar_lea.sflag [#allocation7], %s507
        %s509 = sand.u32 %s58, 1
        %s510 = smul.addr %s509, 128
        %s511 = scalar_lea.vmem [#allocation6], %s510
        %p512 = pneg %p71
        %p513 = pneg %p68
        %p514 = scmp.lt.s32.totalorder %s40, 1
        %s515 = scalar_select %p514, %s40, 1
        %s516 = smul.addr %s515, 8
        %s517 = smul.addr %s516, 8
        %s518 = scalar_lea.vmem %s1, %s517
        %p519 = pneg %p97
        %p520 = pneg %p94
        %p521 = pneg %p118
        %p522 = pneg %p115
        %p523 = pneg %p139
        %p524 = pneg %p136
        %p525 = pneg %p160
        %p526 = pneg %p157
        %p527 = pneg %p181
        %p528 = pneg %p178
        %p529 = pneg %p202
        %p530 = pneg %p199
        %p531 = pneg %p223
        %p532 = pneg %p220
        %p533 = pneg %p244
        %p534 = pneg %p241
        %p535 = pneg %p265
        %p536 = pneg %p262
        %p537 = pneg %p286
        %p538 = pneg %p283
        %p539 = pneg %p307
        %p540 = pneg %p304
        %p541 = pneg %p328
        %p542 = pneg %p325
        %p543 = pneg %p349
        %p544 = pneg %p346
        %p545 = pneg %p377
        %p546 = pneg %p374
        %s547 = sand.u32 %s364, 1
        %s548 = scalar_lea.sflag [#allocation8], %s547
        %s549 = sand.u32 %s364, 1
        %s550 = smul.addr %s549, 128
        %s551 = scalar_lea.vmem [#allocation9], %s550
        %p552 = pneg %p403
        %p553 = pneg %p400
        %s554 = sand.u32 %s390, 1
        %s555 = scalar_lea.sflag [#allocation11], %s554
        %s556 = sand.u32 %s390, 1
        %s557 = smul.addr %s556, 64
        %s558 = scalar_lea.vmem [#allocation10], %s557
        %s559 = smul.u32 4, %s41
        %p560 = scmp.lt.s32.totalorder %s40, 1
        %s561 = scalar_select %p560, %s40, 1
        %s562 = smul.addr %s561, 8
        %s563 = smul.addr %s562, 8
        %s564 = scalar_lea.vmem %s1, %s563
        %s565 = smul.u32 4, %s41
        %p567 = scmp.eq.s32.totalorder %s41, 0
        // Predicated region
        $region81: #{tpu_custom_call.1} parent=75 // pred_check
          %p568 = pneg %p567
        $region82: #{tpu_custom_call.1} parent=75 // pred_check_branch
          %570 = sbr.rel (%p568) target = $region84
        $region83: #{tpu_custom_call.1} parent=75 // pred_region
          %v571 = vld [vmem:[%s564] sm:$0xff]
          %v572 = vld [vmem:[%s564 + $0x8] sm:$0xff]
          %v573 = vld [vmem:[%s564 + $0x10] sm:$0xff]
          %v574 = vld [vmem:[%s564 + $0x18] sm:$0xff]
          %v575 = vld [vmem:[%s564 + $0x20] sm:$0xff]
          %v576 = vld [vmem:[%s564 + $0x28] sm:$0xff]
          %v577 = vld [vmem:[%s564 + $0x30] sm:$0xff]
          %v578 = vld [vmem:[%s564 + $0x38] sm:$0xff]
          %v579 = vld [vmem:[%s4] sm:$0xf]
          %v580 = vld [vmem:[%s4 + $0x4] sm:$0xf]
          %v581 = vld [vmem:[%s4 + $0x8] sm:$0xf]
          %v582 = vld [vmem:[%s4 + $0xc] sm:$0xf]
          %v583 = vpack.c.bf16 %v573, %v571
          %v584 = vpack.c.bf16 %v574, %v572
          %v585 = vpack.c.bf16 %v577, %v575
          %v586 = vpack.c.bf16 %v578, %v576
          %v587 = vld [vmem:[%s5] sm:$0xff]
          %v588 = vld [vmem:[%s5 + $0x8] sm:$0xff]
          %v589 = vld [vmem:[%s5 + $0x10] sm:$0xff]
          %v590 = vld [vmem:[%s5 + $0x18] sm:$0xff]
          %592 = vset.pattern.permute.xlu0 0
          %593 = vperm.xlu0 %592, %v587
          %v594 = vpop.permute.xlu0 %593
          %597 = vset.pattern.permute.xlu0 0
          %598 = vperm.xlu0 %597, %v588
          %v599 = vpop.permute.xlu0 %598
          %602 = vset.pattern.permute.xlu0 0
          %603 = vperm.xlu0 %602, %v589
          %v604 = vpop.permute.xlu0 %603
          %607 = vset.pattern.permute.xlu0 0
          %608 = vperm.xlu0 %607, %v590
          %v609 = vpop.permute.xlu0 %608
          %v615 = vunpack.c.l.b16 %v579
          %v616 = vunpack.c.l.b16 %v580
          %v617 = vunpack.c.l.b16 %v581
          %v618 = vunpack.c.l.b16 %v582
          %v619 = vpack.c.b16 %v616, %v615
          %v620 = vpack.c.b16 %v618, %v617
          %vm621 = vcmask 261120
          %v623 = vsel %vm621, %v619, 0
          %v626 = vsel %vm621, %v620, 0
          %628 = vmatpush.bf16.msra.mxu0 0
          %629 = vmatpush.bf16.msra.mxu0 0
          %630 = vmatpush.bf16.msra.mxu0 0
          %631 = vmatpush.bf16.msra.mxu0 0
          %632 = vmatpush.bf16.msra.mxu0 0
          %633 = vmatpush.bf16.msra.mxu0 0
          %634 = vmatpush.bf16.msra.mxu0 %v585
          %635 = vmatpush.bf16.msra.mxu0 %v583
          %636 = vmatmul.bf16.gmra.mxu0 %v623
          %v637 = vpop.f32.mrf.mxu0
          %v638 = vadd.f32 %v594, %v637
          %v639 = vpop.f32.mrf.mxu0
          %v640 = vadd.f32 %v599, %v639
          %641 = vmatmul.bf16.gmra.mxu0 %v626
          %v642 = vpop.f32.mrf.mxu0
          %v643 = vadd.f32 %v604, %v642
          %v644 = vpop.f32.mrf.mxu0
          %v645 = vadd.f32 %v609, %v644
          %646 = vdwg.mxu0
          %647 = vmatpush.bf16.msra.mxu0 0
          %648 = vmatpush.bf16.msra.mxu0 0
          %649 = vmatpush.bf16.msra.mxu0 0
          %650 = vmatpush.bf16.msra.mxu0 0
          %651 = vmatpush.bf16.msra.mxu0 0
          %652 = vmatpush.bf16.msra.mxu0 0
          %653 = vmatpush.bf16.msra.mxu0 %v586
          %654 = vmatpush.bf16.msra.mxu0 %v584
          %655 = vmatmul.bf16.gmra.mxu0 %v623
          %v656 = vpop.f32.mrf.mxu0
          %v657 = vadd.f32 %v594, %v656
          %v658 = vpop.f32.mrf.mxu0
          %v659 = vadd.f32 %v599, %v658
          %660 = vmatmul.bf16.gmra.mxu0 %v626
          %v661 = vpop.f32.mrf.mxu0
          %v662 = vadd.f32 %v604, %v661
          %v663 = vpop.f32.mrf.mxu0
          %v664 = vadd.f32 %v609, %v663
          %665 = vdwg.mxu0
          %v666 = vpack.c.bf16 %v640, %v638
          %v667 = vpack.c.bf16 %v659, %v657
          %v668 = vpack.c.bf16 %v662, %v643
          %v669 = vpack.c.bf16 %v664, %v645
          %670 = vst [vmem:[#allocation2] sm:$0xff] %v668
          %671 = vst [vmem:[#allocation2 + $0x8] sm:$0xff] %v669
          %v674 = vunpack.c.l.b16 %v668
          %v675 = vunpack.c.h.b16 %v668
          %v676 = vunpack.c.l.b16 %v669
          %v677 = vunpack.c.h.b16 %v669
          %v678 = vpack.c.b16 %v676, %v674
          %v679 = vpack.c.b16 %v677, %v675
          %682 = vmatpush.bf16.xpose.msra.mxu0 0
          %683 = vmatpush.bf16.xpose.msra.mxu0 0
          %684 = vmatpush.bf16.xpose.msra.mxu0 0
          %685 = vmatpush.bf16.xpose.msra.mxu0 0
          %686 = vmatpush.bf16.xpose.msra.mxu0 0
          %687 = vmatpush.bf16.xpose.msra.mxu0 0
          %688 = vmatpush.bf16.xpose.msra.mxu0 0
          %689 = vmatpush.bf16.xpose.msra.mxu0 %v678
          %690 = vmatmul.bf16.gmra.mxu0 %v666
          %v691 = vpop.f32.mrf.mxu0
          %v692 = vadd.f32 0.0, %v691
          %v693 = vpop.f32.mrf.mxu0
          %v694 = vadd.f32 0.0, %v693
          %695 = vdwg.mxu0
          %696 = vmatpush.bf16.xpose.msra.mxu0 0
          %697 = vmatpush.bf16.xpose.msra.mxu0 0
          %698 = vmatpush.bf16.xpose.msra.mxu0 0
          %699 = vmatpush.bf16.xpose.msra.mxu0 0
          %700 = vmatpush.bf16.xpose.msra.mxu0 0
          %701 = vmatpush.bf16.xpose.msra.mxu0 0
          %702 = vmatpush.bf16.xpose.msra.mxu0 0
          %703 = vmatpush.bf16.xpose.msra.mxu0 %v679
          %704 = vmatmul.bf16.gmra.mxu0 %v667
          %v705 = vpop.f32.mrf.mxu0
          %v706 = vadd.f32 %v692, %v705
          %v707 = vpop.f32.mrf.mxu0
          %v708 = vadd.f32 %v694, %v707
          %709 = vdwg.mxu0
          %v710 = vld [vmem:[%s8] sm:$0xf]
          %v711 = vld [vmem:[%s8 + $0x4] sm:$0xf]
          %v712 = vld [vmem:[%s8 + $0x8] sm:$0xf]
          %v713 = vld [vmem:[%s8 + $0xc] sm:$0xf]
          %v714 = vpack.c.bf16 %v708, %v706
          %v719 = vunpack.c.l.b16 %v710
          %v720 = vunpack.c.l.b16 %v711
          %v721 = vunpack.c.l.b16 %v712
          %v722 = vunpack.c.l.b16 %v713
          %v723 = vpack.c.b16 %v720, %v719
          %v724 = vpack.c.b16 %v722, %v721
          %vm725 = vcmask 130048
          %v727 = vsel %vm725, %v723, 0
          %v730 = vsel %vm725, %v724, 0
          %732 = vmatpush.bf16.msra.mxu0 0
          %733 = vmatpush.bf16.msra.mxu0 0
          %734 = vmatpush.bf16.msra.mxu0 0
          %735 = vmatpush.bf16.msra.mxu0 0
          %736 = vmatpush.bf16.msra.mxu0 0
          %737 = vmatpush.bf16.msra.mxu0 0
          %738 = vmatpush.bf16.msra.mxu0 0
          %739 = vmatpush.bf16.msra.mxu0 %v714
          %740 = vmatmul.bf16.gmra.mxu0 %v727
          %v741 = vpop.f32.mrf.mxu0
          %v742 = vadd.f32 0.0, %v741
          %v743 = vpop.f32.mrf.mxu0
          %v744 = vadd.f32 0.0, %v743
          %745 = vmatmul.bf16.gmra.mxu0 %v730
          %v746 = vpop.f32.mrf.mxu0
          %v747 = vadd.f32 0.0, %v746
          %v748 = vpop.f32.mrf.mxu0
          %v749 = vadd.f32 0.0, %v748
          %750 = vdwg.mxu0
          %v751 = vpack.c.bf16 %v742, %v742
          %v752 = vpack.c.bf16 %v744, %v744
          %v753 = vpack.c.bf16 %v747, %v747
          %v754 = vpack.c.bf16 %v749, %v749
          %vm755 = vcmask 125952
          %756 = vst.msk [vmem:[#allocation3] sm:$0xf] %vm755, %v751
          %757 = vst.msk [vmem:[#allocation3 + $0x4] sm:$0xf] %vm755, %v752
          %758 = vst.msk [vmem:[#allocation3 + $0x8] sm:$0xf] %vm755, %v753
          %759 = vst.msk [vmem:[#allocation3 + $0xc] sm:$0xf] %vm755, %v754
          %v760 = vadd.f32 %v571, %v572
          %761 = vadd.xlane.f32.xlu0 %v760
          %v762 = vpop.xlane.xlu0 %761
          %v763 = vadd.f32 %v573, %v574
          %764 = vadd.xlane.f32.xlu0 %v763
          %v765 = vpop.xlane.xlu0 %764
          %v766 = vadd.f32 %v575, %v576
          %767 = vadd.xlane.f32.xlu0 %v766
          %v768 = vpop.xlane.xlu0 %767
          %v769 = vadd.f32 %v577, %v578
          %770 = vadd.xlane.f32.xlu0 %v769
          %v771 = vpop.xlane.xlu0 %770
          %v772 = vrcp.pop 256.0
          %v773 = vmul.f32 256.0, %v772
          %v774 = vsub.f32 1.0, %v773
          %v775 = vmul.f32 %v772, %v774
          %v776 = vadd.f32 %v772, %v775
          %vm777 = vweird.f32 %v772
          %v778 = vsel %vm777, %v772, %v776
          %v779 = vmul.f32 %v762, %v778
          %v780 = vmul.f32 %v765, %v778
          %v781 = vmul.f32 %v768, %v778
          %v782 = vmul.f32 %v771, %v778
          %v783 = vmax.f32 %v571, %v572
          %784 = vmax.xlane.f32.xlu0 %v783
          %v785 = vpop.xlane.xlu0 %784
          %v786 = vmax.f32 %v573, %v574
          %787 = vmax.xlane.f32.xlu0 %v786
          %v788 = vpop.xlane.xlu0 %787
          %v789 = vmax.f32 %v575, %v576
          %790 = vmax.xlane.f32.xlu0 %v789
          %v791 = vpop.xlane.xlu0 %790
          %v792 = vmax.f32 %v577, %v578
          %793 = vmax.xlane.f32.xlu0 %v792
          %v794 = vpop.xlane.xlu0 %793
          %v795 = vlaneseq
          %v796 = vand.u32 %v795, 127
          %vm797 = vcmp.eq.s32.totalorder %v796, 0
          %v798 = vsel %vm797, %v779, %v785
          %v799 = vsel %vm797, %v780, %v788
          %v800 = vsel %vm797, %v781, %v791
          %v801 = vsel %vm797, %v782, %v794
          %v802 = vld [vmem:[%s10] sm:$0x3]
          %v803 = vld [vmem:[%s11] sm:$0x3]
          %805 = vset.pattern.permute.xlu0 0
          %806 = vperm.xlu0 %805, %v803
          %v807 = vpop.permute.xlu0 %806
          %v810 = vsel %vm621, %v802, 0
          %812 = vmatpush.msra.mxu0 0.0
          %813 = vmatpush.msra.mxu0 0.0
          %814 = vmatpush.msra.mxu0 0.0
          %815 = vmatpush.msra.mxu0 0.0
          %816 = vmatpush.msra.mxu0 0.0
          %817 = vmatpush.msra.mxu0 0.0
          %818 = vmatpush.msra.mxu0 0.0
          %819 = vmatpush.msra.mxu0 0.0
          %820 = vmatpush.msra.mxu0 0.0
          %821 = vmatpush.msra.mxu0 0.0
          %822 = vmatpush.msra.mxu0 0.0
          %823 = vmatpush.msra.mxu0 0.0
          %824 = vmatpush.msra.mxu0 %v801
          %825 = vmatpush.msra.mxu0 %v800
          %826 = vmatpush.msra.mxu0 %v799
          %827 = vmatpush.msra.mxu0 %v798
          %828 = vmatmul.f32.gmra.mxu0 %v810
          %v829 = vpop.f32.mrf.mxu0
          %v830 = vadd.f32 %v807, %v829
          %831 = vdwg.mxu0
          %v832 = vmax.f32 %v830, 0.0
          %v833 = vld [vmem:[%s12] sm:$0xff]
          %v834 = vld [vmem:[%s12 + $0x8] sm:$0xff]
          %v835 = vld [vmem:[%s12 + $0x10] sm:$0xff]
          %v836 = vld [vmem:[%s12 + $0x18] sm:$0xff]
          %v837 = vld [vmem:[%s13] sm:$0xff]
          %v838 = vld [vmem:[%s13 + $0x8] sm:$0xff]
          %v839 = vld [vmem:[%s13 + $0x10] sm:$0xff]
          %v840 = vld [vmem:[%s13 + $0x18] sm:$0xff]
          %842 = vset.pattern.permute.xlu0 0
          %843 = vperm.xlu0 %842, %v837
          %v844 = vpop.permute.xlu0 %843
          %847 = vset.pattern.permute.xlu0 0
          %848 = vperm.xlu0 %847, %v838
          %v849 = vpop.permute.xlu0 %848
          %852 = vset.pattern.permute.xlu0 0
          %853 = vperm.xlu0 %852, %v839
          %v854 = vpop.permute.xlu0 %853
          %857 = vset.pattern.permute.xlu0 0
          %858 = vperm.xlu0 %857, %v840
          %v859 = vpop.permute.xlu0 %858
          %vm861 = vcmask 15360
          %v863 = vsel %vm861, %v833, 0
          %v866 = vsel %vm861, %v834, 0
          %v869 = vsel %vm861, %v835, 0
          %v872 = vsel %vm861, %v836, 0
          %vm874 = vcmask 1041408
          %v876 = vsel %vm874, %v832, 0
          %878 = vmatpush.msra.mxu0 0.0
          %879 = vmatpush.msra.mxu0 0.0
          %880 = vmatpush.msra.mxu0 0.0
          %881 = vmatpush.msra.mxu0 0.0
          %882 = vmatpush.msra.mxu0 0.0
          %883 = vmatpush.msra.mxu0 0.0
          %884 = vmatpush.msra.mxu0 0.0
          %885 = vmatpush.msra.mxu0 0.0
          %886 = vmatpush.msra.mxu0 0.0
          %887 = vmatpush.msra.mxu0 0.0
          %888 = vmatpush.msra.mxu0 0.0
          %889 = vmatpush.msra.mxu0 0.0
          %890 = vmatpush.msra.mxu0 0.0
          %891 = vmatpush.msra.mxu0 0.0
          %892 = vmatpush.msra.mxu0 0.0
          %893 = vmatpush.msra.mxu0 %v876
          %894 = vmatmul.f32.gmra.mxu0 %v863
          %v895 = vpop.f32.mrf.mxu0
          %v896 = vadd.f32 %v844, %v895
          %897 = vmatmul.f32.gmra.mxu0 %v866
          %v898 = vpop.f32.mrf.mxu0
          %v899 = vadd.f32 %v849, %v898
          %900 = vmatmul.f32.gmra.mxu0 %v869
          %v901 = vpop.f32.mrf.mxu0
          %v902 = vadd.f32 %v854, %v901
          %903 = vmatmul.f32.gmra.mxu0 %v872
          %v904 = vpop.f32.mrf.mxu0
          %v905 = vadd.f32 %v859, %v904
          %906 = vdwg.mxu0
          %v907 = vsel %vm861, %v896, 0.0
          %908 = vadd.xlane.f32.xlu0 %v907
          %v909 = vpop.xlane.xlu0 %908
          %v910 = vsel %vm861, %v899, 0.0
          %911 = vadd.xlane.f32.xlu0 %v910
          %v912 = vpop.xlane.xlu0 %911
          %v913 = vsel %vm861, %v902, 0.0
          %914 = vadd.xlane.f32.xlu0 %v913
          %v915 = vpop.xlane.xlu0 %914
          %v916 = vsel %vm861, %v905, 0.0
          %917 = vadd.xlane.f32.xlu0 %v916
          %v918 = vpop.xlane.xlu0 %917
          %v919 = vxor.u32 %v909, 2147483648
          %v920 = vxor.u32 %v912, 2147483648
          %v921 = vxor.u32 %v915, 2147483648
          %v922 = vxor.u32 %v918, 2147483648
          %v923 = vmul.f32 %v919, 1.442695
          %v924 = vpow.pop %v923
          %v925 = vmul.f32 %v920, 1.442695
          %v926 = vpow.pop %v925
          %v927 = vmul.f32 %v921, 1.442695
          %v928 = vpow.pop %v927
          %v929 = vmul.f32 %v922, 1.442695
          %v930 = vpow.pop %v929
          %v931 = vadd.f32 %v924, 1.0
          %v932 = vadd.f32 %v926, 1.0
          %v933 = vadd.f32 %v928, 1.0
          %v934 = vadd.f32 %v930, 1.0
          %v935 = vrcp.pop %v931
          %v936 = vmul.f32 %v931, %v935
          %v937 = vsub.f32 1.0, %v936
          %v938 = vmul.f32 %v935, %v937
          %v939 = vadd.f32 %v935, %v938
          %vm940 = vweird.f32 %v931
          %vm941 = vweird.f32 %v935
          %vm942 = vmor %vm940, %vm941
          %v943 = vsel %vm942, %v935, %v939
          %v944 = vand.u32 2147483647, %v931
          %vm945 = vcmp.eq.f32.partialorder %v944, 8.507059e+37
          %v946 = vand.u32 %v931, 2147483648
          %v947 = vor.u32 1.1754944e-38, %v946
          %v948 = vsel %vm945, %v947, %v943
          %v949 = vmul.f32 1.0, %v948
          %v950 = vrcp.pop %v932
          %v951 = vmul.f32 %v932, %v950
          %v952 = vsub.f32 1.0, %v951
          %v953 = vmul.f32 %v950, %v952
          %v954 = vadd.f32 %v950, %v953
          %vm955 = vweird.f32 %v932
          %vm956 = vweird.f32 %v950
          %vm957 = vmor %vm955, %vm956
          %v958 = vsel %vm957, %v950, %v954
          %v959 = vand.u32 2147483647, %v932
          %vm960 = vcmp.eq.f32.partialorder %v959, 8.507059e+37
          %v961 = vand.u32 %v932, 2147483648
          %v962 = vor.u32 1.1754944e-38, %v961
          %v963 = vsel %vm960, %v962, %v958
          %v964 = vmul.f32 1.0, %v963
          %v965 = vrcp.pop %v933
          %v966 = vmul.f32 %v933, %v965
          %v967 = vsub.f32 1.0, %v966
          %v968 = vmul.f32 %v965, %v967
          %v969 = vadd.f32 %v965, %v968
          %vm970 = vweird.f32 %v933
          %vm971 = vweird.f32 %v965
          %vm972 = vmor %vm970, %vm971
          %v973 = vsel %vm972, %v965, %v969
          %v974 = vand.u32 2147483647, %v933
          %vm975 = vcmp.eq.f32.partialorder %v974, 8.507059e+37
          %v976 = vand.u32 %v933, 2147483648
          %v977 = vor.u32 1.1754944e-38, %v976
          %v978 = vsel %vm975, %v977, %v973
          %v979 = vmul.f32 1.0, %v978
          %v980 = vrcp.pop %v934
          %v981 = vmul.f32 %v934, %v980
          %v982 = vsub.f32 1.0, %v981
          %v983 = vmul.f32 %v980, %v982
          %v984 = vadd.f32 %v980, %v983
          %vm985 = vweird.f32 %v934
          %vm986 = vweird.f32 %v980
          %vm987 = vmor %vm985, %vm986
          %v988 = vsel %vm987, %v980, %v984
          %v989 = vand.u32 2147483647, %v934
          %vm990 = vcmp.eq.f32.partialorder %v989, 8.507059e+37
          %v991 = vand.u32 %v934, 2147483648
          %v992 = vor.u32 1.1754944e-38, %v991
          %v993 = vsel %vm990, %v992, %v988
          %v994 = vmul.f32 1.0, %v993
          %vm995 = vcmask 7168
          %996 = vst.msk [vmem:[#allocation5] sm:$0xff] %vm995, %v949
          %997 = vst.msk [vmem:[#allocation5 + $0x8] sm:$0xff] %vm995, %v964
          %998 = vst.msk [vmem:[#allocation5 + $0x10] sm:$0xff] %vm995, %v979
          %999 = vst.msk [vmem:[#allocation5 + $0x18] sm:$0xff] %vm995, %v994
          %1000 = vst.msk [vmem:[#allocation4] sm:$0xff] %vm725, 0.0
          %1001 = vst.msk [vmem:[#allocation4 + $0x8] sm:$0xff] %vm725, 0.0
        $region84: #{tpu_custom_call.1} parent=75 // pred_fallthru
          _
        %v1002 = vld [vmem:[%s501] sm:$0xff]
        %v1003 = vld [vmem:[%s501 + $0x8] sm:$0xff]
        %v1004 = vld [vmem:[%s501 + $0x10] sm:$0xff]
        %v1005 = vld [vmem:[%s501 + $0x18] sm:$0xff]
        %v1006 = vld [vmem:[%s501 + $0x20] sm:$0xff]
        %v1007 = vld [vmem:[%s501 + $0x28] sm:$0xff]
        %v1008 = vld [vmem:[%s501 + $0x30] sm:$0xff]
        %v1009 = vld [vmem:[%s501 + $0x38] sm:$0xff]
        %v1010 = vld [vmem:[%s501 + $0x40] sm:$0xff]
        %v1011 = vld [vmem:[%s501 + $0x48] sm:$0xff]
        %v1012 = vld [vmem:[%s501 + $0x50] sm:$0xff]
        %v1013 = vld [vmem:[%s501 + $0x58] sm:$0xff]
        %v1014 = vld [vmem:[%s501 + $0x60] sm:$0xff]
        %v1015 = vld [vmem:[%s501 + $0x68] sm:$0xff]
        %v1016 = vld [vmem:[%s501 + $0x70] sm:$0xff]
        %v1017 = vld [vmem:[%s501 + $0x78] sm:$0xff]
        %v1018 = vld [vmem:[%s2] sm:$0xf]
        %v1019 = vld [vmem:[%s2 + $0x4] sm:$0xf]
        %v1020 = vld [vmem:[%s2 + $0x8] sm:$0xf]
        %v1021 = vld [vmem:[%s2 + $0xc] sm:$0xf]
        %v1022 = vpack.c.bf16 %v1006, %v1002
        %v1023 = vpack.c.bf16 %v1007, %v1003
        %v1024 = vpack.c.bf16 %v1008, %v1004
        %v1025 = vpack.c.bf16 %v1009, %v1005
        %v1026 = vpack.c.bf16 %v1014, %v1010
        %v1027 = vpack.c.bf16 %v1015, %v1011
        %v1028 = vpack.c.bf16 %v1016, %v1012
        %v1029 = vpack.c.bf16 %v1017, %v1013
        %v1030 = vld [vmem:[%s3] sm:$0xff]
        %v1031 = vld [vmem:[%s3 + $0x8] sm:$0xff]
        %v1032 = vld [vmem:[%s3 + $0x10] sm:$0xff]
        %v1033 = vld [vmem:[%s3 + $0x18] sm:$0xff]
        %1035 = vset.pattern.permute.xlu0 0
        %1036 = vperm.xlu0 %1035, %v1030
        %v1037 = vpop.permute.xlu0 %1036
        %1040 = vset.pattern.permute.xlu0 0
        %1041 = vperm.xlu0 %1040, %v1031
        %v1042 = vpop.permute.xlu0 %1041
        %1045 = vset.pattern.permute.xlu0 0
        %1046 = vperm.xlu0 %1045, %v1032
        %v1047 = vpop.permute.xlu0 %1046
        %1050 = vset.pattern.permute.xlu0 0
        %1051 = vperm.xlu0 %1050, %v1033
        %v1052 = vpop.permute.xlu0 %1051
        %v1058 = vunpack.c.l.b16 %v1018
        %v1059 = vunpack.c.l.b16 %v1019
        %v1060 = vunpack.c.l.b16 %v1020
        %v1061 = vunpack.c.l.b16 %v1021
        %v1062 = vpack.c.b16 %v1059, %v1058
        %v1063 = vpack.c.b16 %v1061, %v1060
        %vm1064 = vcmask 261120
        %v1066 = vsel %vm1064, %v1062, 0
        %v1069 = vsel %vm1064, %v1063, 0
        %1071 = vmatpush.bf16.msra.mxu0 0
        %1072 = vmatpush.bf16.msra.mxu0 0
        %1073 = vmatpush.bf16.msra.mxu0 0
        %1074 = vmatpush.bf16.msra.mxu0 0
        %1075 = vmatpush.bf16.msra.mxu0 0
        %1076 = vmatpush.bf16.msra.mxu0 0
        %1077 = vmatpush.bf16.msra.mxu0 %v1026
        %1078 = vmatpush.bf16.msra.mxu0 %v1022
        %1079 = vmatmul.bf16.gmra.mxu0 %v1066
        %v1080 = vpop.f32.mrf.mxu0
        %v1081 = vadd.f32 %v1037, %v1080
        %v1082 = vpop.f32.mrf.mxu0
        %v1083 = vadd.f32 %v1042, %v1082
        %1084 = vmatmul.bf16.gmra.mxu0 %v1069
        %v1085 = vpop.f32.mrf.mxu0
        %v1086 = vadd.f32 %v1047, %v1085
        %v1087 = vpop.f32.mrf.mxu0
        %v1088 = vadd.f32 %v1052, %v1087
        %1089 = vdwg.mxu0
        %1090 = vmatpush.bf16.msra.mxu0 0
        %1091 = vmatpush.bf16.msra.mxu0 0
        %1092 = vmatpush.bf16.msra.mxu0 0
        %1093 = vmatpush.bf16.msra.mxu0 0
        %1094 = vmatpush.bf16.msra.mxu0 0
        %1095 = vmatpush.bf16.msra.mxu0 0
        %1096 = vmatpush.bf16.msra.mxu0 %v1027
        %1097 = vmatpush.bf16.msra.mxu0 %v1023
        %1098 = vmatmul.bf16.gmra.mxu0 %v1066
        %v1099 = vpop.f32.mrf.mxu0
        %v1100 = vadd.f32 %v1037, %v1099
        %v1101 = vpop.f32.mrf.mxu0
        %v1102 = vadd.f32 %v1042, %v1101
        %1103 = vmatmul.bf16.gmra.mxu0 %v1069
        %v1104 = vpop.f32.mrf.mxu0
        %v1105 = vadd.f32 %v1047, %v1104
        %v1106 = vpop.f32.mrf.mxu0
        %v1107 = vadd.f32 %v1052, %v1106
        %1108 = vdwg.mxu0
        %1109 = vmatpush.bf16.msra.mxu0 0
        %1110 = vmatpush.bf16.msra.mxu0 0
        %1111 = vmatpush.bf16.msra.mxu0 0
        %1112 = vmatpush.bf16.msra.mxu0 0
        %1113 = vmatpush.bf16.msra.mxu0 0
        %1114 = vmatpush.bf16.msra.mxu0 0
        %1115 = vmatpush.bf16.msra.mxu0 %v1028
        %1116 = vmatpush.bf16.msra.mxu0 %v1024
        %1117 = vmatmul.bf16.gmra.mxu0 %v1066
        %v1118 = vpop.f32.mrf.mxu0
        %v1119 = vadd.f32 %v1037, %v1118
        %v1120 = vpop.f32.mrf.mxu0
        %v1121 = vadd.f32 %v1042, %v1120
        %1122 = vmatmul.bf16.gmra.mxu0 %v1069
        %v1123 = vpop.f32.mrf.mxu0
        %v1124 = vadd.f32 %v1047, %v1123
        %v1125 = vpop.f32.mrf.mxu0
        %v1126 = vadd.f32 %v1052, %v1125
        %1127 = vdwg.mxu0
        %1128 = vmatpush.bf16.msra.mxu0 0
        %1129 = vmatpush.bf16.msra.mxu0 0
        %1130 = vmatpush.bf16.msra.mxu0 0
        %1131 = vmatpush.bf16.msra.mxu0 0
        %1132 = vmatpush.bf16.msra.mxu0 0
        %1133 = vmatpush.bf16.msra.mxu0 0
        %1134 = vmatpush.bf16.msra.mxu0 %v1029
        %1135 = vmatpush.bf16.msra.mxu0 %v1025
        %1136 = vmatmul.bf16.gmra.mxu0 %v1066
        %v1137 = vpop.f32.mrf.mxu0
        %v1138 = vadd.f32 %v1037, %v1137
        %v1139 = vpop.f32.mrf.mxu0
        %v1140 = vadd.f32 %v1042, %v1139
        %1141 = vmatmul.bf16.gmra.mxu0 %v1069
        %v1142 = vpop.f32.mrf.mxu0
        %v1143 = vadd.f32 %v1047, %v1142
        %v1144 = vpop.f32.mrf.mxu0
        %v1145 = vadd.f32 %v1052, %v1144
        %1146 = vdwg.mxu0
        %v1147 = vpack.c.bf16 %v1083, %v1081
        %v1148 = vpack.c.bf16 %v1102, %v1100
        %v1149 = vpack.c.bf16 %v1121, %v1119
        %v1150 = vpack.c.bf16 %v1140, %v1138
        %v1151 = vpack.c.bf16 %v1088, %v1086
        %v1152 = vpack.c.bf16 %v1107, %v1105
        %v1153 = vpack.c.bf16 %v1126, %v1124
        %v1154 = vpack.c.bf16 %v1145, %v1143
        %v1155 = vld [vmem:[#allocation3] sm:$0xf]
        %v1156 = vld [vmem:[#allocation3 + $0x4] sm:$0xf]
        %v1157 = vld [vmem:[#allocation3 + $0x8] sm:$0xf]
        %v1158 = vld [vmem:[#allocation3 + $0xc] sm:$0xf]
        %v1159 = vld [vmem:[%s9] sm:$0xff]
        %v1160 = vld [vmem:[%s9 + $0x8] sm:$0xff]
        %v1161 = vld [vmem:[%s9 + $0x10] sm:$0xff]
        %v1162 = vld [vmem:[%s9 + $0x18] sm:$0xff]
        %1164 = vset.pattern.permute.xlu0 0
        %1165 = vperm.xlu0 %1164, %v1159
        %v1166 = vpop.permute.xlu0 %1165
        %1169 = vset.pattern.permute.xlu0 0
        %1170 = vperm.xlu0 %1169, %v1160
        %v1171 = vpop.permute.xlu0 %1170
        %1174 = vset.pattern.permute.xlu0 0
        %1175 = vperm.xlu0 %1174, %v1161
        %v1176 = vpop.permute.xlu0 %1175
        %1179 = vset.pattern.permute.xlu0 0
        %1180 = vperm.xlu0 %1179, %v1162
        %v1181 = vpop.permute.xlu0 %1180
        %v1187 = vunpack.c.l.b16 %v1155
        %v1188 = vunpack.c.l.b16 %v1156
        %v1189 = vunpack.c.l.b16 %v1157
        %v1190 = vunpack.c.l.b16 %v1158
        %v1191 = vpack.c.b16 %v1188, %v1187
        %v1192 = vpack.c.b16 %v1190, %v1189
        %vm1193 = vcmask 130048
        %v1195 = vsel %vm1193, %v1191, 0
        %v1198 = vsel %vm1193, %v1192, 0
        %1200 = vmatpush.bf16.msra.mxu0 0
        %1201 = vmatpush.bf16.msra.mxu0 0
        %1202 = vmatpush.bf16.msra.mxu0 0
        %1203 = vmatpush.bf16.msra.mxu0 0
        %1204 = vmatpush.bf16.msra.mxu0 0
        %1205 = vmatpush.bf16.msra.mxu0 0
        %1206 = vmatpush.bf16.msra.mxu0 0
        %1207 = vmatpush.bf16.msra.mxu0 %v1151
        %1208 = vmatmul.bf16.gmra.mxu0 %v1195
        %v1209 = vpop.f32.mrf.mxu0
        %v1210 = vadd.f32 %v1166, %v1209
        %v1211 = vpop.f32.mrf.mxu0
        %v1212 = vadd.f32 %v1171, %v1211
        %1213 = vmatmul.bf16.gmra.mxu0 %v1198
        %v1214 = vpop.f32.mrf.mxu0
        %v1215 = vadd.f32 %v1176, %v1214
        %v1216 = vpop.f32.mrf.mxu0
        %v1217 = vadd.f32 %v1181, %v1216
        %1218 = vdwg.mxu0
        %1219 = vmatpush.bf16.msra.mxu0 0
        %1220 = vmatpush.bf16.msra.mxu0 0
        %1221 = vmatpush.bf16.msra.mxu0 0
        %1222 = vmatpush.bf16.msra.mxu0 0
        %1223 = vmatpush.bf16.msra.mxu0 0
        %1224 = vmatpush.bf16.msra.mxu0 0
        %1225 = vmatpush.bf16.msra.mxu0 0
        %1226 = vmatpush.bf16.msra.mxu0 %v1152
        %1227 = vmatmul.bf16.gmra.mxu0 %v1195
        %v1228 = vpop.f32.mrf.mxu0
        %v1229 = vadd.f32 %v1166, %v1228
        %v1230 = vpop.f32.mrf.mxu0
        %v1231 = vadd.f32 %v1171, %v1230
        %1232 = vmatmul.bf16.gmra.mxu0 %v1198
        %v1233 = vpop.f32.mrf.mxu0
        %v1234 = vadd.f32 %v1176, %v1233
        %v1235 = vpop.f32.mrf.mxu0
        %v1236 = vadd.f32 %v1181, %v1235
        %1237 = vdwg.mxu0
        %1238 = vmatpush.bf16.msra.mxu0 0
        %1239 = vmatpush.bf16.msra.mxu0 0
        %1240 = vmatpush.bf16.msra.mxu0 0
        %1241 = vmatpush.bf16.msra.mxu0 0
        %1242 = vmatpush.bf16.msra.mxu0 0
        %1243 = vmatpush.bf16.msra.mxu0 0
        %1244 = vmatpush.bf16.msra.mxu0 0
        %1245 = vmatpush.bf16.msra.mxu0 %v1153
        %1246 = vmatmul.bf16.gmra.mxu0 %v1195
        %v1247 = vpop.f32.mrf.mxu0
        %v1248 = vadd.f32 %v1166, %v1247
        %v1249 = vpop.f32.mrf.mxu0
        %v1250 = vadd.f32 %v1171, %v1249
        %1251 = vmatmul.bf16.gmra.mxu0 %v1198
        %v1252 = vpop.f32.mrf.mxu0
        %v1253 = vadd.f32 %v1176, %v1252
        %v1254 = vpop.f32.mrf.mxu0
        %v1255 = vadd.f32 %v1181, %v1254
        %1256 = vdwg.mxu0
        %1257 = vmatpush.bf16.msra.mxu0 0
        %1258 = vmatpush.bf16.msra.mxu0 0
        %1259 = vmatpush.bf16.msra.mxu0 0
        %1260 = vmatpush.bf16.msra.mxu0 0
        %1261 = vmatpush.bf16.msra.mxu0 0
        %1262 = vmatpush.bf16.msra.mxu0 0
        %1263 = vmatpush.bf16.msra.mxu0 0
        %1264 = vmatpush.bf16.msra.mxu0 %v1154
        %1265 = vmatmul.bf16.gmra.mxu0 %v1195
        %v1266 = vpop.f32.mrf.mxu0
        %v1267 = vadd.f32 %v1166, %v1266
        %v1268 = vpop.f32.mrf.mxu0
        %v1269 = vadd.f32 %v1171, %v1268
        %1270 = vmatmul.bf16.gmra.mxu0 %v1198
        %v1271 = vpop.f32.mrf.mxu0
        %v1272 = vadd.f32 %v1176, %v1271
        %v1273 = vpop.f32.mrf.mxu0
        %v1274 = vadd.f32 %v1181, %v1273
        %1275 = vdwg.mxu0
        %v1276 = vadd.f32 %v1210, %v1002
        %v1277 = vadd.f32 %v1229, %v1003
        %v1278 = vadd.f32 %v1248, %v1004
        %v1279 = vadd.f32 %v1267, %v1005
        %v1280 = vadd.f32 %v1212, %v1006
        %v1281 = vadd.f32 %v1231, %v1007
        %v1282 = vadd.f32 %v1250, %v1008
        %v1283 = vadd.f32 %v1269, %v1009
        %v1284 = vadd.f32 %v1215, %v1010
        %v1285 = vadd.f32 %v1234, %v1011
        %v1286 = vadd.f32 %v1253, %v1012
        %v1287 = vadd.f32 %v1272, %v1013
        %v1288 = vadd.f32 %v1217, %v1014
        %v1289 = vadd.f32 %v1236, %v1015
        %v1290 = vadd.f32 %v1255, %v1016
        %v1291 = vadd.f32 %v1274, %v1017
        %v1292 = vld [vmem:[#allocation5] sm:$0xff]
        %v1293 = vld [vmem:[#allocation5 + $0x8] sm:$0xff]
        %v1294 = vld [vmem:[#allocation5 + $0x10] sm:$0xff]
        %v1295 = vld [vmem:[#allocation5 + $0x18] sm:$0xff]
        %1297 = vset.pattern.permute.xlu0 0
        %1298 = vperm.xlu0 %1297, %v1292
        %v1299 = vpop.permute.xlu0 %1298
        %1302 = vset.pattern.permute.xlu0 0
        %1303 = vperm.xlu0 %1302, %v1293
        %v1304 = vpop.permute.xlu0 %1303
        %1307 = vset.pattern.permute.xlu0 0
        %1308 = vperm.xlu0 %1307, %v1294
        %v1309 = vpop.permute.xlu0 %1308
        %1312 = vset.pattern.permute.xlu0 0
        %1313 = vperm.xlu0 %1312, %v1295
        %v1314 = vpop.permute.xlu0 %1313
        %v1316 = vmul.f32 %v1276, %v1299
        %v1317 = vmul.f32 %v1277, %v1299
        %v1318 = vmul.f32 %v1278, %v1299
        %v1319 = vmul.f32 %v1279, %v1299
        %v1320 = vmul.f32 %v1280, %v1304
        %v1321 = vmul.f32 %v1281, %v1304
        %v1322 = vmul.f32 %v1282, %v1304
        %v1323 = vmul.f32 %v1283, %v1304
        %v1324 = vmul.f32 %v1284, %v1309
        %v1325 = vmul.f32 %v1285, %v1309
        %v1326 = vmul.f32 %v1286, %v1309
        %v1327 = vmul.f32 %v1287, %v1309
        %v1328 = vmul.f32 %v1288, %v1314
        %v1329 = vmul.f32 %v1289, %v1314
        %v1330 = vmul.f32 %v1290, %v1314
        %v1331 = vmul.f32 %v1291, %v1314
        %1332 = vst [vmem:[%s551] sm:$0xff] %v1316
        %1333 = vst [vmem:[%s551 + $0x8] sm:$0xff] %v1317
        %1334 = vst [vmem:[%s551 + $0x10] sm:$0xff] %v1318
        %1335 = vst [vmem:[%s551 + $0x18] sm:$0xff] %v1319
        %1336 = vst [vmem:[%s551 + $0x20] sm:$0xff] %v1320
        %1337 = vst [vmem:[%s551 + $0x28] sm:$0xff] %v1321
        %1338 = vst [vmem:[%s551 + $0x30] sm:$0xff] %v1322
        %1339 = vst [vmem:[%s551 + $0x38] sm:$0xff] %v1323
        %1340 = vst [vmem:[%s551 + $0x40] sm:$0xff] %v1324
        %1341 = vst [vmem:[%s551 + $0x48] sm:$0xff] %v1325
        %1342 = vst [vmem:[%s551 + $0x50] sm:$0xff] %v1326
        %1343 = vst [vmem:[%s551 + $0x58] sm:$0xff] %v1327
        %1344 = vst [vmem:[%s551 + $0x60] sm:$0xff] %v1328
        %1345 = vst [vmem:[%s551 + $0x68] sm:$0xff] %v1329
        %1346 = vst [vmem:[%s551 + $0x70] sm:$0xff] %v1330
        %1347 = vst [vmem:[%s551 + $0x78] sm:$0xff] %v1331
        %v1348 = vld [vmem:[#allocation4] sm:$0xff]
        %v1349 = vld [vmem:[#allocation4 + $0x8] sm:$0xff]
        %1350 = vmatpush.bf16.xpose.msra.mxu0 0
        %1351 = vmatpush.bf16.xpose.msra.mxu0 0
        %1352 = vmatpush.bf16.xpose.msra.mxu0 0
        %1353 = vmatpush.bf16.xpose.msra.mxu0 0
        %1354 = vmatpush.bf16.xpose.msra.mxu0 0
        %1355 = vmatpush.bf16.xpose.msra.mxu0 0
        %1356 = vmatpush.bf16.xpose.msra.mxu0 0
        %1357 = vmatpush.bf16.xpose.msra.mxu0 %v1151
        %1358 = vmatmul.bf16.gmra.mxu0 %v1147
        %v1359 = vpop.f32.mrf.mxu0
        %v1360 = vadd.f32 0.0, %v1359
        %v1361 = vpop.f32.mrf.mxu0
        %v1362 = vadd.f32 0.0, %v1361
        %1363 = vdwg.mxu0
        %1364 = vmatpush.bf16.xpose.msra.mxu0 0
        %1365 = vmatpush.bf16.xpose.msra.mxu0 0
        %1366 = vmatpush.bf16.xpose.msra.mxu0 0
        %1367 = vmatpush.bf16.xpose.msra.mxu0 0
        %1368 = vmatpush.bf16.xpose.msra.mxu0 0
        %1369 = vmatpush.bf16.xpose.msra.mxu0 0
        %1370 = vmatpush.bf16.xpose.msra.mxu0 0
        %1371 = vmatpush.bf16.xpose.msra.mxu0 %v1152
        %1372 = vmatmul.bf16.gmra.mxu0 %v1148
        %v1373 = vpop.f32.mrf.mxu0
        %v1374 = vadd.f32 %v1360, %v1373
        %v1375 = vpop.f32.mrf.mxu0
        %v1376 = vadd.f32 %v1362, %v1375
        %1377 = vdwg.mxu0
        %1378 = vmatpush.bf16.xpose.msra.mxu0 0
        %1379 = vmatpush.bf16.xpose.msra.mxu0 0
        %1380 = vmatpush.bf16.xpose.msra.mxu0 0
        %1381 = vmatpush.bf16.xpose.msra.mxu0 0
        %1382 = vmatpush.bf16.xpose.msra.mxu0 0
        %1383 = vmatpush.bf16.xpose.msra.mxu0 0
        %1384 = vmatpush.bf16.xpose.msra.mxu0 0
        %1385 = vmatpush.bf16.xpose.msra.mxu0 %v1153
        %1386 = vmatmul.bf16.gmra.mxu0 %v1149
        %v1387 = vpop.f32.mrf.mxu0
        %v1388 = vadd.f32 %v1374, %v1387
        %v1389 = vpop.f32.mrf.mxu0
        %v1390 = vadd.f32 %v1376, %v1389
        %1391 = vdwg.mxu0
        %1392 = vmatpush.bf16.xpose.msra.mxu0 0
        %1393 = vmatpush.bf16.xpose.msra.mxu0 0
        %1394 = vmatpush.bf16.xpose.msra.mxu0 0
        %1395 = vmatpush.bf16.xpose.msra.mxu0 0
        %1396 = vmatpush.bf16.xpose.msra.mxu0 0
        %1397 = vmatpush.bf16.xpose.msra.mxu0 0
        %1398 = vmatpush.bf16.xpose.msra.mxu0 0
        %1399 = vmatpush.bf16.xpose.msra.mxu0 %v1154
        %1400 = vmatmul.bf16.gmra.mxu0 %v1150
        %v1401 = vpop.f32.mrf.mxu0
        %v1402 = vadd.f32 %v1388, %v1401
        %v1403 = vpop.f32.mrf.mxu0
        %v1404 = vadd.f32 %v1390, %v1403
        %1405 = vdwg.mxu0
        %v1406 = vadd.f32 %v1348, %v1402
        %v1407 = vadd.f32 %v1349, %v1404
        %1408 = vst.msk [vmem:[#allocation4] sm:$0xff] %vm1193, %v1406
        %1409 = vst.msk [vmem:[#allocation4 + $0x8] sm:$0xff] %vm1193, %v1407
        %p1410 = scmp.eq.s32.totalorder %s41, 1
        // Predicated region
        $region85: #{tpu_custom_call.1} parent=75 // pred_check
          %p1411 = pneg %p1410
        $region86: #{tpu_custom_call.1} parent=75 // pred_check_branch
          %1413 = sbr.rel (%p1411) target = $region88
        $region87: #{tpu_custom_call.1} parent=75 // pred_region
          %v1414 = vld [vmem:[%s6] sm:$0xf]
          %v1415 = vld [vmem:[%s6 + $0x4] sm:$0xf]
          %v1416 = vld [vmem:[%s6 + $0x8] sm:$0xf]
          %v1417 = vld [vmem:[%s6 + $0xc] sm:$0xf]
          %v1418 = vld [vmem:[#allocation4] sm:$0xff]
          %v1419 = vld [vmem:[#allocation4 + $0x8] sm:$0xff]
          %v1420 = vpack.c.bf16 %v1419, %v1418
          %v1425 = vunpack.c.l.b16 %v1414
          %v1426 = vunpack.c.l.b16 %v1415
          %v1427 = vunpack.c.l.b16 %v1416
          %v1428 = vunpack.c.l.b16 %v1417
          %v1429 = vpack.c.b16 %v1426, %v1425
          %v1430 = vpack.c.b16 %v1428, %v1427
          %v1432 = vsel %vm1193, %v1429, 0
          %v1435 = vsel %vm1193, %v1430, 0
          %1437 = vmatpush.bf16.msra.mxu0 0
          %1438 = vmatpush.bf16.msra.mxu0 0
          %1439 = vmatpush.bf16.msra.mxu0 0
          %1440 = vmatpush.bf16.msra.mxu0 0
          %1441 = vmatpush.bf16.msra.mxu0 0
          %1442 = vmatpush.bf16.msra.mxu0 0
          %1443 = vmatpush.bf16.msra.mxu0 0
          %1444 = vmatpush.bf16.msra.mxu0 %v1420
          %1445 = vmatmul.bf16.gmra.mxu0 %v1432
          %v1446 = vpop.f32.mrf.mxu0
          %v1447 = vadd.f32 0.0, %v1446
          %v1448 = vpop.f32.mrf.mxu0
          %v1449 = vadd.f32 0.0, %v1448
          %1450 = vmatmul.bf16.gmra.mxu0 %v1435
          %v1451 = vpop.f32.mrf.mxu0
          %v1452 = vadd.f32 0.0, %v1451
          %v1453 = vpop.f32.mrf.mxu0
          %v1454 = vadd.f32 0.0, %v1453
          %1455 = vdwg.mxu0
          %v1456 = vpack.c.bf16 %v1449, %v1447
          %v1457 = vpack.c.bf16 %v1454, %v1452
          %v1458 = vld [vmem:[#allocation2] sm:$0xff]
          %v1459 = vld [vmem:[#allocation2 + $0x8] sm:$0xff]
          %v1460 = vld [vmem:[%s7] sm:$0xff]
          %v1461 = vld [vmem:[%s7 + $0x8] sm:$0xff]
          %v1462 = vld [vmem:[%s7 + $0x10] sm:$0xff]
          %v1463 = vld [vmem:[%s7 + $0x18] sm:$0xff]
          %1465 = vset.pattern.permute.xlu0 0
          %1466 = vperm.xlu0 %1465, %v1460
          %v1467 = vpop.permute.xlu0 %1466
          %1470 = vset.pattern.permute.xlu0 0
          %1471 = vperm.xlu0 %1470, %v1461
          %v1472 = vpop.permute.xlu0 %1471
          %1475 = vset.pattern.permute.xlu0 0
          %1476 = vperm.xlu0 %1475, %v1462
          %v1477 = vpop.permute.xlu0 %1476
          %1480 = vset.pattern.permute.xlu0 0
          %1481 = vperm.xlu0 %1480, %v1463
          %v1482 = vpop.permute.xlu0 %1481
          %v1486 = vunpack.c.l.b16 %v1458
          %v1487 = vunpack.c.h.b16 %v1458
          %v1488 = vunpack.c.l.b16 %v1459
          %v1489 = vunpack.c.h.b16 %v1459
          %v1490 = vpack.c.b16 %v1488, %v1486
          %v1491 = vpack.c.b16 %v1489, %v1487
          %v1495 = vsel %vm1193, %v1456, 0
          %v1498 = vsel %vm1193, %v1457, 0
          %1500 = vmatpush.bf16.msra.mxu0 0
          %1501 = vmatpush.bf16.msra.mxu0 0
          %1502 = vmatpush.bf16.msra.mxu0 0
          %1503 = vmatpush.bf16.msra.mxu0 0
          %1504 = vmatpush.bf16.msra.mxu0 0
          %1505 = vmatpush.bf16.msra.mxu0 0
          %1506 = vmatpush.bf16.msra.mxu0 0
          %1507 = vmatpush.bf16.msra.mxu0 %v1490
          %1508 = vmatmul.bf16.gmra.mxu0 %v1495
          %v1509 = vpop.f32.mrf.mxu0
          %v1510 = vadd.f32 %v1467, %v1509
          %v1511 = vpop.f32.mrf.mxu0
          %v1512 = vadd.f32 %v1472, %v1511
          %1513 = vmatmul.bf16.gmra.mxu0 %v1498
          %v1514 = vpop.f32.mrf.mxu0
          %v1515 = vadd.f32 %v1477, %v1514
          %v1516 = vpop.f32.mrf.mxu0
          %v1517 = vadd.f32 %v1482, %v1516
          %1518 = vdwg.mxu0
          %1519 = vmatpush.bf16.msra.mxu0 0
          %1520 = vmatpush.bf16.msra.mxu0 0
          %1521 = vmatpush.bf16.msra.mxu0 0
          %1522 = vmatpush.bf16.msra.mxu0 0
          %1523 = vmatpush.bf16.msra.mxu0 0
          %1524 = vmatpush.bf16.msra.mxu0 0
          %1525 = vmatpush.bf16.msra.mxu0 0
          %1526 = vmatpush.bf16.msra.mxu0 %v1491
          %1527 = vmatmul.bf16.gmra.mxu0 %v1495
          %v1528 = vpop.f32.mrf.mxu0
          %v1529 = vadd.f32 %v1467, %v1528
          %v1530 = vpop.f32.mrf.mxu0
          %v1531 = vadd.f32 %v1472, %v1530
          %1532 = vmatmul.bf16.gmra.mxu0 %v1498
          %v1533 = vpop.f32.mrf.mxu0
          %v1534 = vadd.f32 %v1477, %v1533
          %v1535 = vpop.f32.mrf.mxu0
          %v1536 = vadd.f32 %v1482, %v1535
          %1537 = vdwg.mxu0
          %v1538 = vld [vmem:[%s564] sm:$0xff]
          %v1539 = vld [vmem:[%s564 + $0x8] sm:$0xff]
          %v1540 = vld [vmem:[%s564 + $0x10] sm:$0xff]
          %v1541 = vld [vmem:[%s564 + $0x18] sm:$0xff]
          %v1542 = vld [vmem:[%s564 + $0x20] sm:$0xff]
          %v1543 = vld [vmem:[%s564 + $0x28] sm:$0xff]
          %v1544 = vld [vmem:[%s564 + $0x30] sm:$0xff]
          %v1545 = vld [vmem:[%s564 + $0x38] sm:$0xff]
          %v1546 = vadd.f32 %v1510, %v1538
          %v1547 = vadd.f32 %v1529, %v1539
          %v1548 = vadd.f32 %v1512, %v1540
          %v1549 = vadd.f32 %v1531, %v1541
          %v1550 = vadd.f32 %v1515, %v1542
          %v1551 = vadd.f32 %v1534, %v1543
          %v1552 = vadd.f32 %v1517, %v1544
          %v1553 = vadd.f32 %v1536, %v1545
          %v1554 = vld [vmem:[#allocation5] sm:$0xff]
          %v1555 = vld [vmem:[#allocation5 + $0x8] sm:$0xff]
          %v1556 = vld [vmem:[#allocation5 + $0x10] sm:$0xff]
          %v1557 = vld [vmem:[#allocation5 + $0x18] sm:$0xff]
          %1559 = vset.pattern.permute.xlu0 0
          %1560 = vperm.xlu0 %1559, %v1554
          %v1561 = vpop.permute.xlu0 %1560
          %1564 = vset.pattern.permute.xlu0 0
          %1565 = vperm.xlu0 %1564, %v1555
          %v1566 = vpop.permute.xlu0 %1565
          %1569 = vset.pattern.permute.xlu0 0
          %1570 = vperm.xlu0 %1569, %v1556
          %v1571 = vpop.permute.xlu0 %1570
          %1574 = vset.pattern.permute.xlu0 0
          %1575 = vperm.xlu0 %1574, %v1557
          %v1576 = vpop.permute.xlu0 %1575
          %v1578 = vmul.f32 %v1546, %v1561
          %v1579 = vmul.f32 %v1547, %v1561
          %v1580 = vmul.f32 %v1548, %v1566
          %v1581 = vmul.f32 %v1549, %v1566
          %v1582 = vmul.f32 %v1550, %v1571
          %v1583 = vmul.f32 %v1551, %v1571
          %v1584 = vmul.f32 %v1552, %v1576
          %v1585 = vmul.f32 %v1553, %v1576
          %1586 = vst [vmem:[%s558] sm:$0xff] %v1578
          %1587 = vst [vmem:[%s558 + $0x8] sm:$0xff] %v1579
          %1588 = vst [vmem:[%s558 + $0x10] sm:$0xff] %v1580
          %1589 = vst [vmem:[%s558 + $0x18] sm:$0xff] %v1581
          %1590 = vst [vmem:[%s558 + $0x20] sm:$0xff] %v1582
          %1591 = vst [vmem:[%s558 + $0x28] sm:$0xff] %v1583
          %1592 = vst [vmem:[%s558 + $0x30] sm:$0xff] %v1584
          %1593 = vst [vmem:[%s558 + $0x38] sm:$0xff] %v1585
        $region88: #{tpu_custom_call.1} parent=75 // pred_fallthru
          _
        %s1594 = sand.u32 %s364, 1
        %s1595 = scalar_lea.sflag [#allocation8], %s1594
        %s1596 = sand.u32 %s364, 1
        %s1597 = smul.addr %s1596, 128
        %s1598 = scalar_lea.vmem [#allocation9], %s1597
        %s1599 = sand.u32 %s390, 1
        %s1600 = scalar_lea.sflag [#allocation11], %s1599
        %s1601 = sand.u32 %s390, 1
        %s1602 = smul.addr %s1601, 64
        %s1603 = scalar_lea.vmem [#allocation10], %s1602
        // Predicated region
        $region89: #{tpu_custom_call.1} parent=75 // pred_check
          %p1604 = pneg %p374
        $region90: #{tpu_custom_call.1} parent=75 // pred_check_branch
          %1606 = sbr.rel (%p1604) target = $region92
        $region91: #{tpu_custom_call.1} parent=75 // pred_region
          %s1607 = smul.u32 4, %s41
          %1609 = vsyncadd %s1595, 0
          %s1610 = smul.addr %s40, 32
          %s1611 = sadd.s32 %s1607, %s1610
          %s1612 = smul.addr %s1611, 8
          %s1613 = scalar_lea.hbm %s14, %s1612
          %s1614 = sshll.u32 %s1598, 4
          %s1615 = int_to_ptr.vmem [resolvable:$true] %s1614
          %s1616 = sshll.u32 %s1613, 4
          %s1617 = int_to_ptr.hbm [resolvable:$true] %s1616
          %1622 = dma.vmem_to_hbm [thread:$0]  %s1615, 2048, %s1617, %s1595, 512, 1024, 32
        $region92: #{tpu_custom_call.1} parent=75 // pred_fallthru
          _
        // Predicated region
        $region93: #{tpu_custom_call.1} parent=75 // pred_check
          %p1623 = pneg %p400
        $region94: #{tpu_custom_call.1} parent=75 // pred_check_branch
          %1625 = sbr.rel (%p1623) target = $region96
        $region95: #{tpu_custom_call.1} parent=75 // pred_region
          %1627 = vsyncadd %s1600, 0
          %s1628 = smul.addr %s40, 8
          %s1629 = smul.addr %s1628, 8
          %s1630 = scalar_lea.hbm %s15, %s1629
          %s1631 = sshll.u32 %s1603, 4
          %s1632 = int_to_ptr.vmem [resolvable:$true] %s1631
          %s1633 = sshll.u32 %s1630, 4
          %s1634 = int_to_ptr.hbm [resolvable:$true] %s1633
          %1639 = dma.vmem_to_hbm [thread:$0]  %s1632, 1024, %s1634, %s1600, 256, 256, 16
        $region96: #{tpu_custom_call.1} parent=75 // pred_fallthru
          _
      $region76: #{tpu_custom_call.1} parent=5 // pred_fallthru
        _
      %p1640 = scmp.le.s32.totalorder 2, %s31
      // Predicated region
      $region97: #{tpu_custom_call.1} parent=5 // pred_check
        %p1641 = pneg %p1640
      $region98: #{tpu_custom_call.1} parent=5 // pred_check_branch
        %1643 = sbr.rel (%p1641) target = $region100
      $region99: #{tpu_custom_call.1} parent=5 // pred_region
        %s1644 = ssub.s32 %s31, 2
        // Predicated region
        $region101: #{tpu_custom_call.1} parent=99 // pred_check
          %p1645 = pneg %p380
        $region102: #{tpu_custom_call.1} parent=99 // pred_check_branch
          %1647 = sbr.rel (%p1645) target = $region104
        $region103: #{tpu_custom_call.1} parent=99 // pred_region
          %s1648 = sand.u32 %s365, 1
          %s1649 = scalar_lea.sflag [#allocation8], %s1648
          %s1650 = sand.u32 %s365, 1
          %s1651 = smul.addr %s1650, 128
          %s1652 = scalar_lea.vmem [#allocation9], %s1651
          %1654 = dma.done %s1649, 2048
        $region104: #{tpu_custom_call.1} parent=99 // pred_fallthru
          _
        // Predicated region
        $region105: #{tpu_custom_call.1} parent=99 // pred_check
          %p1655 = pneg %p406
        $region106: #{tpu_custom_call.1} parent=99 // pred_check_branch
          %1657 = sbr.rel (%p1655) target = $region108
        $region107: #{tpu_custom_call.1} parent=99 // pred_region
          %s1658 = sand.u32 %s391, 1
          %s1659 = scalar_lea.sflag [#allocation11], %s1658
          %s1660 = sand.u32 %s391, 1
          %s1661 = smul.addr %s1660, 64
          %s1662 = scalar_lea.vmem [#allocation10], %s1661
          %1664 = dma.done %s1659, 1024
        $region108: #{tpu_custom_call.1} parent=99 // pred_fallthru
          _
      $region100: #{tpu_custom_call.1} parent=5 // pred_fallthru
        _
    $region6: #{tpu_custom_call.1} parent=1 // loop_footer
      %s35 = sadd.s32 1, %s31
    $region7: #{tpu_custom_call.1} parent=1 // loop_footer_branch
      %30 = sbr.rel target = $region3
    $region8: #{tpu_custom_call.1} parent=1 // loop_exit
      _
    %1665 = vsyncpa [#allocation7], 1
    %s1666 = scalar_lea.sflag [#allocation7], 1
    %1667 = vsyncpa %s1666, 1
    %1668 = vsyncpa [#allocation8], 1
    %s1669 = scalar_lea.sflag [#allocation8], 1
    %1670 = vsyncpa %s1669, 1
    %1671 = vsyncpa [#allocation11], 1
    %s1672 = scalar_lea.sflag [#allocation11], 1
    %1673 = vsyncpa %s1672, 1

</llo_original>
